<compile_context>
chip_gen: v7x
topology: tpu7x:2x2x1
jax: 0.10.0
libtpu: 0.0.40
codegen_flags: <defaults>
</compile_context>

<pallas_src>
import math
import jax
import jax.numpy as jnp
from jax.experimental import pallas as pl
from jax.experimental.pallas import tpu as pltpu  # noqa: F401  (kept for scaling knobs)

# ----------------------------- configuration --------------------------------
VOCAB = 100          # word vocab
TYPE_VOCAB = 2       # token_type vocab
MAX_POS = 32         # max position embeddings
B, S, D = 2, 8, 32   # batch, seq, hidden
H = 4                # attention heads
DH = D // H          # head dim
F = 64               # FFN intermediate
LAYERS = 2           # encoder layers
NUM_LABELS = 1       # num_labels (multilabel -> BCEWithLogits)
LP = 128             # lane-padded logits width (>= NUM_LABELS)
OUT_ROWS = 8         # sublane-padded logits rows (>= B)
EPS = 1e-12          # BERT LayerNorm eps

F32 = jnp.float32
BF16 = jnp.bfloat16


# ------------------------------ kernel helpers -------------------------------
def _layer_norm(x, gamma, beta):
    mu = jnp.mean(x, axis=-1, keepdims=True)
    var = jnp.mean((x - mu) ** 2, axis=-1, keepdims=True)
    return (x - mu) * jax.lax.rsqrt(var + EPS) * gamma + beta


def _gelu(x):
    # TODO(synk): HF BERT's default activation is the exact erf GELU; the tanh
    # approximation is used here because it lowers on all TPU generations.
    c = math.sqrt(2.0 / math.pi)
    return 0.5 * x * (1.0 + jnp.tanh(c * (x + 0.044715 * x * x * x)))


# ------------------------------- fused kernel --------------------------------
# Packed const layouts:
#   head consts  (8, 128):  row0 emb-LN gamma[:D], row1 emb-LN beta[:D],
#                           row2 pooler bias[:D],  row3 classifier bias[:LP]
#   layer consts (LAYERS, 8, 128): row0 bqkv[:3D], row1 bo[:D], row2 b1[:F],
#                           row3 b2[:D], row4 ln1 gamma[:D], row5 ln1 beta[:D],
#                           row6 ln2 gamma[:D], row7 ln2 beta[:D]
def fused_encoder_kernel(emb_ref, mask_ref, const_ref, lconst_ref,
                         wqkv_ref, wo_ref, w1_ref, w2_ref,
                         poolw_ref, clsw_ref, logits_ref):
    cst = const_ref[...]                                        # (8, 128) f32

    # embedding LayerNorm
    x = _layer_norm(emb_ref[...], cst[0:1, :D], cst[1:2, :D])   # (B*S, D) f32

    # additive attention-mask bias, broadcast ONCE for all layers and heads.
    # 1=keep -> 0, 0=pad -> -1e9.  Stays f32.
    bias = jnp.broadcast_to((mask_ref[...] - 1.0) * 1e9, (B, S, S))

    for l in range(LAYERS):                                     # static unroll
        lc = lconst_ref[l]                                      # (8, 128) f32

        # ---- self attention: one QKV matmul for the whole batch ----
        # (1/sqrt(DH) already folded into the Q columns of wqkv at init)
        qkv = jnp.dot(x.astype(BF16), wqkv_ref[l],
                      preferred_element_type=F32) + lc[0:1, :3 * D]   # (B*S, 3D)
        q = qkv[:, 0 * D:1 * D].reshape(B, S, D)
        k = qkv[:, 1 * D:2 * D].reshape(B, S, D)
        v = qkv[:, 2 * D:3 * D].reshape(B, S, D)

        ctx_heads = []
        for h in range(H):                                      # static unroll
            sl = slice(h * DH, (h + 1) * DH)
            s = jnp.einsum('bqd,bkd->bqk',
                           q[:, :, sl].astype(BF16), k[:, :, sl].astype(BF16),
                           preferred_element_type=F32) + bias   # (B, S, S) f32
            s = s - jnp.max(s, axis=-1, keepdims=True)
            p = jnp.exp(s)
            p = p * pl.reciprocal(jnp.sum(p, axis=-1, keepdims=True), approx=True)
            ctx_heads.append(jnp.einsum('bqk,bkd->bqd',
                                        p.astype(BF16), v[:, :, sl].astype(BF16),
                                        preferred_element_type=F32))  # (B, S, DH)
        # single output projection (K=32) instead of 4 folded K=8 matmuls
        ctx = jnp.concatenate(ctx_heads, axis=-1).reshape(B * S, D)
        attn = jnp.dot(ctx.astype(BF16), wo_ref[l],
                       preferred_element_type=F32) + lc[1:2, :D]

        h1 = _layer_norm(x + attn, lc[4:5, :D], lc[5:6, :D])

        # ---- feed-forward ----
        ff = _gelu(jnp.dot(h1.astype(BF16), w1_ref[l],
                           preferred_element_type=F32) + lc[2:3, :F])
        ff = jnp.dot(ff.astype(BF16), w2_ref[l],
                     preferred_element_type=F32) + lc[3:4, :D]
        x = _layer_norm(h1 + ff, lc[6:7, :D], lc[7:8, :D])

    # ---- pooler (tanh on [CLS]) + classifier head ----
    cls = x.reshape(B, S, D)[:, 0, :]                           # (B, D) [CLS] rows
    # pad rows to a full sublane tile so the final store is an unmasked vst
    cls = jnp.concatenate([cls, jnp.zeros((OUT_ROWS - B, D), F32)], axis=0)
    pooled = jnp.tanh(jnp.dot(cls.astype(BF16), poolw_ref[...],
                              preferred_element_type=F32) + cst[2:3, :D])
    logits_ref[...] = jnp.dot(pooled.astype(BF16), clsw_ref[...],
                              preferred_element_type=F32) + cst[3:4, :]


# ------------------------------ Pallas wrapper --------------------------------
def cross_encoder_pallas(emb2d, mask, p):
    # Single invocation (no grid): every array is one whole-array VMEM block,
    # so there is exactly one DMA per input and no per-layer step overhead.
    return pl.pallas_call(
        fused_encoder_kernel,
        out_shape=jax.ShapeDtypeStruct((OUT_ROWS, LP), F32),
    )(emb2d, mask, p["head_consts"], p["layer_consts"],
      p["wqkv"], p["wo"], p["w1"], p["w2"], p["pool_w"], p["cls_w"])


# ------------------------------ parameter init --------------------------------
def init_params(key):
    def nrm(k, shape, dtype=F32, std=0.02):
        return (std * jax.random.normal(k, shape, F32)).astype(dtype)

    keys = iter(jax.random.split(key, 12))
    scale = 1.0 / math.sqrt(DH)

    # fold the attention score scale into the Q columns (one-time transform)
    wqkv = nrm(next(keys), (LAYERS, D, 3 * D), F32)
    wqkv = wqkv.at[:, :, :D].multiply(scale).astype(BF16)

    # packed per-layer small params (biases + LayerNorm gamma/beta)
    layer_consts = jnp.zeros((LAYERS, 8, 128), F32)
    layer_consts = layer_consts.at[:, 4, :D].set(1.0)   # ln1 gamma
    layer_consts = layer_consts.at[:, 6, :D].set(1.0)   # ln2 gamma
    layer_consts = layer_consts.at[:, 0, :D].multiply(scale)  # Q bias gets the same fold (zero here)

    # packed head-side consts (emb LN gamma/beta, pooler bias, classifier bias)
    head_consts = jnp.zeros((8, 128), F32)
    head_consts = head_consts.at[0, :D].set(1.0)        # emb LN gamma

    cls_w = jnp.zeros((D, LP), F32).at[:, :NUM_LABELS].set(
        nrm(next(keys), (D, NUM_LABELS)))

    return {
        "word_emb": nrm(next(keys), (VOCAB, D)),
        "pos_emb": nrm(next(keys), (MAX_POS, D)),
        "type_emb": nrm(next(keys), (TYPE_VOCAB, D)),
        "head_consts": head_consts,                       # (8, 128)
        "layer_consts": layer_consts,                     # (LAYERS, 8, 128)
        "wqkv": wqkv,                                     # (LAYERS, D, 3D) bf16
        "wo": nrm(next(keys), (LAYERS, D, D), BF16),      # bf16 (was f32)
        "w1": nrm(next(keys), (LAYERS, D, F), BF16),
        "w2": nrm(next(keys), (LAYERS, F, D), BF16),
        "pool_w": nrm(next(keys), (D, D), BF16),
        "cls_w": cls_w.astype(BF16),                      # (D, LP) bf16
    }


# --------------------------------- forward ------------------------------------
def bce_with_logits_loss(logits, labels):
    # nn.BCEWithLogitsLoss (mean reduction), numerically stable
    return jnp.mean(jnp.maximum(logits, 0.0) - logits * labels
                    + jnp.log1p(jnp.exp(-jnp.abs(logits))))


def forward(params, input_ids, token_type_ids=None, attention_mask=None, labels=None):
    if token_type_ids is None:
        token_type_ids = jnp.zeros_like(input_ids)
    if attention_mask is None:
        attention_mask = jnp.ones_like(input_ids)

    pos_ids = jnp.arange(S)
    # embedding gather = glue (data-dependent lookup stays in plain JAX)
    emb = (params["word_emb"][input_ids]
           + params["pos_emb"][pos_ids][None, :, :]
           + params["type_emb"][token_type_ids])                      # (B, S, D)
    mask = attention_mask.astype(F32).reshape(B, 1, S)

    logits_pad = cross_encoder_pallas(emb.reshape(B * S, D), mask, params)
    logits = logits_pad[:B, :NUM_LABELS]
    if labels is None:
        return logits
    loss = bce_with_logits_loss(logits, labels)                       # multilabel task_type
    return logits, loss


# ----------------------------------- main --------------------------------------
if __name__ == "__main__":
    key = jax.random.PRNGKey(0)
    k_param, k_ids, k_lab = jax.random.split(key, 3)

    params = init_params(k_param)

    input_ids = jax.random.randint(k_ids, (B, S), 0, VOCAB, dtype=jnp.int32)
    token_type_ids = jnp.zeros((B, S), jnp.int32)
    attention_mask = jnp.array([[1, 1, 1, 1, 1, 1, 1, 1],
                                [1, 1, 1, 1, 1, 1, 0, 0]], jnp.int32)
    labels = jax.random.bernoulli(k_lab, 0.5, (B, NUM_LABELS)).astype(F32)

    logits = forward(params, input_ids, token_type_ids, attention_mask)
    logits, loss = forward(params, input_ids, token_type_ids, attention_mask, labels)
    jax.block_until_ready((logits, loss))

    assert logits.shape == (B, NUM_LABELS)
    assert jnp.isfinite(loss)
    print("KERNEL_OK")
</pallas_src>

<mosaic_0001>
module attributes {stable_mosaic.version = 11 : i64} {
  func.func @fused_encoder_kernel(%arg0: memref<16x32xf32, #tpu.memory_space<vmem>>, %arg1: memref<2x1x8xf32, #tpu.memory_space<vmem>>, %arg2: memref<8x128xf32, #tpu.memory_space<vmem>>, %arg3: memref<2x8x128xf32, #tpu.memory_space<vmem>>, %arg4: memref<2x32x96xbf16, #tpu.memory_space<vmem>>, %arg5: memref<2x32x32xbf16, #tpu.memory_space<vmem>>, %arg6: memref<2x32x64xbf16, #tpu.memory_space<vmem>>, %arg7: memref<2x64x32xbf16, #tpu.memory_space<vmem>>, %arg8: memref<32x32xbf16, #tpu.memory_space<vmem>>, %arg9: memref<32x128xbf16, #tpu.memory_space<vmem>>, %arg10: memref<8x128xf32, #tpu.memory_space<vmem>>) attributes {dimension_semantics = [], scalar_prefetch = 0 : i64, scratch_operands = 0 : i64, tpu.core_type = #tpu.core_type<tc>} {
    %c0 = arith.constant 0 : index
    %c0_0 = arith.constant 0 : index
    %0 = vector.load %arg2[%c0, %c0_0] : memref<8x128xf32, #tpu.memory_space<vmem>>, vector<8x128xf32>
    %c0_1 = arith.constant 0 : index
    %c0_2 = arith.constant 0 : index
    %1 = vector.load %arg0[%c0_1, %c0_2] : memref<16x32xf32, #tpu.memory_space<vmem>>, vector<16x32xf32>
    %2 = vector.extract_strided_slice %0 {offsets = [0, 0], sizes = [1, 32], strides = [1, 1]} : vector<8x128xf32> to vector<1x32xf32>
    %3 = vector.extract_strided_slice %0 {offsets = [1, 0], sizes = [1, 32], strides = [1, 1]} : vector<8x128xf32> to vector<1x32xf32>
    %cst = arith.constant dense<0.000000e+00> : vector<16xf32>
    %4 = vector.multi_reduction <add>, %1, %cst [1] : vector<16x32xf32> to vector<16xf32>
    %5 = vector.shape_cast %4 : vector<16xf32> to vector<16x1xf32>
    %cst_3 = arith.constant 3.200000e+01 : f32
    %6 = vector.broadcast %cst_3 : f32 to vector<16x1xf32>
    %7 = arith.divf %5, %6 : vector<16x1xf32>
    %8 = vector.broadcast %7 : vector<16x1xf32> to vector<16x32xf32>
    %9 = arith.subf %1, %8 : vector<16x32xf32>
    %10 = arith.mulf %9, %9 : vector<16x32xf32>
    %cst_4 = arith.constant dense<0.000000e+00> : vector<16xf32>
    %11 = vector.multi_reduction <add>, %10, %cst_4 [1] : vector<16x32xf32> to vector<16xf32>
    %12 = vector.shape_cast %11 : vector<16xf32> to vector<16x1xf32>
    %cst_5 = arith.constant 3.200000e+01 : f32
    %13 = vector.broadcast %cst_5 : f32 to vector<16x1xf32>
    %14 = arith.divf %12, %13 : vector<16x1xf32>
    %15 = vector.broadcast %7 : vector<16x1xf32> to vector<16x32xf32>
    %16 = arith.subf %1, %15 : vector<16x32xf32>
    %cst_6 = arith.constant 9.99999996E-13 : f32
    %17 = vector.broadcast %cst_6 : f32 to vector<16x1xf32>
    %18 = arith.addf %14, %17 : vector<16x1xf32>
    %19 = math.rsqrt %18 : vector<16x1xf32>
    %20 = vector.broadcast %19 : vector<16x1xf32> to vector<16x32xf32>
    %21 = arith.mulf %16, %20 : vector<16x32xf32>
    %22 = vector.broadcast %2 : vector<1x32xf32> to vector<16x32xf32>
    %23 = arith.mulf %21, %22 : vector<16x32xf32>
    %24 = vector.broadcast %3 : vector<1x32xf32> to vector<16x32xf32>
    %25 = arith.addf %23, %24 : vector<16x32xf32>
    %c0_7 = arith.constant 0 : index
    %c0_8 = arith.constant 0 : index
    %c0_9 = arith.constant 0 : index
    %26 = vector.load %arg1[%c0_7, %c0_8, %c0_9] : memref<2x1x8xf32, #tpu.memory_space<vmem>>, vector<2x1x8xf32>
    %cst_10 = arith.constant 1.000000e+00 : f32
    %27 = vector.broadcast %cst_10 : f32 to vector<2x1x8xf32>
    %28 = arith.subf %26, %27 : vector<2x1x8xf32>
    %cst_11 = arith.constant 1.000000e+09 : f32
    %29 = vector.broadcast %cst_11 : f32 to vector<2x1x8xf32>
    %30 = arith.mulf %28, %29 : vector<2x1x8xf32>
    %31 = vector.shape_cast %30 : vector<2x1x8xf32> to vector<2x1x8xf32>
    %32 = vector.broadcast %31 : vector<2x1x8xf32> to vector<2x8x8xf32>
    %c0_12 = arith.constant 0 : index
    %c0_13 = arith.constant 0 : index
    %c0_14 = arith.constant 0 : index
    %33 = vector.load %arg3[%c0_12, %c0_13, %c0_14] : memref<2x8x128xf32, #tpu.memory_space<vmem>>, vector<1x8x128xf32>
    %34 = vector.shape_cast %33 : vector<1x8x128xf32> to vector<8x128xf32>
    %35 = arith.truncf %25 : vector<16x32xf32> to vector<16x32xbf16>
    %c0_15 = arith.constant 0 : index
    %c0_16 = arith.constant 0 : index
    %c0_17 = arith.constant 0 : index
    %36 = vector.load %arg4[%c0_15, %c0_16, %c0_17] : memref<2x32x96xbf16, #tpu.memory_space<vmem>>, vector<1x32x96xbf16>
    %37 = vector.shape_cast %36 : vector<1x32x96xbf16> to vector<32x96xbf16>
    %cst_18 = arith.constant dense<0.000000e+00> : vector<16x96xf32>
    %38 = tpu.matmul %35, %37, %cst_18 {dimension_numbers = #tpu.dot_dimension_numbers<[1], [0], [0], [1], [0, 0, 1, 1], [], []>} : vector<16x32xbf16>, vector<32x96xbf16>, vector<16x96xf32> -> vector<16x96xf32>
    %39 = vector.extract_strided_slice %34 {offsets = [0, 0], sizes = [1, 96], strides = [1, 1]} : vector<8x128xf32> to vector<1x96xf32>
    %40 = vector.broadcast %39 : vector<1x96xf32> to vector<16x96xf32>
    %41 = arith.addf %38, %40 : vector<16x96xf32>
    %42 = vector.extract_strided_slice %41 {offsets = [0, 0], sizes = [16, 32], strides = [1, 1]} : vector<16x96xf32> to vector<16x32xf32>
    %43 = vector.shape_cast %42 : vector<16x32xf32> to vector<2x8x32xf32>
    %44 = vector.extract_strided_slice %41 {offsets = [0, 32], sizes = [16, 32], strides = [1, 1]} : vector<16x96xf32> to vector<16x32xf32>
    %45 = vector.shape_cast %44 : vector<16x32xf32> to vector<2x8x32xf32>
    %46 = vector.extract_strided_slice %41 {offsets = [0, 64], sizes = [16, 32], strides = [1, 1]} : vector<16x96xf32> to vector<16x32xf32>
    %47 = vector.shape_cast %46 : vector<16x32xf32> to vector<2x8x32xf32>
    %48 = vector.extract_strided_slice %43 {offsets = [0, 0, 0], sizes = [2, 8, 8], strides = [1, 1, 1]} : vector<2x8x32xf32> to vector<2x8x8xf32>
    %49 = arith.truncf %48 : vector<2x8x8xf32> to vector<2x8x8xbf16>
    %50 = vector.extract_strided_slice %45 {offsets = [0, 0, 0], sizes = [2, 8, 8], strides = [1, 1, 1]} : vector<2x8x32xf32> to vector<2x8x8xf32>
    %51 = arith.truncf %50 : vector<2x8x8xf32> to vector<2x8x8xbf16>
    "tpu.trace_start"() <{level = 10 : i32, message = "bqd,bkd->bqk"}> : () -> ()
    %cst_19 = arith.constant dense<0.000000e+00> : vector<2x8x8xf32>
    %52 = tpu.matmul %49, %51, %cst_19 {dimension_numbers = #tpu.dot_dimension_numbers<[2], [2], [1], [1], [0, 0, 0, 1, 1, 1], [0], [0]>} : vector<2x8x8xbf16>, vector<2x8x8xbf16>, vector<2x8x8xf32> -> vector<2x8x8xf32>
    "tpu.trace_stop"() : () -> ()
    %53 = arith.addf %52, %32 : vector<2x8x8xf32>
    %cst_20 = arith.constant dense<0xFF800000> : vector<2x8xf32>
    %54 = vector.multi_reduction <maximumf>, %53, %cst_20 [2] : vector<2x8x8xf32> to vector<2x8xf32>
    %55 = vector.shape_cast %54 : vector<2x8xf32> to vector<2x8x1xf32>
    %56 = vector.broadcast %55 : vector<2x8x1xf32> to vector<2x8x8xf32>
    %57 = arith.subf %53, %56 : vector<2x8x8xf32>
    %58 = math.exp %57 : vector<2x8x8xf32>
    %cst_21 = arith.constant dense<0.000000e+00> : vector<2x8xf32>
    %59 = vector.multi_reduction <add>, %58, %cst_21 [2] : vector<2x8x8xf32> to vector<2x8xf32>
    %60 = vector.shape_cast %59 : vector<2x8xf32> to vector<2x8x1xf32>
    %61 = tpu.reciprocal %60 {approx = true} : vector<2x8x1xf32> -> vector<2x8x1xf32>
    %62 = vector.broadcast %61 : vector<2x8x1xf32> to vector<2x8x8xf32>
    %63 = arith.mulf %58, %62 : vector<2x8x8xf32>
    %64 = arith.truncf %63 : vector<2x8x8xf32> to vector<2x8x8xbf16>
    %65 = vector.extract_strided_slice %47 {offsets = [0, 0, 0], sizes = [2, 8, 8], strides = [1, 1, 1]} : vector<2x8x32xf32> to vector<2x8x8xf32>
    %66 = arith.truncf %65 : vector<2x8x8xf32> to vector<2x8x8xbf16>
    "tpu.trace_start"() <{level = 10 : i32, message = "bqk,bkd->bqd"}> : () -> ()
    %cst_22 = arith.constant dense<0.000000e+00> : vector<2x8x8xf32>
    %67 = tpu.matmul %64, %66, %cst_22 {dimension_numbers = #tpu.dot_dimension_numbers<[2], [1], [1], [2], [0, 0, 0, 1, 1, 2], [0], [0]>} : vector<2x8x8xbf16>, vector<2x8x8xbf16>, vector<2x8x8xf32> -> vector<2x8x8xf32>
    "tpu.trace_stop"() : () -> ()
    %68 = vector.extract_strided_slice %43 {offsets = [0, 0, 8], sizes = [2, 8, 8], strides = [1, 1, 1]} : vector<2x8x32xf32> to vector<2x8x8xf32>
    %69 = arith.truncf %68 : vector<2x8x8xf32> to vector<2x8x8xbf16>
    %70 = vector.extract_strided_slice %45 {offsets = [0, 0, 8], sizes = [2, 8, 8], strides = [1, 1, 1]} : vector<2x8x32xf32> to vector<2x8x8xf32>
    %71 = arith.truncf %70 : vector<2x8x8xf32> to vector<2x8x8xbf16>
    "tpu.trace_start"() <{level = 10 : i32, message = "bqd,bkd->bqk"}> : () -> ()
    %cst_23 = arith.constant dense<0.000000e+00> : vector<2x8x8xf32>
    %72 = tpu.matmul %69, %71, %cst_23 {dimension_numbers = #tpu.dot_dimension_numbers<[2], [2], [1], [1], [0, 0, 0, 1, 1, 1], [0], [0]>} : vector<2x8x8xbf16>, vector<2x8x8xbf16>, vector<2x8x8xf32> -> vector<2x8x8xf32>
    "tpu.trace_stop"() : () -> ()
    %73 = arith.addf %72, %32 : vector<2x8x8xf32>
    %cst_24 = arith.constant dense<0xFF800000> : vector<2x8xf32>
    %74 = vector.multi_reduction <maximumf>, %73, %cst_24 [2] : vector<2x8x8xf32> to vector<2x8xf32>
    %75 = vector.shape_cast %74 : vector<2x8xf32> to vector<2x8x1xf32>
    %76 = vector.broadcast %75 : vector<2x8x1xf32> to vector<2x8x8xf32>
    %77 = arith.subf %73, %76 : vector<2x8x8xf32>
    %78 = math.exp %77 : vector<2x8x8xf32>
    %cst_25 = arith.constant dense<0.000000e+00> : vector<2x8xf32>
    %79 = vector.multi_reduction <add>, %78, %cst_25 [2] : vector<2x8x8xf32> to vector<2x8xf32>
    %80 = vector.shape_cast %79 : vector<2x8xf32> to vector<2x8x1xf32>
    %81 = tpu.reciprocal %80 {approx = true} : vector<2x8x1xf32> -> vector<2x8x1xf32>
    %82 = vector.broadcast %81 : vector<2x8x1xf32> to vector<2x8x8xf32>
    %83 = arith.mulf %78, %82 : vector<2x8x8xf32>
    %84 = arith.truncf %83 : vector<2x8x8xf32> to vector<2x8x8xbf16>
    %85 = vector.extract_strided_slice %47 {offsets = [0, 0, 8], sizes = [2, 8, 8], strides = [1, 1, 1]} : vector<2x8x32xf32> to vector<2x8x8xf32>
    %86 = arith.truncf %85 : vector<2x8x8xf32> to vector<2x8x8xbf16>
    "tpu.trace_start"() <{level = 10 : i32, message = "bqk,bkd->bqd"}> : () -> ()
    %cst_26 = arith.constant dense<0.000000e+00> : vector<2x8x8xf32>
    %87 = tpu.matmul %84, %86, %cst_26 {dimension_numbers = #tpu.dot_dimension_numbers<[2], [1], [1], [2], [0, 0, 0, 1, 1, 2], [0], [0]>} : vector<2x8x8xbf16>, vector<2x8x8xbf16>, vector<2x8x8xf32> -> vector<2x8x8xf32>
    "tpu.trace_stop"() : () -> ()
    %88 = vector.extract_strided_slice %43 {offsets = [0, 0, 16], sizes = [2, 8, 8], strides = [1, 1, 1]} : vector<2x8x32xf32> to vector<2x8x8xf32>
    %89 = arith.truncf %88 : vector<2x8x8xf32> to vector<2x8x8xbf16>
    %90 = vector.extract_strided_slice %45 {offsets = [0, 0, 16], sizes = [2, 8, 8], strides = [1, 1, 1]} : vector<2x8x32xf32> to vector<2x8x8xf32>
    %91 = arith.truncf %90 : vector<2x8x8xf32> to vector<2x8x8xbf16>
    "tpu.trace_start"() <{level = 10 : i32, message = "bqd,bkd->bqk"}> : () -> ()
    %cst_27 = arith.constant dense<0.000000e+00> : vector<2x8x8xf32>
    %92 = tpu.matmul %89, %91, %cst_27 {dimension_numbers = #tpu.dot_dimension_numbers<[2], [2], [1], [1], [0, 0, 0, 1, 1, 1], [0], [0]>} : vector<2x8x8xbf16>, vector<2x8x8xbf16>, vector<2x8x8xf32> -> vector<2x8x8xf32>
    "tpu.trace_stop"() : () -> ()
    %93 = arith.addf %92, %32 : vector<2x8x8xf32>
    %cst_28 = arith.constant dense<0xFF800000> : vector<2x8xf32>
    %94 = vector.multi_reduction <maximumf>, %93, %cst_28 [2] : vector<2x8x8xf32> to vector<2x8xf32>
    %95 = vector.shape_cast %94 : vector<2x8xf32> to vector<2x8x1xf32>
    %96 = vector.broadcast %95 : vector<2x8x1xf32> to vector<2x8x8xf32>
    %97 = arith.subf %93, %96 : vector<2x8x8xf32>
    %98 = math.exp %97 : vector<2x8x8xf32>
    %cst_29 = arith.constant dense<0.000000e+00> : vector<2x8xf32>
    %99 = vector.multi_reduction <add>, %98, %cst_29 [2] : vector<2x8x8xf32> to vector<2x8xf32>
    %100 = vector.shape_cast %99 : vector<2x8xf32> to vector<2x8x1xf32>
    %101 = tpu.reciprocal %100 {approx = true} : vector<2x8x1xf32> -> vector<2x8x1xf32>
    %102 = vector.broadcast %101 : vector<2x8x1xf32> to vector<2x8x8xf32>
    %103 = arith.mulf %98, %102 : vector<2x8x8xf32>
    %104 = arith.truncf %103 : vector<2x8x8xf32> to vector<2x8x8xbf16>
    %105 = vector.extract_strided_slice %47 {offsets = [0, 0, 16], sizes = [2, 8, 8], strides = [1, 1, 1]} : vector<2x8x32xf32> to vector<2x8x8xf32>
    %106 = arith.truncf %105 : vector<2x8x8xf32> to vector<2x8x8xbf16>
    "tpu.trace_start"() <{level = 10 : i32, message = "bqk,bkd->bqd"}> : () -> ()
    %cst_30 = arith.constant dense<0.000000e+00> : vector<2x8x8xf32>
    %107 = tpu.matmul %104, %106, %cst_30 {dimension_numbers = #tpu.dot_dimension_numbers<[2], [1], [1], [2], [0, 0, 0, 1, 1, 2], [0], [0]>} : vector<2x8x8xbf16>, vector<2x8x8xbf16>, vector<2x8x8xf32> -> vector<2x8x8xf32>
    "tpu.trace_stop"() : () -> ()
    %108 = vector.extract_strided_slice %43 {offsets = [0, 0, 24], sizes = [2, 8, 8], strides = [1, 1, 1]} : vector<2x8x32xf32> to vector<2x8x8xf32>
    %109 = arith.truncf %108 : vector<2x8x8xf32> to vector<2x8x8xbf16>
    %110 = vector.extract_strided_slice %45 {offsets = [0, 0, 24], sizes = [2, 8, 8], strides = [1, 1, 1]} : vector<2x8x32xf32> to vector<2x8x8xf32>
    %111 = arith.truncf %110 : vector<2x8x8xf32> to vector<2x8x8xbf16>
    "tpu.trace_start"() <{level = 10 : i32, message = "bqd,bkd->bqk"}> : () -> ()
    %cst_31 = arith.constant dense<0.000000e+00> : vector<2x8x8xf32>
    %112 = tpu.matmul %109, %111, %cst_31 {dimension_numbers = #tpu.dot_dimension_numbers<[2], [2], [1], [1], [0, 0, 0, 1, 1, 1], [0], [0]>} : vector<2x8x8xbf16>, vector<2x8x8xbf16>, vector<2x8x8xf32> -> vector<2x8x8xf32>
    "tpu.trace_stop"() : () -> ()
    %113 = arith.addf %112, %32 : vector<2x8x8xf32>
    %cst_32 = arith.constant dense<0xFF800000> : vector<2x8xf32>
    %114 = vector.multi_reduction <maximumf>, %113, %cst_32 [2] : vector<2x8x8xf32> to vector<2x8xf32>
    %115 = vector.shape_cast %114 : vector<2x8xf32> to vector<2x8x1xf32>
    %116 = vector.broadcast %115 : vector<2x8x1xf32> to vector<2x8x8xf32>
    %117 = arith.subf %113, %116 : vector<2x8x8xf32>
    %118 = math.exp %117 : vector<2x8x8xf32>
    %cst_33 = arith.constant dense<0.000000e+00> : vector<2x8xf32>
    %119 = vector.multi_reduction <add>, %118, %cst_33 [2] : vector<2x8x8xf32> to vector<2x8xf32>
    %120 = vector.shape_cast %119 : vector<2x8xf32> to vector<2x8x1xf32>
    %121 = tpu.reciprocal %120 {approx = true} : vector<2x8x1xf32> -> vector<2x8x1xf32>
    %122 = vector.broadcast %121 : vector<2x8x1xf32> to vector<2x8x8xf32>
    %123 = arith.mulf %118, %122 : vector<2x8x8xf32>
    %124 = arith.truncf %123 : vector<2x8x8xf32> to vector<2x8x8xbf16>
    %125 = vector.extract_strided_slice %47 {offsets = [0, 0, 24], sizes = [2, 8, 8], strides = [1, 1, 1]} : vector<2x8x32xf32> to vector<2x8x8xf32>
    %126 = arith.truncf %125 : vector<2x8x8xf32> to vector<2x8x8xbf16>
    "tpu.trace_start"() <{level = 10 : i32, message = "bqk,bkd->bqd"}> : () -> ()
    %cst_34 = arith.constant dense<0.000000e+00> : vector<2x8x8xf32>
    %127 = tpu.matmul %124, %126, %cst_34 {dimension_numbers = #tpu.dot_dimension_numbers<[2], [1], [1], [2], [0, 0, 0, 1, 1, 2], [0], [0]>} : vector<2x8x8xbf16>, vector<2x8x8xbf16>, vector<2x8x8xf32> -> vector<2x8x8xf32>
    "tpu.trace_stop"() : () -> ()
    %128 = tpu.concatenate %67, %87, %107, %127 in 2 : vector<2x8x8xf32>, vector<2x8x8xf32>, vector<2x8x8xf32>, vector<2x8x8xf32> -> vector<2x8x32xf32>
    %129 = vector.shape_cast %128 : vector<2x8x32xf32> to vector<16x32xf32>
    %130 = arith.truncf %129 : vector<16x32xf32> to vector<16x32xbf16>
    %c0_35 = arith.constant 0 : index
    %c0_36 = arith.constant 0 : index
    %c0_37 = arith.constant 0 : index
    %131 = vector.load %arg5[%c0_35, %c0_36, %c0_37] : memref<2x32x32xbf16, #tpu.memory_space<vmem>>, vector<1x32x32xbf16>
    %132 = vector.shape_cast %131 : vector<1x32x32xbf16> to vector<32x32xbf16>
    %cst_38 = arith.constant dense<0.000000e+00> : vector<16x32xf32>
    %133 = tpu.matmul %130, %132, %cst_38 {dimension_numbers = #tpu.dot_dimension_numbers<[1], [0], [0], [1], [0, 0, 1, 1], [], []>} : vector<16x32xbf16>, vector<32x32xbf16>, vector<16x32xf32> -> vector<16x32xf32>
    %134 = vector.extract_strided_slice %34 {offsets = [1, 0], sizes = [1, 32], strides = [1, 1]} : vector<8x128xf32> to vector<1x32xf32>
    %135 = vector.broadcast %134 : vector<1x32xf32> to vector<16x32xf32>
    %136 = arith.addf %133, %135 : vector<16x32xf32>
    %137 = arith.addf %25, %136 : vector<16x32xf32>
    %138 = vector.extract_strided_slice %34 {offsets = [4, 0], sizes = [1, 32], strides = [1, 1]} : vector<8x128xf32> to vector<1x32xf32>
    %139 = vector.extract_strided_slice %34 {offsets = [5, 0], sizes = [1, 32], strides = [1, 1]} : vector<8x128xf32> to vector<1x32xf32>
    %cst_39 = arith.constant dense<0.000000e+00> : vector<16xf32>
    %140 = vector.multi_reduction <add>, %137, %cst_39 [1] : vector<16x32xf32> to vector<16xf32>
    %141 = vector.shape_cast %140 : vector<16xf32> to vector<16x1xf32>
    %cst_40 = arith.constant 3.200000e+01 : f32
    %142 = vector.broadcast %cst_40 : f32 to vector<16x1xf32>
    %143 = arith.divf %141, %142 : vector<16x1xf32>
    %144 = vector.broadcast %143 : vector<16x1xf32> to vector<16x32xf32>
    %145 = arith.subf %137, %144 : vector<16x32xf32>
    %146 = arith.mulf %145, %145 : vector<16x32xf32>
    %cst_41 = arith.constant dense<0.000000e+00> : vector<16xf32>
    %147 = vector.multi_reduction <add>, %146, %cst_41 [1] : vector<16x32xf32> to vector<16xf32>
    %148 = vector.shape_cast %147 : vector<16xf32> to vector<16x1xf32>
    %cst_42 = arith.constant 3.200000e+01 : f32
    %149 = vector.broadcast %cst_42 : f32 to vector<16x1xf32>
    %150 = arith.divf %148, %149 : vector<16x1xf32>
    %151 = vector.broadcast %143 : vector<16x1xf32> to vector<16x32xf32>
    %152 = arith.subf %137, %151 : vector<16x32xf32>
    %cst_43 = arith.constant 9.99999996E-13 : f32
    %153 = vector.broadcast %cst_43 : f32 to vector<16x1xf32>
    %154 = arith.addf %150, %153 : vector<16x1xf32>
    %155 = math.rsqrt %154 : vector<16x1xf32>
    %156 = vector.broadcast %155 : vector<16x1xf32> to vector<16x32xf32>
    %157 = arith.mulf %152, %156 : vector<16x32xf32>
    %158 = vector.broadcast %138 : vector<1x32xf32> to vector<16x32xf32>
    %159 = arith.mulf %157, %158 : vector<16x32xf32>
    %160 = vector.broadcast %139 : vector<1x32xf32> to vector<16x32xf32>
    %161 = arith.addf %159, %160 : vector<16x32xf32>
    %162 = arith.truncf %161 : vector<16x32xf32> to vector<16x32xbf16>
    %c0_44 = arith.constant 0 : index
    %c0_45 = arith.constant 0 : index
    %c0_46 = arith.constant 0 : index
    %163 = vector.load %arg6[%c0_44, %c0_45, %c0_46] : memref<2x32x64xbf16, #tpu.memory_space<vmem>>, vector<1x32x64xbf16>
    %164 = vector.shape_cast %163 : vector<1x32x64xbf16> to vector<32x64xbf16>
    %cst_47 = arith.constant dense<0.000000e+00> : vector<16x64xf32>
    %165 = tpu.matmul %162, %164, %cst_47 {dimension_numbers = #tpu.dot_dimension_numbers<[1], [0], [0], [1], [0, 0, 1, 1], [], []>} : vector<16x32xbf16>, vector<32x64xbf16>, vector<16x64xf32> -> vector<16x64xf32>
    %166 = vector.extract_strided_slice %34 {offsets = [2, 0], sizes = [1, 64], strides = [1, 1]} : vector<8x128xf32> to vector<1x64xf32>
    %167 = vector.broadcast %166 : vector<1x64xf32> to vector<16x64xf32>
    %168 = arith.addf %165, %167 : vector<16x64xf32>
    %cst_48 = arith.constant 5.000000e-01 : f32
    %169 = vector.broadcast %cst_48 : f32 to vector<16x64xf32>
    %170 = arith.mulf %169, %168 : vector<16x64xf32>
    %cst_49 = arith.constant 4.471500e-02 : f32
    %171 = vector.broadcast %cst_49 : f32 to vector<16x64xf32>
    %172 = arith.mulf %171, %168 : vector<16x64xf32>
    %173 = arith.mulf %172, %168 : vector<16x64xf32>
    %174 = arith.mulf %173, %168 : vector<16x64xf32>
    %175 = arith.addf %168, %174 : vector<16x64xf32>
    %cst_50 = arith.constant 0.797884583 : f32
    %176 = vector.broadcast %cst_50 : f32 to vector<16x64xf32>
    %177 = arith.mulf %176, %175 : vector<16x64xf32>
    %178 = math.tanh %177 : vector<16x64xf32>
    %cst_51 = arith.constant 1.000000e+00 : f32
    %179 = vector.broadcast %cst_51 : f32 to vector<16x64xf32>
    %180 = arith.addf %179, %178 : vector<16x64xf32>
    %181 = arith.mulf %170, %180 : vector<16x64xf32>
    %182 = arith.truncf %181 : vector<16x64xf32> to vector<16x64xbf16>
    %c0_52 = arith.constant 0 : index
    %c0_53 = arith.constant 0 : index
    %c0_54 = arith.constant 0 : index
    %183 = vector.load %arg7[%c0_52, %c0_53, %c0_54] : memref<2x64x32xbf16, #tpu.memory_space<vmem>>, vector<1x64x32xbf16>
    %184 = vector.shape_cast %183 : vector<1x64x32xbf16> to vector<64x32xbf16>
    %cst_55 = arith.constant dense<0.000000e+00> : vector<16x32xf32>
    %185 = tpu.matmul %182, %184, %cst_55 {dimension_numbers = #tpu.dot_dimension_numbers<[1], [0], [0], [1], [0, 0, 1, 1], [], []>} : vector<16x64xbf16>, vector<64x32xbf16>, vector<16x32xf32> -> vector<16x32xf32>
    %186 = vector.extract_strided_slice %34 {offsets = [3, 0], sizes = [1, 32], strides = [1, 1]} : vector<8x128xf32> to vector<1x32xf32>
    %187 = vector.broadcast %186 : vector<1x32xf32> to vector<16x32xf32>
    %188 = arith.addf %185, %187 : vector<16x32xf32>
    %189 = arith.addf %161, %188 : vector<16x32xf32>
    %190 = vector.extract_strided_slice %34 {offsets = [6, 0], sizes = [1, 32], strides = [1, 1]} : vector<8x128xf32> to vector<1x32xf32>
    %191 = vector.extract_strided_slice %34 {offsets = [7, 0], sizes = [1, 32], strides = [1, 1]} : vector<8x128xf32> to vector<1x32xf32>
    %cst_56 = arith.constant dense<0.000000e+00> : vector<16xf32>
    %192 = vector.multi_reduction <add>, %189, %cst_56 [1] : vector<16x32xf32> to vector<16xf32>
    %193 = vector.shape_cast %192 : vector<16xf32> to vector<16x1xf32>
    %cst_57 = arith.constant 3.200000e+01 : f32
    %194 = vector.broadcast %cst_57 : f32 to vector<16x1xf32>
    %195 = arith.divf %193, %194 : vector<16x1xf32>
    %196 = vector.broadcast %195 : vector<16x1xf32> to vector<16x32xf32>
    %197 = arith.subf %189, %196 : vector<16x32xf32>
    %198 = arith.mulf %197, %197 : vector<16x32xf32>
    %cst_58 = arith.constant dense<0.000000e+00> : vector<16xf32>
    %199 = vector.multi_reduction <add>, %198, %cst_58 [1] : vector<16x32xf32> to vector<16xf32>
    %200 = vector.shape_cast %199 : vector<16xf32> to vector<16x1xf32>
    %cst_59 = arith.constant 3.200000e+01 : f32
    %201 = vector.broadcast %cst_59 : f32 to vector<16x1xf32>
    %202 = arith.divf %200, %201 : vector<16x1xf32>
    %203 = vector.broadcast %195 : vector<16x1xf32> to vector<16x32xf32>
    %204 = arith.subf %189, %203 : vector<16x32xf32>
    %cst_60 = arith.constant 9.99999996E-13 : f32
    %205 = vector.broadcast %cst_60 : f32 to vector<16x1xf32>
    %206 = arith.addf %202, %205 : vector<16x1xf32>
    %207 = math.rsqrt %206 : vector<16x1xf32>
    %208 = vector.broadcast %207 : vector<16x1xf32> to vector<16x32xf32>
    %209 = arith.mulf %204, %208 : vector<16x32xf32>
    %210 = vector.broadcast %190 : vector<1x32xf32> to vector<16x32xf32>
    %211 = arith.mulf %209, %210 : vector<16x32xf32>
    %212 = vector.broadcast %191 : vector<1x32xf32> to vector<16x32xf32>
    %213 = arith.addf %211, %212 : vector<16x32xf32>
    %c1 = arith.constant 1 : index
    %c0_61 = arith.constant 0 : index
    %c0_62 = arith.constant 0 : index
    %214 = vector.load %arg3[%c1, %c0_61, %c0_62] : memref<2x8x128xf32, #tpu.memory_space<vmem>>, vector<1x8x128xf32>
    %215 = vector.shape_cast %214 : vector<1x8x128xf32> to vector<8x128xf32>
    %216 = arith.truncf %213 : vector<16x32xf32> to vector<16x32xbf16>
    %c1_63 = arith.constant 1 : index
    %c0_64 = arith.constant 0 : index
    %c0_65 = arith.constant 0 : index
    %217 = vector.load %arg4[%c1_63, %c0_64, %c0_65] : memref<2x32x96xbf16, #tpu.memory_space<vmem>>, vector<1x32x96xbf16>
    %218 = vector.shape_cast %217 : vector<1x32x96xbf16> to vector<32x96xbf16>
    %cst_66 = arith.constant dense<0.000000e+00> : vector<16x96xf32>
    %219 = tpu.matmul %216, %218, %cst_66 {dimension_numbers = #tpu.dot_dimension_numbers<[1], [0], [0], [1], [0, 0, 1, 1], [], []>} : vector<16x32xbf16>, vector<32x96xbf16>, vector<16x96xf32> -> vector<16x96xf32>
    %220 = vector.extract_strided_slice %215 {offsets = [0, 0], sizes = [1, 96], strides = [1, 1]} : vector<8x128xf32> to vector<1x96xf32>
    %221 = vector.broadcast %220 : vector<1x96xf32> to vector<16x96xf32>
    %222 = arith.addf %219, %221 : vector<16x96xf32>
    %223 = vector.extract_strided_slice %222 {offsets = [0, 0], sizes = [16, 32], strides = [1, 1]} : vector<16x96xf32> to vector<16x32xf32>
    %224 = vector.shape_cast %223 : vector<16x32xf32> to vector<2x8x32xf32>
    %225 = vector.extract_strided_slice %222 {offsets = [0, 32], sizes = [16, 32], strides = [1, 1]} : vector<16x96xf32> to vector<16x32xf32>
    %226 = vector.shape_cast %225 : vector<16x32xf32> to vector<2x8x32xf32>
    %227 = vector.extract_strided_slice %222 {offsets = [0, 64], sizes = [16, 32], strides = [1, 1]} : vector<16x96xf32> to vector<16x32xf32>
    %228 = vector.shape_cast %227 : vector<16x32xf32> to vector<2x8x32xf32>
    %229 = vector.extract_strided_slice %224 {offsets = [0, 0, 0], sizes = [2, 8, 8], strides = [1, 1, 1]} : vector<2x8x32xf32> to vector<2x8x8xf32>
    %230 = arith.truncf %229 : vector<2x8x8xf32> to vector<2x8x8xbf16>
    %231 = vector.extract_strided_slice %226 {offsets = [0, 0, 0], sizes = [2, 8, 8], strides = [1, 1, 1]} : vector<2x8x32xf32> to vector<2x8x8xf32>
    %232 = arith.truncf %231 : vector<2x8x8xf32> to vector<2x8x8xbf16>
    "tpu.trace_start"() <{level = 10 : i32, message = "bqd,bkd->bqk"}> : () -> ()
    %cst_67 = arith.constant dense<0.000000e+00> : vector<2x8x8xf32>
    %233 = tpu.matmul %230, %232, %cst_67 {dimension_numbers = #tpu.dot_dimension_numbers<[2], [2], [1], [1], [0, 0, 0, 1, 1, 1], [0], [0]>} : vector<2x8x8xbf16>, vector<2x8x8xbf16>, vector<2x8x8xf32> -> vector<2x8x8xf32>
    "tpu.trace_stop"() : () -> ()
    %234 = arith.addf %233, %32 : vector<2x8x8xf32>
    %cst_68 = arith.constant dense<0xFF800000> : vector<2x8xf32>
    %235 = vector.multi_reduction <maximumf>, %234, %cst_68 [2] : vector<2x8x8xf32> to vector<2x8xf32>
    %236 = vector.shape_cast %235 : vector<2x8xf32> to vector<2x8x1xf32>
    %237 = vector.broadcast %236 : vector<2x8x1xf32> to vector<2x8x8xf32>
    %238 = arith.subf %234, %237 : vector<2x8x8xf32>
    %239 = math.exp %238 : vector<2x8x8xf32>
    %cst_69 = arith.constant dense<0.000000e+00> : vector<2x8xf32>
    %240 = vector.multi_reduction <add>, %239, %cst_69 [2] : vector<2x8x8xf32> to vector<2x8xf32>
    %241 = vector.shape_cast %240 : vector<2x8xf32> to vector<2x8x1xf32>
    %242 = tpu.reciprocal %241 {approx = true} : vector<2x8x1xf32> -> vector<2x8x1xf32>
    %243 = vector.broadcast %242 : vector<2x8x1xf32> to vector<2x8x8xf32>
    %244 = arith.mulf %239, %243 : vector<2x8x8xf32>
    %245 = arith.truncf %244 : vector<2x8x8xf32> to vector<2x8x8xbf16>
    %246 = vector.extract_strided_slice %228 {offsets = [0, 0, 0], sizes = [2, 8, 8], strides = [1, 1, 1]} : vector<2x8x32xf32> to vector<2x8x8xf32>
    %247 = arith.truncf %246 : vector<2x8x8xf32> to vector<2x8x8xbf16>
    "tpu.trace_start"() <{level = 10 : i32, message = "bqk,bkd->bqd"}> : () -> ()
    %cst_70 = arith.constant dense<0.000000e+00> : vector<2x8x8xf32>
    %248 = tpu.matmul %245, %247, %cst_70 {dimension_numbers = #tpu.dot_dimension_numbers<[2], [1], [1], [2], [0, 0, 0, 1, 1, 2], [0], [0]>} : vector<2x8x8xbf16>, vector<2x8x8xbf16>, vector<2x8x8xf32> -> vector<2x8x8xf32>
    "tpu.trace_stop"() : () -> ()
    %249 = vector.extract_strided_slice %224 {offsets = [0, 0, 8], sizes = [2, 8, 8], strides = [1, 1, 1]} : vector<2x8x32xf32> to vector<2x8x8xf32>
    %250 = arith.truncf %249 : vector<2x8x8xf32> to vector<2x8x8xbf16>
    %251 = vector.extract_strided_slice %226 {offsets = [0, 0, 8], sizes = [2, 8, 8], strides = [1, 1, 1]} : vector<2x8x32xf32> to vector<2x8x8xf32>
    %252 = arith.truncf %251 : vector<2x8x8xf32> to vector<2x8x8xbf16>
    "tpu.trace_start"() <{level = 10 : i32, message = "bqd,bkd->bqk"}> : () -> ()
    %cst_71 = arith.constant dense<0.000000e+00> : vector<2x8x8xf32>
    %253 = tpu.matmul %250, %252, %cst_71 {dimension_numbers = #tpu.dot_dimension_numbers<[2], [2], [1], [1], [0, 0, 0, 1, 1, 1], [0], [0]>} : vector<2x8x8xbf16>, vector<2x8x8xbf16>, vector<2x8x8xf32> -> vector<2x8x8xf32>
    "tpu.trace_stop"() : () -> ()
    %254 = arith.addf %253, %32 : vector<2x8x8xf32>
    %cst_72 = arith.constant dense<0xFF800000> : vector<2x8xf32>
    %255 = vector.multi_reduction <maximumf>, %254, %cst_72 [2] : vector<2x8x8xf32> to vector<2x8xf32>
    %256 = vector.shape_cast %255 : vector<2x8xf32> to vector<2x8x1xf32>
    %257 = vector.broadcast %256 : vector<2x8x1xf32> to vector<2x8x8xf32>
    %258 = arith.subf %254, %257 : vector<2x8x8xf32>
    %259 = math.exp %258 : vector<2x8x8xf32>
    %cst_73 = arith.constant dense<0.000000e+00> : vector<2x8xf32>
    %260 = vector.multi_reduction <add>, %259, %cst_73 [2] : vector<2x8x8xf32> to vector<2x8xf32>
    %261 = vector.shape_cast %260 : vector<2x8xf32> to vector<2x8x1xf32>
    %262 = tpu.reciprocal %261 {approx = true} : vector<2x8x1xf32> -> vector<2x8x1xf32>
    %263 = vector.broadcast %262 : vector<2x8x1xf32> to vector<2x8x8xf32>
    %264 = arith.mulf %259, %263 : vector<2x8x8xf32>
    %265 = arith.truncf %264 : vector<2x8x8xf32> to vector<2x8x8xbf16>
    %266 = vector.extract_strided_slice %228 {offsets = [0, 0, 8], sizes = [2, 8, 8], strides = [1, 1, 1]} : vector<2x8x32xf32> to vector<2x8x8xf32>
    %267 = arith.truncf %266 : vector<2x8x8xf32> to vector<2x8x8xbf16>
    "tpu.trace_start"() <{level = 10 : i32, message = "bqk,bkd->bqd"}> : () -> ()
    %cst_74 = arith.constant dense<0.000000e+00> : vector<2x8x8xf32>
    %268 = tpu.matmul %265, %267, %cst_74 {dimension_numbers = #tpu.dot_dimension_numbers<[2], [1], [1], [2], [0, 0, 0, 1, 1, 2], [0], [0]>} : vector<2x8x8xbf16>, vector<2x8x8xbf16>, vector<2x8x8xf32> -> vector<2x8x8xf32>
    "tpu.trace_stop"() : () -> ()
    %269 = vector.extract_strided_slice %224 {offsets = [0, 0, 16], sizes = [2, 8, 8], strides = [1, 1, 1]} : vector<2x8x32xf32> to vector<2x8x8xf32>
    %270 = arith.truncf %269 : vector<2x8x8xf32> to vector<2x8x8xbf16>
    %271 = vector.extract_strided_slice %226 {offsets = [0, 0, 16], sizes = [2, 8, 8], strides = [1, 1, 1]} : vector<2x8x32xf32> to vector<2x8x8xf32>
    %272 = arith.truncf %271 : vector<2x8x8xf32> to vector<2x8x8xbf16>
    "tpu.trace_start"() <{level = 10 : i32, message = "bqd,bkd->bqk"}> : () -> ()
    %cst_75 = arith.constant dense<0.000000e+00> : vector<2x8x8xf32>
    %273 = tpu.matmul %270, %272, %cst_75 {dimension_numbers = #tpu.dot_dimension_numbers<[2], [2], [1], [1], [0, 0, 0, 1, 1, 1], [0], [0]>} : vector<2x8x8xbf16>, vector<2x8x8xbf16>, vector<2x8x8xf32> -> vector<2x8x8xf32>
    "tpu.trace_stop"() : () -> ()
    %274 = arith.addf %273, %32 : vector<2x8x8xf32>
    %cst_76 = arith.constant dense<0xFF800000> : vector<2x8xf32>
    %275 = vector.multi_reduction <maximumf>, %274, %cst_76 [2] : vector<2x8x8xf32> to vector<2x8xf32>
    %276 = vector.shape_cast %275 : vector<2x8xf32> to vector<2x8x1xf32>
    %277 = vector.broadcast %276 : vector<2x8x1xf32> to vector<2x8x8xf32>
    %278 = arith.subf %274, %277 : vector<2x8x8xf32>
    %279 = math.exp %278 : vector<2x8x8xf32>
    %cst_77 = arith.constant dense<0.000000e+00> : vector<2x8xf32>
    %280 = vector.multi_reduction <add>, %279, %cst_77 [2] : vector<2x8x8xf32> to vector<2x8xf32>
    %281 = vector.shape_cast %280 : vector<2x8xf32> to vector<2x8x1xf32>
    %282 = tpu.reciprocal %281 {approx = true} : vector<2x8x1xf32> -> vector<2x8x1xf32>
    %283 = vector.broadcast %282 : vector<2x8x1xf32> to vector<2x8x8xf32>
    %284 = arith.mulf %279, %283 : vector<2x8x8xf32>
    %285 = arith.truncf %284 : vector<2x8x8xf32> to vector<2x8x8xbf16>
    %286 = vector.extract_strided_slice %228 {offsets = [0, 0, 16], sizes = [2, 8, 8], strides = [1, 1, 1]} : vector<2x8x32xf32> to vector<2x8x8xf32>
    %287 = arith.truncf %286 : vector<2x8x8xf32> to vector<2x8x8xbf16>
    "tpu.trace_start"() <{level = 10 : i32, message = "bqk,bkd->bqd"}> : () -> ()
    %cst_78 = arith.constant dense<0.000000e+00> : vector<2x8x8xf32>
    %288 = tpu.matmul %285, %287, %cst_78 {dimension_numbers = #tpu.dot_dimension_numbers<[2], [1], [1], [2], [0, 0, 0, 1, 1, 2], [0], [0]>} : vector<2x8x8xbf16>, vector<2x8x8xbf16>, vector<2x8x8xf32> -> vector<2x8x8xf32>
    "tpu.trace_stop"() : () -> ()
    %289 = vector.extract_strided_slice %224 {offsets = [0, 0, 24], sizes = [2, 8, 8], strides = [1, 1, 1]} : vector<2x8x32xf32> to vector<2x8x8xf32>
    %290 = arith.truncf %289 : vector<2x8x8xf32> to vector<2x8x8xbf16>
    %291 = vector.extract_strided_slice %226 {offsets = [0, 0, 24], sizes = [2, 8, 8], strides = [1, 1, 1]} : vector<2x8x32xf32> to vector<2x8x8xf32>
    %292 = arith.truncf %291 : vector<2x8x8xf32> to vector<2x8x8xbf16>
    "tpu.trace_start"() <{level = 10 : i32, message = "bqd,bkd->bqk"}> : () -> ()
    %cst_79 = arith.constant dense<0.000000e+00> : vector<2x8x8xf32>
    %293 = tpu.matmul %290, %292, %cst_79 {dimension_numbers = #tpu.dot_dimension_numbers<[2], [2], [1], [1], [0, 0, 0, 1, 1, 1], [0], [0]>} : vector<2x8x8xbf16>, vector<2x8x8xbf16>, vector<2x8x8xf32> -> vector<2x8x8xf32>
    "tpu.trace_stop"() : () -> ()
    %294 = arith.addf %293, %32 : vector<2x8x8xf32>
    %cst_80 = arith.constant dense<0xFF800000> : vector<2x8xf32>
    %295 = vector.multi_reduction <maximumf>, %294, %cst_80 [2] : vector<2x8x8xf32> to vector<2x8xf32>
    %296 = vector.shape_cast %295 : vector<2x8xf32> to vector<2x8x1xf32>
    %297 = vector.broadcast %296 : vector<2x8x1xf32> to vector<2x8x8xf32>
    %298 = arith.subf %294, %297 : vector<2x8x8xf32>
    %299 = math.exp %298 : vector<2x8x8xf32>
    %cst_81 = arith.constant dense<0.000000e+00> : vector<2x8xf32>
    %300 = vector.multi_reduction <add>, %299, %cst_81 [2] : vector<2x8x8xf32> to vector<2x8xf32>
    %301 = vector.shape_cast %300 : vector<2x8xf32> to vector<2x8x1xf32>
    %302 = tpu.reciprocal %301 {approx = true} : vector<2x8x1xf32> -> vector<2x8x1xf32>
    %303 = vector.broadcast %302 : vector<2x8x1xf32> to vector<2x8x8xf32>
    %304 = arith.mulf %299, %303 : vector<2x8x8xf32>
    %305 = arith.truncf %304 : vector<2x8x8xf32> to vector<2x8x8xbf16>
    %306 = vector.extract_strided_slice %228 {offsets = [0, 0, 24], sizes = [2, 8, 8], strides = [1, 1, 1]} : vector<2x8x32xf32> to vector<2x8x8xf32>
    %307 = arith.truncf %306 : vector<2x8x8xf32> to vector<2x8x8xbf16>
    "tpu.trace_start"() <{level = 10 : i32, message = "bqk,bkd->bqd"}> : () -> ()
    %cst_82 = arith.constant dense<0.000000e+00> : vector<2x8x8xf32>
    %308 = tpu.matmul %305, %307, %cst_82 {dimension_numbers = #tpu.dot_dimension_numbers<[2], [1], [1], [2], [0, 0, 0, 1, 1, 2], [0], [0]>} : vector<2x8x8xbf16>, vector<2x8x8xbf16>, vector<2x8x8xf32> -> vector<2x8x8xf32>
    "tpu.trace_stop"() : () -> ()
    %309 = tpu.concatenate %248, %268, %288, %308 in 2 : vector<2x8x8xf32>, vector<2x8x8xf32>, vector<2x8x8xf32>, vector<2x8x8xf32> -> vector<2x8x32xf32>
    %310 = vector.shape_cast %309 : vector<2x8x32xf32> to vector<16x32xf32>
    %311 = arith.truncf %310 : vector<16x32xf32> to vector<16x32xbf16>
    %c1_83 = arith.constant 1 : index
    %c0_84 = arith.constant 0 : index
    %c0_85 = arith.constant 0 : index
    %312 = vector.load %arg5[%c1_83, %c0_84, %c0_85] : memref<2x32x32xbf16, #tpu.memory_space<vmem>>, vector<1x32x32xbf16>
    %313 = vector.shape_cast %312 : vector<1x32x32xbf16> to vector<32x32xbf16>
    %cst_86 = arith.constant dense<0.000000e+00> : vector<16x32xf32>
    %314 = tpu.matmul %311, %313, %cst_86 {dimension_numbers = #tpu.dot_dimension_numbers<[1], [0], [0], [1], [0, 0, 1, 1], [], []>} : vector<16x32xbf16>, vector<32x32xbf16>, vector<16x32xf32> -> vector<16x32xf32>
    %315 = vector.extract_strided_slice %215 {offsets = [1, 0], sizes = [1, 32], strides = [1, 1]} : vector<8x128xf32> to vector<1x32xf32>
    %316 = vector.broadcast %315 : vector<1x32xf32> to vector<16x32xf32>
    %317 = arith.addf %314, %316 : vector<16x32xf32>
    %318 = arith.addf %213, %317 : vector<16x32xf32>
    %319 = vector.extract_strided_slice %215 {offsets = [4, 0], sizes = [1, 32], strides = [1, 1]} : vector<8x128xf32> to vector<1x32xf32>
    %320 = vector.extract_strided_slice %215 {offsets = [5, 0], sizes = [1, 32], strides = [1, 1]} : vector<8x128xf32> to vector<1x32xf32>
    %cst_87 = arith.constant dense<0.000000e+00> : vector<16xf32>
    %321 = vector.multi_reduction <add>, %318, %cst_87 [1] : vector<16x32xf32> to vector<16xf32>
    %322 = vector.shape_cast %321 : vector<16xf32> to vector<16x1xf32>
    %cst_88 = arith.constant 3.200000e+01 : f32
    %323 = vector.broadcast %cst_88 : f32 to vector<16x1xf32>
    %324 = arith.divf %322, %323 : vector<16x1xf32>
    %325 = vector.broadcast %324 : vector<16x1xf32> to vector<16x32xf32>
    %326 = arith.subf %318, %325 : vector<16x32xf32>
    %327 = arith.mulf %326, %326 : vector<16x32xf32>
    %cst_89 = arith.constant dense<0.000000e+00> : vector<16xf32>
    %328 = vector.multi_reduction <add>, %327, %cst_89 [1] : vector<16x32xf32> to vector<16xf32>
    %329 = vector.shape_cast %328 : vector<16xf32> to vector<16x1xf32>
    %cst_90 = arith.constant 3.200000e+01 : f32
    %330 = vector.broadcast %cst_90 : f32 to vector<16x1xf32>
    %331 = arith.divf %329, %330 : vector<16x1xf32>
    %332 = vector.broadcast %324 : vector<16x1xf32> to vector<16x32xf32>
    %333 = arith.subf %318, %332 : vector<16x32xf32>
    %cst_91 = arith.constant 9.99999996E-13 : f32
    %334 = vector.broadcast %cst_91 : f32 to vector<16x1xf32>
    %335 = arith.addf %331, %334 : vector<16x1xf32>
    %336 = math.rsqrt %335 : vector<16x1xf32>
    %337 = vector.broadcast %336 : vector<16x1xf32> to vector<16x32xf32>
    %338 = arith.mulf %333, %337 : vector<16x32xf32>
    %339 = vector.broadcast %319 : vector<1x32xf32> to vector<16x32xf32>
    %340 = arith.mulf %338, %339 : vector<16x32xf32>
    %341 = vector.broadcast %320 : vector<1x32xf32> to vector<16x32xf32>
    %342 = arith.addf %340, %341 : vector<16x32xf32>
    %343 = arith.truncf %342 : vector<16x32xf32> to vector<16x32xbf16>
    %c1_92 = arith.constant 1 : index
    %c0_93 = arith.constant 0 : index
    %c0_94 = arith.constant 0 : index
    %344 = vector.load %arg6[%c1_92, %c0_93, %c0_94] : memref<2x32x64xbf16, #tpu.memory_space<vmem>>, vector<1x32x64xbf16>
    %345 = vector.shape_cast %344 : vector<1x32x64xbf16> to vector<32x64xbf16>
    %cst_95 = arith.constant dense<0.000000e+00> : vector<16x64xf32>
    %346 = tpu.matmul %343, %345, %cst_95 {dimension_numbers = #tpu.dot_dimension_numbers<[1], [0], [0], [1], [0, 0, 1, 1], [], []>} : vector<16x32xbf16>, vector<32x64xbf16>, vector<16x64xf32> -> vector<16x64xf32>
    %347 = vector.extract_strided_slice %215 {offsets = [2, 0], sizes = [1, 64], strides = [1, 1]} : vector<8x128xf32> to vector<1x64xf32>
    %348 = vector.broadcast %347 : vector<1x64xf32> to vector<16x64xf32>
    %349 = arith.addf %346, %348 : vector<16x64xf32>
    %cst_96 = arith.constant 5.000000e-01 : f32
    %350 = vector.broadcast %cst_96 : f32 to vector<16x64xf32>
    %351 = arith.mulf %350, %349 : vector<16x64xf32>
    %cst_97 = arith.constant 4.471500e-02 : f32
    %352 = vector.broadcast %cst_97 : f32 to vector<16x64xf32>
    %353 = arith.mulf %352, %349 : vector<16x64xf32>
    %354 = arith.mulf %353, %349 : vector<16x64xf32>
    %355 = arith.mulf %354, %349 : vector<16x64xf32>
    %356 = arith.addf %349, %355 : vector<16x64xf32>
    %cst_98 = arith.constant 0.797884583 : f32
    %357 = vector.broadcast %cst_98 : f32 to vector<16x64xf32>
    %358 = arith.mulf %357, %356 : vector<16x64xf32>
    %359 = math.tanh %358 : vector<16x64xf32>
    %cst_99 = arith.constant 1.000000e+00 : f32
    %360 = vector.broadcast %cst_99 : f32 to vector<16x64xf32>
    %361 = arith.addf %360, %359 : vector<16x64xf32>
    %362 = arith.mulf %351, %361 : vector<16x64xf32>
    %363 = arith.truncf %362 : vector<16x64xf32> to vector<16x64xbf16>
    %c1_100 = arith.constant 1 : index
    %c0_101 = arith.constant 0 : index
    %c0_102 = arith.constant 0 : index
    %364 = vector.load %arg7[%c1_100, %c0_101, %c0_102] : memref<2x64x32xbf16, #tpu.memory_space<vmem>>, vector<1x64x32xbf16>
    %365 = vector.shape_cast %364 : vector<1x64x32xbf16> to vector<64x32xbf16>
    %cst_103 = arith.constant dense<0.000000e+00> : vector<16x32xf32>
    %366 = tpu.matmul %363, %365, %cst_103 {dimension_numbers = #tpu.dot_dimension_numbers<[1], [0], [0], [1], [0, 0, 1, 1], [], []>} : vector<16x64xbf16>, vector<64x32xbf16>, vector<16x32xf32> -> vector<16x32xf32>
    %367 = vector.extract_strided_slice %215 {offsets = [3, 0], sizes = [1, 32], strides = [1, 1]} : vector<8x128xf32> to vector<1x32xf32>
    %368 = vector.broadcast %367 : vector<1x32xf32> to vector<16x32xf32>
    %369 = arith.addf %366, %368 : vector<16x32xf32>
    %370 = arith.addf %342, %369 : vector<16x32xf32>
    %371 = vector.extract_strided_slice %215 {offsets = [6, 0], sizes = [1, 32], strides = [1, 1]} : vector<8x128xf32> to vector<1x32xf32>
    %372 = vector.extract_strided_slice %215 {offsets = [7, 0], sizes = [1, 32], strides = [1, 1]} : vector<8x128xf32> to vector<1x32xf32>
    %cst_104 = arith.constant dense<0.000000e+00> : vector<16xf32>
    %373 = vector.multi_reduction <add>, %370, %cst_104 [1] : vector<16x32xf32> to vector<16xf32>
    %374 = vector.shape_cast %373 : vector<16xf32> to vector<16x1xf32>
    %cst_105 = arith.constant 3.200000e+01 : f32
    %375 = vector.broadcast %cst_105 : f32 to vector<16x1xf32>
    %376 = arith.divf %374, %375 : vector<16x1xf32>
    %377 = vector.broadcast %376 : vector<16x1xf32> to vector<16x32xf32>
    %378 = arith.subf %370, %377 : vector<16x32xf32>
    %379 = arith.mulf %378, %378 : vector<16x32xf32>
    %cst_106 = arith.constant dense<0.000000e+00> : vector<16xf32>
    %380 = vector.multi_reduction <add>, %379, %cst_106 [1] : vector<16x32xf32> to vector<16xf32>
    %381 = vector.shape_cast %380 : vector<16xf32> to vector<16x1xf32>
    %cst_107 = arith.constant 3.200000e+01 : f32
    %382 = vector.broadcast %cst_107 : f32 to vector<16x1xf32>
    %383 = arith.divf %381, %382 : vector<16x1xf32>
    %384 = vector.broadcast %376 : vector<16x1xf32> to vector<16x32xf32>
    %385 = arith.subf %370, %384 : vector<16x32xf32>
    %cst_108 = arith.constant 9.99999996E-13 : f32
    %386 = vector.broadcast %cst_108 : f32 to vector<16x1xf32>
    %387 = arith.addf %383, %386 : vector<16x1xf32>
    %388 = math.rsqrt %387 : vector<16x1xf32>
    %389 = vector.broadcast %388 : vector<16x1xf32> to vector<16x32xf32>
    %390 = arith.mulf %385, %389 : vector<16x32xf32>
    %391 = vector.broadcast %371 : vector<1x32xf32> to vector<16x32xf32>
    %392 = arith.mulf %390, %391 : vector<16x32xf32>
    %393 = vector.broadcast %372 : vector<1x32xf32> to vector<16x32xf32>
    %394 = arith.addf %392, %393 : vector<16x32xf32>
    %395 = vector.shape_cast %394 : vector<16x32xf32> to vector<2x8x32xf32>
    %396 = vector.extract_strided_slice %395 {offsets = [0, 0, 0], sizes = [2, 1, 32], strides = [1, 1, 1]} : vector<2x8x32xf32> to vector<2x1x32xf32>
    %397 = vector.shape_cast %396 : vector<2x1x32xf32> to vector<2x32xf32>
    %cst_109 = arith.constant 0.000000e+00 : f32
    %398 = vector.broadcast %cst_109 : f32 to vector<6x32xf32>
    %399 = tpu.concatenate %397, %398 in 0 : vector<2x32xf32>, vector<6x32xf32> -> vector<8x32xf32>
    %400 = arith.truncf %399 : vector<8x32xf32> to vector<8x32xbf16>
    %c0_110 = arith.constant 0 : index
    %c0_111 = arith.constant 0 : index
    %401 = vector.load %arg8[%c0_110, %c0_111] : memref<32x32xbf16, #tpu.memory_space<vmem>>, vector<32x32xbf16>
    %cst_112 = arith.constant dense<0.000000e+00> : vector<8x32xf32>
    %402 = tpu.matmul %400, %401, %cst_112 {dimension_numbers = #tpu.dot_dimension_numbers<[1], [0], [0], [1], [0, 0, 1, 1], [], []>} : vector<8x32xbf16>, vector<32x32xbf16>, vector<8x32xf32> -> vector<8x32xf32>
    %403 = vector.extract_strided_slice %0 {offsets = [2, 0], sizes = [1, 32], strides = [1, 1]} : vector<8x128xf32> to vector<1x32xf32>
    %404 = vector.broadcast %403 : vector<1x32xf32> to vector<8x32xf32>
    %405 = arith.addf %402, %404 : vector<8x32xf32>
    %406 = math.tanh %405 : vector<8x32xf32>
    %407 = arith.truncf %406 : vector<8x32xf32> to vector<8x32xbf16>
    %c0_113 = arith.constant 0 : index
    %c0_114 = arith.constant 0 : index
    %408 = vector.load %arg9[%c0_113, %c0_114] : memref<32x128xbf16, #tpu.memory_space<vmem>>, vector<32x128xbf16>
    %cst_115 = arith.constant dense<0.000000e+00> : vector<8x128xf32>
    %409 = tpu.matmul %407, %408, %cst_115 {dimension_numbers = #tpu.dot_dimension_numbers<[1], [0], [0], [1], [0, 0, 1, 1], [], []>} : vector<8x32xbf16>, vector<32x128xbf16>, vector<8x128xf32> -> vector<8x128xf32>
    %410 = vector.extract_strided_slice %0 {offsets = [3, 0], sizes = [1, 128], strides = [1, 1]} : vector<8x128xf32> to vector<1x128xf32>
    %411 = vector.broadcast %410 : vector<1x128xf32> to vector<8x128xf32>
    %412 = arith.addf %409, %411 : vector<8x128xf32>
    %c0_116 = arith.constant 0 : index
    %c0_117 = arith.constant 0 : index
    %413 = vector.load %arg10[%c0_116, %c0_117] : memref<8x128xf32, #tpu.memory_space<vmem>>, vector<8x128xf32>
    tpu.vector_store %arg10[%c0_116, %c0_117], %412 {strides = array<i32>} : memref<8x128xf32, #tpu.memory_space<vmem>>, vector<8x128xf32>,
    return
  }
}

</mosaic_0001>

<llo_original>
// kernel: tpu_custom_call.1
$region0: #{tpu_custom_call.1}
  #allocation0 [shape = 'u32[]', space=smem, size = 0x4, offset = 0x4, fixed_abs, tag = 'smem constant byte address 0x4 - core index']
  #allocation1 [shape = 'u32[144,128]{1,0:T(1,128)}', space=vmem, size = 0x12000, scoped, tag = 'internal scratch']
  %s0 = inlined_call_operand.hbm [shape: f32[16,32], index: 0, kind: input, shape index: {}]
  %s1 = inlined_call_operand.vmem [shape: f32[2,1,8], index: 1, kind: input, shape index: {}]
  %s2 = inlined_call_operand.hbm [shape: f32[8,128], index: 2, kind: input, shape index: {}]
  %s3 = inlined_call_operand.hbm [shape: f32[2,8,128], index: 3, kind: input, shape index: {}]
  %s4 = inlined_call_operand.vmem [shape: bf16[2,32,96], index: 4, kind: input, shape index: {}]
  %s5 = inlined_call_operand.vmem [shape: bf16[2,32,32], index: 5, kind: input, shape index: {}]
  %s6 = inlined_call_operand.vmem [shape: bf16[2,32,64], index: 6, kind: input, shape index: {}]
  %s7 = inlined_call_operand.vmem [shape: bf16[2,64,32], index: 7, kind: input, shape index: {}]
  %s8 = inlined_call_operand.vmem [shape: bf16[32,32], index: 8, kind: input, shape index: {}]
  %s9 = inlined_call_operand.vmem [shape: bf16[32,128], index: 9, kind: input, shape index: {}]
  %s10 = inlined_call_operand.hbm [shape: f32[8,128], index: 10, kind: output, shape index: {}]
  %s11 = sld [smem:[#allocation0]]
  $region62: #{tpu_custom_call.1} parent=0
    _
  %s13 = ssub.s32 1, %s11
  %s14 = scalar_select 0, %s13, %s11
  $region1: #{tpu_custom_call.1} parent=0
    #allocation2 [shape = 'u8[8192]{0}', space=vmem, size = 0x2000, scoped, tag = 'input window, operand 0, single buffered']
    #allocation3 [shape = 's32[1]{0}', space=sflag, size = 0x4, scoped, tag = 'scoped memory for tpu_custom_call.1']
    #allocation4 [shape = 's32[1]{0}', space=sflag, size = 0x4, scoped, tag = 'scoped memory for tpu_custom_call.1']
    #allocation5 [shape = 'u8[4096]{0}', space=vmem, size = 0x1000, scoped, tag = 'input window, operand 2, single buffered']
    #allocation6 [shape = 's32[1]{0}', space=sflag, size = 0x4, scoped, tag = 'scoped memory for tpu_custom_call.1']
    #allocation7 [shape = 'u8[8192]{0}', space=vmem, size = 0x2000, scoped, tag = 'input window, operand 3, single buffered']
    #allocation8 [shape = 'u8[4096]{0}', space=vmem, size = 0x1000, scoped, tag = 'output window, operand 0, single buffered']
    %15 = vsyncpa [#allocation3], 0
    %16 = vsyncpa [#allocation6], 0
    %17 = vsyncpa [#allocation4], 0
    // Predicated region
    $region2: #{tpu_custom_call.1} parent=1 // pred_check
      _
    $region3: #{tpu_custom_call.1} parent=1 // pred_check_branch
      %19 = sbr.rel (0) target = $region5
    $region4: #{tpu_custom_call.1} parent=1 // pred_region
      %s21 = ssub.s32 256, 256
      %22 = vsyncadd [#allocation3], %s21
      %s23 = sshll.u32 [#allocation2], 4
      %s24 = int_to_ptr.vmem [resolvable:$true] %s23
      %29 = dma.hbm_to_vmem [thread:$0]  %s0, 256, %s24, [#allocation3], 128, 128, 8
    $region5: #{tpu_custom_call.1} parent=1 // pred_fallthru
      _
    // Predicated region
    $region6: #{tpu_custom_call.1} parent=1 // pred_check
      _
    $region7: #{tpu_custom_call.1} parent=1 // pred_check_branch
      %31 = sbr.rel (0) target = $region9
    $region8: #{tpu_custom_call.1} parent=1 // pred_region
      _
    $region9: #{tpu_custom_call.1} parent=1 // pred_fallthru
      _
    // Predicated region
    $region10: #{tpu_custom_call.1} parent=1 // pred_check
      _
    $region11: #{tpu_custom_call.1} parent=1 // pred_check_branch
      %33 = sbr.rel (0) target = $region13
    $region12: #{tpu_custom_call.1} parent=1 // pred_region
      %s35 = ssub.s32 128, 128
      %36 = vsyncadd [#allocation6], %s35
      %s38 = sshll.u32 [#allocation5], 4
      %s39 = int_to_ptr.vmem [resolvable:$true] %s38
      %41 = dma.hbm_to_vmem [thread:$0]  %s2, 128, %s39, [#allocation6]
    $region13: #{tpu_custom_call.1} parent=1 // pred_fallthru
      _
    // Predicated region
    $region14: #{tpu_custom_call.1} parent=1 // pred_check
      _
    $region15: #{tpu_custom_call.1} parent=1 // pred_check_branch
      %43 = sbr.rel (0) target = $region17
    $region16: #{tpu_custom_call.1} parent=1 // pred_region
      %s45 = ssub.s32 256, 256
      %46 = vsyncadd [#allocation6], %s45
      %s47 = sshll.u32 [#allocation7], 4
      %s48 = int_to_ptr.vmem [resolvable:$true] %s47
      %53 = dma.hbm_to_vmem [thread:$0]  %s3, 256, %s48, [#allocation6], 128, 128, 8
    $region17: #{tpu_custom_call.1} parent=1 // pred_fallthru
      _
    // Predicated region
    $region18: #{tpu_custom_call.1} parent=1 // pred_check
      _
    $region19: #{tpu_custom_call.1} parent=1 // pred_check_branch
      %55 = sbr.rel (0) target = $region21
    $region20: #{tpu_custom_call.1} parent=1 // pred_region
      _
    $region21: #{tpu_custom_call.1} parent=1 // pred_fallthru
      _
    // Predicated region
    $region22: #{tpu_custom_call.1} parent=1 // pred_check
      _
    $region23: #{tpu_custom_call.1} parent=1 // pred_check_branch
      %57 = sbr.rel (0) target = $region25
    $region24: #{tpu_custom_call.1} parent=1 // pred_region
      _
    $region25: #{tpu_custom_call.1} parent=1 // pred_fallthru
      _
    // Predicated region
    $region26: #{tpu_custom_call.1} parent=1 // pred_check
      _
    $region27: #{tpu_custom_call.1} parent=1 // pred_check_branch
      %59 = sbr.rel (0) target = $region29
    $region28: #{tpu_custom_call.1} parent=1 // pred_region
      _
    $region29: #{tpu_custom_call.1} parent=1 // pred_fallthru
      _
    // Predicated region
    $region30: #{tpu_custom_call.1} parent=1 // pred_check
      _
    $region31: #{tpu_custom_call.1} parent=1 // pred_check_branch
      %61 = sbr.rel (0) target = $region33
    $region32: #{tpu_custom_call.1} parent=1 // pred_region
      _
    $region33: #{tpu_custom_call.1} parent=1 // pred_fallthru
      _
    // Predicated region
    $region34: #{tpu_custom_call.1} parent=1 // pred_check
      _
    $region35: #{tpu_custom_call.1} parent=1 // pred_check_branch
      %63 = sbr.rel (0) target = $region37
    $region36: #{tpu_custom_call.1} parent=1 // pred_region
      _
    $region37: #{tpu_custom_call.1} parent=1 // pred_fallthru
      _
    // Predicated region
    $region38: #{tpu_custom_call.1} parent=1 // pred_check
      _
    $region39: #{tpu_custom_call.1} parent=1 // pred_check_branch
      %65 = sbr.rel (0) target = $region41
    $region40: #{tpu_custom_call.1} parent=1 // pred_region
      _
    $region41: #{tpu_custom_call.1} parent=1 // pred_fallthru
      _
    // Predicated region
    $region42: #{tpu_custom_call.1} parent=1 // pred_check
      _
    $region43: #{tpu_custom_call.1} parent=1 // pred_check_branch
      %67 = sbr.rel (0) target = $region45
    $region44: #{tpu_custom_call.1} parent=1 // pred_region
      %68 = dma.done [#allocation3], 256
    $region45: #{tpu_custom_call.1} parent=1 // pred_fallthru
      _
    // Predicated region
    $region46: #{tpu_custom_call.1} parent=1 // pred_check
      _
    $region47: #{tpu_custom_call.1} parent=1 // pred_check_branch
      %70 = sbr.rel (0) target = $region49
    $region48: #{tpu_custom_call.1} parent=1 // pred_region
      %71 = dma.done [#allocation6], 128
    $region49: #{tpu_custom_call.1} parent=1 // pred_fallthru
      _
    // Predicated region
    $region50: #{tpu_custom_call.1} parent=1 // pred_check
      _
    $region51: #{tpu_custom_call.1} parent=1 // pred_check_branch
      %73 = sbr.rel (0) target = $region53
    $region52: #{tpu_custom_call.1} parent=1 // pred_region
      %74 = dma.done [#allocation6], 256
    $region53: #{tpu_custom_call.1} parent=1 // pred_fallthru
      _
    %v76 = vld [vmem:[#allocation5] sm:$0xff]
    %v77 = vld [vmem:[#allocation2] sm:$0xff]
    %v78 = vld [vmem:[#allocation2 + $0x8] sm:$0xff]
    %vm79 = vcmask 261120
    %v80 = vsel %vm79, %v77, 0.0
    %81 = vadd.xlane.f32.xlu0 %v80
    %v82 = vpop.xlane.xlu0 %81
    %v83 = vsel %vm79, %v78, 0.0
    %84 = vadd.xlane.f32.xlu0 %v83
    %v85 = vpop.xlane.xlu0 %84
    %v86 = vrcp.pop 32.0
    %v87 = vmul.f32 %v82, %v86
    %v88 = vmul.f32 %v85, %v86
    %v89 = vsub.f32 %v77, %v87
    %v90 = vsub.f32 %v78, %v88
    %v91 = vmul.f32 %v89, %v89
    %v92 = vmul.f32 %v90, %v90
    %v93 = vsel %vm79, %v91, 0.0
    %94 = vadd.xlane.f32.xlu0 %v93
    %v95 = vpop.xlane.xlu0 %94
    %v96 = vsel %vm79, %v92, 0.0
    %97 = vadd.xlane.f32.xlu0 %v96
    %v98 = vpop.xlane.xlu0 %97
    %v99 = vmul.f32 %v95, %v86
    %v100 = vmul.f32 %v98, %v86
    %v101 = vadd.f32 %v99, 1e-12
    %v102 = vadd.f32 %v100, 1e-12
    %v103 = vrsqrt.pop %v101
    %v104 = vrsqrt.pop %v102
    %v105 = vmul.f32 %v89, %v103
    %v106 = vmul.f32 %v90, %v104
    %v107 = vlaneseq
    %v108 = vshrl.u32 %v107, 7
    %v109 = vsub.s32 0, %v108
    %v110 = vrot.slane %v76, %v109
    %v111 = vmul.f32 %v105, %v110
    %v112 = vmul.f32 %v106, %v110
    %v113 = vlaneseq
    %v114 = vshrl.u32 %v113, 7
    %v115 = vsub.s32 1, %v114
    %v116 = vrot.slane %v76, %v115
    %v117 = vadd.f32 %v111, %v116
    %v118 = vadd.f32 %v112, %v116
    %v119 = vld [vmem:[%s1] sm:$0x1]
    %v120 = vld [vmem:[%s1 + $0x1] sm:$0x1]
    %v121 = vsub.f32 %v119, 1.0
    %v122 = vsub.f32 %v120, 1.0
    %v123 = vmul.f32 %v121, 1e+09
    %v124 = vmul.f32 %v122, 1e+09
    %v127 = vlaneseq
    %v128 = vshrl.u32 %v127, 7
    %v129 = vsub.s32 0, %v128
    %v130 = vrot.slane %v123, %v129
    %v131 = vlaneseq
    %v132 = vshrl.u32 %v131, 7
    %v133 = vsub.s32 0, %v132
    %v134 = vrot.slane %v124, %v133
    %v137 = vld [vmem:[#allocation7] sm:$0xff]
    %v138 = vpack.c.bf16 %v118, %v117
    %v139 = vld [vmem:[%s4] sm:$0xf]
    %v140 = vld [vmem:[%s4 + $0x4] sm:$0xf]
    %v141 = vld [vmem:[%s4 + $0x8] sm:$0xf]
    %v142 = vld [vmem:[%s4 + $0xc] sm:$0xf]
    %v143 = vlaneseq
    %v144 = vshrl.u32 %v143, 7
    %v145 = vsub.s32 0, %v144
    %v146 = vrot.slane %v137, %v145
    %v151 = vunpack.c.l.b16 %v139
    %v152 = vunpack.c.l.b16 %v140
    %v153 = vunpack.c.l.b16 %v141
    %v154 = vunpack.c.l.b16 %v142
    %v155 = vpack.c.b16 %v152, %v151
    %v156 = vpack.c.b16 %v154, %v153
    %v160 = vsel %vm79, %v138, 0
    %162 = vmatprep.subr.bf16.mxu0 0
    %163 = vmatpush1.bf16.msra.mxu0 %v155
    %164 = vmatprep.subr.bf16.mxu0 0
    %165 = vmatpush1.bf16.msra.mxu0 %v156
    %166 = vmatprep.subr.bf16.mxu0 0
    %167 = vmatpush1.bf16.msra.mxu0 0
    %168 = vmatprep.subr.bf16.mxu0 0
    %169 = vmatpush1.bf16.msra.mxu0 0
    %170 = vmatprep.subr.bf16.mxu0 0
    %171 = vmatpush1.bf16.msra.mxu0 0
    %172 = vmatprep.subr.bf16.mxu0 0
    %173 = vmatpush1.bf16.msra.mxu0 0
    %174 = vmatprep.subr.bf16.mxu0 0
    %175 = vmatpush1.bf16.msra.mxu0 0
    %176 = vmatprep.subr.bf16.mxu0 0
    %177 = vmatpush1.bf16.msra.mxu0 0
    %178 = vmatprep.subr.bf16.mxu0 0
    %179 = vmatpush1.bf16.msra.mxu0 0
    %180 = vmatprep.subr.bf16.mxu0 0
    %181 = vmatpush1.bf16.msra.mxu0 0
    %182 = vmatprep.subr.bf16.mxu0 0
    %183 = vmatpush1.bf16.msra.mxu0 0
    %184 = vmatprep.subr.bf16.mxu0 0
    %185 = vmatpush1.bf16.msra.mxu0 0
    %186 = vmatprep.subr.bf16.mxu0 0
    %187 = vmatpush1.bf16.msra.mxu0 0
    %188 = vmatprep.subr.bf16.mxu0 0
    %189 = vmatpush1.bf16.msra.mxu0 0
    %190 = vmatprep.subr.bf16.mxu0 0
    %191 = vmatpush1.bf16.msra.mxu0 0
    %192 = vmatprep.subr.bf16.mxu0 0
    %193 = vmatpush1.bf16.msra.mxu0 0
    %194 = vmatprep.mubr.bf16.mxu0 0
    %195 = vmatmul.mubr.bf16.gmra.mrb[0].mxu0 %v160
    %v196 = vpop.f32.mrb[0].mxu0
    %v197 = vadd.f32 %v146, %v196
    %v198 = vpop.f32.mrb[0].mxu0
    %v199 = vpop.f32.mrb[0].mxu0
    %v200 = vadd.f32 %v146, %v199
    %v201 = vpop.f32.mrb[0].mxu0
    %202 = vdwg.mxu0
    %v203 = vpack.c.bf16 %v197, %v197
    %v204 = vpack.c.bf16 %v200, %v200
    %206 = vrot.lane.b32.xlu0 %v203, 96
    %v207 = vpop.permute.xlu0 %206
    %vm208 = vcmask 64512
    %v210 = vsel %vm208, %v203, 0
    %v213 = vsel %vm208, %v207, 0
    %215 = vmatprep.subr.bf16.mxu0 0
    %216 = vmatpush1.bf16.xpose.msra.mxu0 %v213
    %217 = vmatprep.subr.bf16.mxu0 0
    %218 = vmatpush1.bf16.xpose.msra.mxu0 0
    %219 = vmatprep.subr.bf16.mxu0 0
    %220 = vmatpush1.bf16.xpose.msra.mxu0 0
    %221 = vmatprep.subr.bf16.mxu0 0
    %222 = vmatpush1.bf16.xpose.msra.mxu0 0
    %223 = vmatprep.subr.bf16.mxu0 0
    %224 = vmatpush1.bf16.xpose.msra.mxu0 0
    %225 = vmatprep.subr.bf16.mxu0 0
    %226 = vmatpush1.bf16.xpose.msra.mxu0 0
    %227 = vmatprep.subr.bf16.mxu0 0
    %228 = vmatpush1.bf16.xpose.msra.mxu0 0
    %229 = vmatprep.subr.bf16.mxu0 0
    %230 = vmatpush1.bf16.xpose.msra.mxu0 0
    %231 = vmatprep.subr.bf16.mxu0 0
    %232 = vmatpush1.bf16.xpose.msra.mxu0 0
    %233 = vmatprep.subr.bf16.mxu0 0
    %234 = vmatpush1.bf16.xpose.msra.mxu0 0
    %235 = vmatprep.subr.bf16.mxu0 0
    %236 = vmatpush1.bf16.xpose.msra.mxu0 0
    %237 = vmatprep.subr.bf16.mxu0 0
    %238 = vmatpush1.bf16.xpose.msra.mxu0 0
    %239 = vmatprep.subr.bf16.mxu0 0
    %240 = vmatpush1.bf16.xpose.msra.mxu0 0
    %241 = vmatprep.subr.bf16.mxu0 0
    %242 = vmatpush1.bf16.xpose.msra.mxu0 0
    %243 = vmatprep.subr.bf16.mxu0 0
    %244 = vmatpush1.bf16.xpose.msra.mxu0 0
    %245 = vmatprep.subr.bf16.mxu0 0
    %246 = vmatpush1.bf16.xpose.msra.mxu0 0
    %247 = vmatprep.mubr.bf16.mxu0 0
    %248 = vmatmul.mubr.bf16.gmra.mrb[0].mxu0 %v210
    %v249 = vpop.f32.mrb[0].mxu0
    %v250 = vadd.f32 %v130, %v249
    %v251 = vpop.f32.mrb[0].mxu0
    %v252 = vpop.f32.mrb[0].mxu0
    %v253 = vpop.f32.mrb[0].mxu0
    %254 = vdwg.mxu0
    %256 = vrot.lane.b32.xlu0 %v204, 96
    %v257 = vpop.permute.xlu0 %256
    %v259 = vsel %vm208, %v204, 0
    %v262 = vsel %vm208, %v257, 0
    %264 = vmatprep.subr.bf16.mxu0 0
    %265 = vmatpush1.bf16.xpose.msra.mxu0 %v262
    %266 = vmatprep.subr.bf16.mxu0 0
    %267 = vmatpush1.bf16.xpose.msra.mxu0 0
    %268 = vmatprep.subr.bf16.mxu0 0
    %269 = vmatpush1.bf16.xpose.msra.mxu0 0
    %270 = vmatprep.subr.bf16.mxu0 0
    %271 = vmatpush1.bf16.xpose.msra.mxu0 0
    %272 = vmatprep.subr.bf16.mxu0 0
    %273 = vmatpush1.bf16.xpose.msra.mxu0 0
    %274 = vmatprep.subr.bf16.mxu0 0
    %275 = vmatpush1.bf16.xpose.msra.mxu0 0
    %276 = vmatprep.subr.bf16.mxu0 0
    %277 = vmatpush1.bf16.xpose.msra.mxu0 0
    %278 = vmatprep.subr.bf16.mxu0 0
    %279 = vmatpush1.bf16.xpose.msra.mxu0 0
    %280 = vmatprep.subr.bf16.mxu0 0
    %281 = vmatpush1.bf16.xpose.msra.mxu0 0
    %282 = vmatprep.subr.bf16.mxu0 0
    %283 = vmatpush1.bf16.xpose.msra.mxu0 0
    %284 = vmatprep.subr.bf16.mxu0 0
    %285 = vmatpush1.bf16.xpose.msra.mxu0 0
    %286 = vmatprep.subr.bf16.mxu0 0
    %287 = vmatpush1.bf16.xpose.msra.mxu0 0
    %288 = vmatprep.subr.bf16.mxu0 0
    %289 = vmatpush1.bf16.xpose.msra.mxu0 0
    %290 = vmatprep.subr.bf16.mxu0 0
    %291 = vmatpush1.bf16.xpose.msra.mxu0 0
    %292 = vmatprep.subr.bf16.mxu0 0
    %293 = vmatpush1.bf16.xpose.msra.mxu0 0
    %294 = vmatprep.subr.bf16.mxu0 0
    %295 = vmatpush1.bf16.xpose.msra.mxu0 0
    %296 = vmatprep.mubr.bf16.mxu0 0
    %297 = vmatmul.mubr.bf16.gmra.mrb[0].mxu0 %v259
    %v298 = vpop.f32.mrb[0].mxu0
    %v299 = vadd.f32 %v134, %v298
    %v300 = vpop.f32.mrb[0].mxu0
    %v301 = vpop.f32.mrb[0].mxu0
    %v302 = vpop.f32.mrb[0].mxu0
    %303 = vdwg.mxu0
    %v304 = vsel %vm208, %v250, -inf
    %305 = vmax.xlane.f32.xlu0 %v304
    %v306 = vpop.xlane.xlu0 %305
    %v307 = vsel %vm208, %v299, -inf
    %308 = vmax.xlane.f32.xlu0 %v307
    %v309 = vpop.xlane.xlu0 %308
    %v310 = vsub.f32 %v250, %v306
    %v311 = vsub.f32 %v299, %v309
    %v312 = vmul.f32 %v310, 1.442695
    %v313 = vpow.pop %v312
    %v314 = vmul.f32 %v311, 1.442695
    %v315 = vpow.pop %v314
    %v316 = vsel %vm208, %v313, 0.0
    %317 = vadd.xlane.f32.xlu0 %v316
    %v318 = vpop.xlane.xlu0 %317
    %v319 = vsel %vm208, %v315, 0.0
    %320 = vadd.xlane.f32.xlu0 %v319
    %v321 = vpop.xlane.xlu0 %320
    %v322 = vrcp.pop %v318
    %v323 = vrcp.pop %v321
    %v324 = vmul.f32 %v313, %v322
    %v325 = vmul.f32 %v315, %v323
    %v326 = vpack.c.bf16 %v324, %v324
    %v327 = vpack.c.bf16 %v325, %v325
    %328 = vrot.lane.b32.xlu0 %v203, 64
    %v329 = vpop.permute.xlu0 %328
    %v331 = vsel %vm208, %v326, 0
    %vm333 = vcmask 1043456
    %v335 = vsel %vm333, %v329, 0
    %337 = vmatprep.subr.bf16.mxu0 0
    %338 = vmatpush1.bf16.msra.mxu0 %v335
    %339 = vmatprep.subr.bf16.mxu0 0
    %340 = vmatpush1.bf16.msra.mxu0 0
    %341 = vmatprep.subr.bf16.mxu0 0
    %342 = vmatpush1.bf16.msra.mxu0 0
    %343 = vmatprep.subr.bf16.mxu0 0
    %344 = vmatpush1.bf16.msra.mxu0 0
    %345 = vmatprep.subr.bf16.mxu0 0
    %346 = vmatpush1.bf16.msra.mxu0 0
    %347 = vmatprep.subr.bf16.mxu0 0
    %348 = vmatpush1.bf16.msra.mxu0 0
    %349 = vmatprep.subr.bf16.mxu0 0
    %350 = vmatpush1.bf16.msra.mxu0 0
    %351 = vmatprep.subr.bf16.mxu0 0
    %352 = vmatpush1.bf16.msra.mxu0 0
    %353 = vmatprep.subr.bf16.mxu0 0
    %354 = vmatpush1.bf16.msra.mxu0 0
    %355 = vmatprep.subr.bf16.mxu0 0
    %356 = vmatpush1.bf16.msra.mxu0 0
    %357 = vmatprep.subr.bf16.mxu0 0
    %358 = vmatpush1.bf16.msra.mxu0 0
    %359 = vmatprep.subr.bf16.mxu0 0
    %360 = vmatpush1.bf16.msra.mxu0 0
    %361 = vmatprep.subr.bf16.mxu0 0
    %362 = vmatpush1.bf16.msra.mxu0 0
    %363 = vmatprep.subr.bf16.mxu0 0
    %364 = vmatpush1.bf16.msra.mxu0 0
    %365 = vmatprep.subr.bf16.mxu0 0
    %366 = vmatpush1.bf16.msra.mxu0 0
    %367 = vmatprep.subr.bf16.mxu0 0
    %368 = vmatpush1.bf16.msra.mxu0 0
    %369 = vmatprep.mubr.bf16.mxu0 0
    %370 = vmatmul.mubr.bf16.gmra.mrb[0].mxu0 %v331
    %v371 = vpop.f32.mrb[0].mxu0
    %v372 = vadd.f32 0.0, %v371
    %v373 = vpop.f32.mrb[0].mxu0
    %v374 = vpop.f32.mrb[0].mxu0
    %v375 = vpop.f32.mrb[0].mxu0
    %376 = vdwg.mxu0
    %377 = vrot.lane.b32.xlu0 %v204, 64
    %v378 = vpop.permute.xlu0 %377
    %v380 = vsel %vm208, %v327, 0
    %v383 = vsel %vm333, %v378, 0
    %385 = vmatprep.subr.bf16.mxu0 0
    %386 = vmatpush1.bf16.msra.mxu0 %v383
    %387 = vmatprep.subr.bf16.mxu0 0
    %388 = vmatpush1.bf16.msra.mxu0 0
    %389 = vmatprep.subr.bf16.mxu0 0
    %390 = vmatpush1.bf16.msra.mxu0 0
    %391 = vmatprep.subr.bf16.mxu0 0
    %392 = vmatpush1.bf16.msra.mxu0 0
    %393 = vmatprep.subr.bf16.mxu0 0
    %394 = vmatpush1.bf16.msra.mxu0 0
    %395 = vmatprep.subr.bf16.mxu0 0
    %396 = vmatpush1.bf16.msra.mxu0 0
    %397 = vmatprep.subr.bf16.mxu0 0
    %398 = vmatpush1.bf16.msra.mxu0 0
    %399 = vmatprep.subr.bf16.mxu0 0
    %400 = vmatpush1.bf16.msra.mxu0 0
    %401 = vmatprep.subr.bf16.mxu0 0
    %402 = vmatpush1.bf16.msra.mxu0 0
    %403 = vmatprep.subr.bf16.mxu0 0
    %404 = vmatpush1.bf16.msra.mxu0 0
    %405 = vmatprep.subr.bf16.mxu0 0
    %406 = vmatpush1.bf16.msra.mxu0 0
    %407 = vmatprep.subr.bf16.mxu0 0
    %408 = vmatpush1.bf16.msra.mxu0 0
    %409 = vmatprep.subr.bf16.mxu0 0
    %410 = vmatpush1.bf16.msra.mxu0 0
    %411 = vmatprep.subr.bf16.mxu0 0
    %412 = vmatpush1.bf16.msra.mxu0 0
    %413 = vmatprep.subr.bf16.mxu0 0
    %414 = vmatpush1.bf16.msra.mxu0 0
    %415 = vmatprep.subr.bf16.mxu0 0
    %416 = vmatpush1.bf16.msra.mxu0 0
    %417 = vmatprep.mubr.bf16.mxu0 0
    %418 = vmatmul.mubr.bf16.gmra.mrb[0].mxu0 %v380
    %v419 = vpop.f32.mrb[0].mxu0
    %v420 = vadd.f32 0.0, %v419
    %v421 = vpop.f32.mrb[0].mxu0
    %v422 = vpop.f32.mrb[0].mxu0
    %v423 = vpop.f32.mrb[0].mxu0
    %424 = vdwg.mxu0
    %425 = vrot.lane.b32.xlu0 %v203, 120
    %v426 = vpop.permute.xlu0 %425
    %427 = vrot.lane.b32.xlu0 %v203, 88
    %v428 = vpop.permute.xlu0 %427
    %v430 = vsel %vm208, %v426, 0
    %v433 = vsel %vm208, %v428, 0
    %435 = vmatprep.subr.bf16.mxu0 0
    %436 = vmatpush1.bf16.xpose.msra.mxu0 %v433
    %437 = vmatprep.subr.bf16.mxu0 0
    %438 = vmatpush1.bf16.xpose.msra.mxu0 0
    %439 = vmatprep.subr.bf16.mxu0 0
    %440 = vmatpush1.bf16.xpose.msra.mxu0 0
    %441 = vmatprep.subr.bf16.mxu0 0
    %442 = vmatpush1.bf16.xpose.msra.mxu0 0
    %443 = vmatprep.subr.bf16.mxu0 0
    %444 = vmatpush1.bf16.xpose.msra.mxu0 0
    %445 = vmatprep.subr.bf16.mxu0 0
    %446 = vmatpush1.bf16.xpose.msra.mxu0 0
    %447 = vmatprep.subr.bf16.mxu0 0
    %448 = vmatpush1.bf16.xpose.msra.mxu0 0
    %449 = vmatprep.subr.bf16.mxu0 0
    %450 = vmatpush1.bf16.xpose.msra.mxu0 0
    %451 = vmatprep.subr.bf16.mxu0 0
    %452 = vmatpush1.bf16.xpose.msra.mxu0 0
    %453 = vmatprep.subr.bf16.mxu0 0
    %454 = vmatpush1.bf16.xpose.msra.mxu0 0
    %455 = vmatprep.subr.bf16.mxu0 0
    %456 = vmatpush1.bf16.xpose.msra.mxu0 0
    %457 = vmatprep.subr.bf16.mxu0 0
    %458 = vmatpush1.bf16.xpose.msra.mxu0 0
    %459 = vmatprep.subr.bf16.mxu0 0
    %460 = vmatpush1.bf16.xpose.msra.mxu0 0
    %461 = vmatprep.subr.bf16.mxu0 0
    %462 = vmatpush1.bf16.xpose.msra.mxu0 0
    %463 = vmatprep.subr.bf16.mxu0 0
    %464 = vmatpush1.bf16.xpose.msra.mxu0 0
    %465 = vmatprep.subr.bf16.mxu0 0
    %466 = vmatpush1.bf16.xpose.msra.mxu0 0
    %467 = vmatprep.mubr.bf16.mxu0 0
    %468 = vmatmul.mubr.bf16.gmra.mrb[0].mxu0 %v430
    %v469 = vpop.f32.mrb[0].mxu0
    %v470 = vadd.f32 %v130, %v469
    %v471 = vpop.f32.mrb[0].mxu0
    %v472 = vpop.f32.mrb[0].mxu0
    %v473 = vpop.f32.mrb[0].mxu0
    %474 = vdwg.mxu0
    %475 = vrot.lane.b32.xlu0 %v204, 120
    %v476 = vpop.permute.xlu0 %475
    %477 = vrot.lane.b32.xlu0 %v204, 88
    %v478 = vpop.permute.xlu0 %477
    %v480 = vsel %vm208, %v476, 0
    %v483 = vsel %vm208, %v478, 0
    %485 = vmatprep.subr.bf16.mxu0 0
    %486 = vmatpush1.bf16.xpose.msra.mxu0 %v483
    %487 = vmatprep.subr.bf16.mxu0 0
    %488 = vmatpush1.bf16.xpose.msra.mxu0 0
    %489 = vmatprep.subr.bf16.mxu0 0
    %490 = vmatpush1.bf16.xpose.msra.mxu0 0
    %491 = vmatprep.subr.bf16.mxu0 0
    %492 = vmatpush1.bf16.xpose.msra.mxu0 0
    %493 = vmatprep.subr.bf16.mxu0 0
    %494 = vmatpush1.bf16.xpose.msra.mxu0 0
    %495 = vmatprep.subr.bf16.mxu0 0
    %496 = vmatpush1.bf16.xpose.msra.mxu0 0
    %497 = vmatprep.subr.bf16.mxu0 0
    %498 = vmatpush1.bf16.xpose.msra.mxu0 0
    %499 = vmatprep.subr.bf16.mxu0 0
    %500 = vmatpush1.bf16.xpose.msra.mxu0 0
    %501 = vmatprep.subr.bf16.mxu0 0
    %502 = vmatpush1.bf16.xpose.msra.mxu0 0
    %503 = vmatprep.subr.bf16.mxu0 0
    %504 = vmatpush1.bf16.xpose.msra.mxu0 0
    %505 = vmatprep.subr.bf16.mxu0 0
    %506 = vmatpush1.bf16.xpose.msra.mxu0 0
    %507 = vmatprep.subr.bf16.mxu0 0
    %508 = vmatpush1.bf16.xpose.msra.mxu0 0
    %509 = vmatprep.subr.bf16.mxu0 0
    %510 = vmatpush1.bf16.xpose.msra.mxu0 0
    %511 = vmatprep.subr.bf16.mxu0 0
    %512 = vmatpush1.bf16.xpose.msra.mxu0 0
    %513 = vmatprep.subr.bf16.mxu0 0
    %514 = vmatpush1.bf16.xpose.msra.mxu0 0
    %515 = vmatprep.subr.bf16.mxu0 0
    %516 = vmatpush1.bf16.xpose.msra.mxu0 0
    %517 = vmatprep.mubr.bf16.mxu0 0
    %518 = vmatmul.mubr.bf16.gmra.mrb[0].mxu0 %v480
    %v519 = vpop.f32.mrb[0].mxu0
    %v520 = vadd.f32 %v134, %v519
    %v521 = vpop.f32.mrb[0].mxu0
    %v522 = vpop.f32.mrb[0].mxu0
    %v523 = vpop.f32.mrb[0].mxu0
    %524 = vdwg.mxu0
    %v525 = vsel %vm208, %v470, -inf
    %526 = vmax.xlane.f32.xlu0 %v525
    %v527 = vpop.xlane.xlu0 %526
    %v528 = vsel %vm208, %v520, -inf
    %529 = vmax.xlane.f32.xlu0 %v528
    %v530 = vpop.xlane.xlu0 %529
    %v531 = vsub.f32 %v470, %v527
    %v532 = vsub.f32 %v520, %v530
    %v533 = vmul.f32 %v531, 1.442695
    %v534 = vpow.pop %v533
    %v535 = vmul.f32 %v532, 1.442695
    %v536 = vpow.pop %v535
    %v537 = vsel %vm208, %v534, 0.0
    %538 = vadd.xlane.f32.xlu0 %v537
    %v539 = vpop.xlane.xlu0 %538
    %v540 = vsel %vm208, %v536, 0.0
    %541 = vadd.xlane.f32.xlu0 %v540
    %v542 = vpop.xlane.xlu0 %541
    %v543 = vrcp.pop %v539
    %v544 = vrcp.pop %v542
    %v545 = vmul.f32 %v534, %v543
    %v546 = vmul.f32 %v536, %v544
    %v547 = vpack.c.bf16 %v545, %v545
    %v548 = vpack.c.bf16 %v546, %v546
    %549 = vrot.lane.b32.xlu0 %v203, 56
    %v550 = vpop.permute.xlu0 %549
    %v552 = vsel %vm208, %v547, 0
    %v555 = vsel %vm333, %v550, 0
    %557 = vmatprep.subr.bf16.mxu0 0
    %558 = vmatpush1.bf16.msra.mxu0 %v555
    %559 = vmatprep.subr.bf16.mxu0 0
    %560 = vmatpush1.bf16.msra.mxu0 0
    %561 = vmatprep.subr.bf16.mxu0 0
    %562 = vmatpush1.bf16.msra.mxu0 0
    %563 = vmatprep.subr.bf16.mxu0 0
    %564 = vmatpush1.bf16.msra.mxu0 0
    %565 = vmatprep.subr.bf16.mxu0 0
    %566 = vmatpush1.bf16.msra.mxu0 0
    %567 = vmatprep.subr.bf16.mxu0 0
    %568 = vmatpush1.bf16.msra.mxu0 0
    %569 = vmatprep.subr.bf16.mxu0 0
    %570 = vmatpush1.bf16.msra.mxu0 0
    %571 = vmatprep.subr.bf16.mxu0 0
    %572 = vmatpush1.bf16.msra.mxu0 0
    %573 = vmatprep.subr.bf16.mxu0 0
    %574 = vmatpush1.bf16.msra.mxu0 0
    %575 = vmatprep.subr.bf16.mxu0 0
    %576 = vmatpush1.bf16.msra.mxu0 0
    %577 = vmatprep.subr.bf16.mxu0 0
    %578 = vmatpush1.bf16.msra.mxu0 0
    %579 = vmatprep.subr.bf16.mxu0 0
    %580 = vmatpush1.bf16.msra.mxu0 0
    %581 = vmatprep.subr.bf16.mxu0 0
    %582 = vmatpush1.bf16.msra.mxu0 0
    %583 = vmatprep.subr.bf16.mxu0 0
    %584 = vmatpush1.bf16.msra.mxu0 0
    %585 = vmatprep.subr.bf16.mxu0 0
    %586 = vmatpush1.bf16.msra.mxu0 0
    %587 = vmatprep.subr.bf16.mxu0 0
    %588 = vmatpush1.bf16.msra.mxu0 0
    %589 = vmatprep.mubr.bf16.mxu0 0
    %590 = vmatmul.mubr.bf16.gmra.mrb[0].mxu0 %v552
    %v591 = vpop.f32.mrb[0].mxu0
    %v592 = vadd.f32 0.0, %v591
    %v593 = vpop.f32.mrb[0].mxu0
    %v594 = vpop.f32.mrb[0].mxu0
    %v595 = vpop.f32.mrb[0].mxu0
    %596 = vdwg.mxu0
    %597 = vrot.lane.b32.xlu0 %v204, 56
    %v598 = vpop.permute.xlu0 %597
    %v600 = vsel %vm208, %v548, 0
    %v603 = vsel %vm333, %v598, 0
    %605 = vmatprep.subr.bf16.mxu0 0
    %606 = vmatpush1.bf16.msra.mxu0 %v603
    %607 = vmatprep.subr.bf16.mxu0 0
    %608 = vmatpush1.bf16.msra.mxu0 0
    %609 = vmatprep.subr.bf16.mxu0 0
    %610 = vmatpush1.bf16.msra.mxu0 0
    %611 = vmatprep.subr.bf16.mxu0 0
    %612 = vmatpush1.bf16.msra.mxu0 0
    %613 = vmatprep.subr.bf16.mxu0 0
    %614 = vmatpush1.bf16.msra.mxu0 0
    %615 = vmatprep.subr.bf16.mxu0 0
    %616 = vmatpush1.bf16.msra.mxu0 0
    %617 = vmatprep.subr.bf16.mxu0 0
    %618 = vmatpush1.bf16.msra.mxu0 0
    %619 = vmatprep.subr.bf16.mxu0 0
    %620 = vmatpush1.bf16.msra.mxu0 0
    %621 = vmatprep.subr.bf16.mxu0 0
    %622 = vmatpush1.bf16.msra.mxu0 0
    %623 = vmatprep.subr.bf16.mxu0 0
    %624 = vmatpush1.bf16.msra.mxu0 0
    %625 = vmatprep.subr.bf16.mxu0 0
    %626 = vmatpush1.bf16.msra.mxu0 0
    %627 = vmatprep.subr.bf16.mxu0 0
    %628 = vmatpush1.bf16.msra.mxu0 0
    %629 = vmatprep.subr.bf16.mxu0 0
    %630 = vmatpush1.bf16.msra.mxu0 0
    %631 = vmatprep.subr.bf16.mxu0 0
    %632 = vmatpush1.bf16.msra.mxu0 0
    %633 = vmatprep.subr.bf16.mxu0 0
    %634 = vmatpush1.bf16.msra.mxu0 0
    %635 = vmatprep.subr.bf16.mxu0 0
    %636 = vmatpush1.bf16.msra.mxu0 0
    %637 = vmatprep.mubr.bf16.mxu0 0
    %638 = vmatmul.mubr.bf16.gmra.mrb[0].mxu0 %v600
    %v639 = vpop.f32.mrb[0].mxu0
    %v640 = vadd.f32 0.0, %v639
    %v641 = vpop.f32.mrb[0].mxu0
    %v642 = vpop.f32.mrb[0].mxu0
    %v643 = vpop.f32.mrb[0].mxu0
    %644 = vdwg.mxu0
    %645 = vrot.lane.b32.xlu0 %v203, 112
    %v646 = vpop.permute.xlu0 %645
    %647 = vrot.lane.b32.xlu0 %v203, 80
    %v648 = vpop.permute.xlu0 %647
    %v650 = vsel %vm208, %v646, 0
    %v653 = vsel %vm208, %v648, 0
    %655 = vmatprep.subr.bf16.mxu0 0
    %656 = vmatpush1.bf16.xpose.msra.mxu0 %v653
    %657 = vmatprep.subr.bf16.mxu0 0
    %658 = vmatpush1.bf16.xpose.msra.mxu0 0
    %659 = vmatprep.subr.bf16.mxu0 0
    %660 = vmatpush1.bf16.xpose.msra.mxu0 0
    %661 = vmatprep.subr.bf16.mxu0 0
    %662 = vmatpush1.bf16.xpose.msra.mxu0 0
    %663 = vmatprep.subr.bf16.mxu0 0
    %664 = vmatpush1.bf16.xpose.msra.mxu0 0
    %665 = vmatprep.subr.bf16.mxu0 0
    %666 = vmatpush1.bf16.xpose.msra.mxu0 0
    %667 = vmatprep.subr.bf16.mxu0 0
    %668 = vmatpush1.bf16.xpose.msra.mxu0 0
    %669 = vmatprep.subr.bf16.mxu0 0
    %670 = vmatpush1.bf16.xpose.msra.mxu0 0
    %671 = vmatprep.subr.bf16.mxu0 0
    %672 = vmatpush1.bf16.xpose.msra.mxu0 0
    %673 = vmatprep.subr.bf16.mxu0 0
    %674 = vmatpush1.bf16.xpose.msra.mxu0 0
    %675 = vmatprep.subr.bf16.mxu0 0
    %676 = vmatpush1.bf16.xpose.msra.mxu0 0
    %677 = vmatprep.subr.bf16.mxu0 0
    %678 = vmatpush1.bf16.xpose.msra.mxu0 0
    %679 = vmatprep.subr.bf16.mxu0 0
    %680 = vmatpush1.bf16.xpose.msra.mxu0 0
    %681 = vmatprep.subr.bf16.mxu0 0
    %682 = vmatpush1.bf16.xpose.msra.mxu0 0
    %683 = vmatprep.subr.bf16.mxu0 0
    %684 = vmatpush1.bf16.xpose.msra.mxu0 0
    %685 = vmatprep.subr.bf16.mxu0 0
    %686 = vmatpush1.bf16.xpose.msra.mxu0 0
    %687 = vmatprep.mubr.bf16.mxu0 0
    %688 = vmatmul.mubr.bf16.gmra.mrb[0].mxu0 %v650
    %v689 = vpop.f32.mrb[0].mxu0
    %v690 = vadd.f32 %v130, %v689
    %v691 = vpop.f32.mrb[0].mxu0
    %v692 = vpop.f32.mrb[0].mxu0
    %v693 = vpop.f32.mrb[0].mxu0
    %694 = vdwg.mxu0
    %695 = vrot.lane.b32.xlu0 %v204, 112
    %v696 = vpop.permute.xlu0 %695
    %697 = vrot.lane.b32.xlu0 %v204, 80
    %v698 = vpop.permute.xlu0 %697
    %v700 = vsel %vm208, %v696, 0
    %v703 = vsel %vm208, %v698, 0
    %705 = vmatprep.subr.bf16.mxu0 0
    %706 = vmatpush1.bf16.xpose.msra.mxu0 %v703
    %707 = vmatprep.subr.bf16.mxu0 0
    %708 = vmatpush1.bf16.xpose.msra.mxu0 0
    %709 = vmatprep.subr.bf16.mxu0 0
    %710 = vmatpush1.bf16.xpose.msra.mxu0 0
    %711 = vmatprep.subr.bf16.mxu0 0
    %712 = vmatpush1.bf16.xpose.msra.mxu0 0
    %713 = vmatprep.subr.bf16.mxu0 0
    %714 = vmatpush1.bf16.xpose.msra.mxu0 0
    %715 = vmatprep.subr.bf16.mxu0 0
    %716 = vmatpush1.bf16.xpose.msra.mxu0 0
    %717 = vmatprep.subr.bf16.mxu0 0
    %718 = vmatpush1.bf16.xpose.msra.mxu0 0
    %719 = vmatprep.subr.bf16.mxu0 0
    %720 = vmatpush1.bf16.xpose.msra.mxu0 0
    %721 = vmatprep.subr.bf16.mxu0 0
    %722 = vmatpush1.bf16.xpose.msra.mxu0 0
    %723 = vmatprep.subr.bf16.mxu0 0
    %724 = vmatpush1.bf16.xpose.msra.mxu0 0
    %725 = vmatprep.subr.bf16.mxu0 0
    %726 = vmatpush1.bf16.xpose.msra.mxu0 0
    %727 = vmatprep.subr.bf16.mxu0 0
    %728 = vmatpush1.bf16.xpose.msra.mxu0 0
    %729 = vmatprep.subr.bf16.mxu0 0
    %730 = vmatpush1.bf16.xpose.msra.mxu0 0
    %731 = vmatprep.subr.bf16.mxu0 0
    %732 = vmatpush1.bf16.xpose.msra.mxu0 0
    %733 = vmatprep.subr.bf16.mxu0 0
    %734 = vmatpush1.bf16.xpose.msra.mxu0 0
    %735 = vmatprep.subr.bf16.mxu0 0
    %736 = vmatpush1.bf16.xpose.msra.mxu0 0
    %737 = vmatprep.mubr.bf16.mxu0 0
    %738 = vmatmul.mubr.bf16.gmra.mrb[0].mxu0 %v700
    %v739 = vpop.f32.mrb[0].mxu0
    %v740 = vadd.f32 %v134, %v739
    %v741 = vpop.f32.mrb[0].mxu0
    %v742 = vpop.f32.mrb[0].mxu0
    %v743 = vpop.f32.mrb[0].mxu0
    %744 = vdwg.mxu0
    %v745 = vsel %vm208, %v690, -inf
    %746 = vmax.xlane.f32.xlu0 %v745
    %v747 = vpop.xlane.xlu0 %746
    %v748 = vsel %vm208, %v740, -inf
    %749 = vmax.xlane.f32.xlu0 %v748
    %v750 = vpop.xlane.xlu0 %749
    %v751 = vsub.f32 %v690, %v747
    %v752 = vsub.f32 %v740, %v750
    %v753 = vmul.f32 %v751, 1.442695
    %v754 = vpow.pop %v753
    %v755 = vmul.f32 %v752, 1.442695
    %v756 = vpow.pop %v755
    %v757 = vsel %vm208, %v754, 0.0
    %758 = vadd.xlane.f32.xlu0 %v757
    %v759 = vpop.xlane.xlu0 %758
    %v760 = vsel %vm208, %v756, 0.0
    %761 = vadd.xlane.f32.xlu0 %v760
    %v762 = vpop.xlane.xlu0 %761
    %v763 = vrcp.pop %v759
    %v764 = vrcp.pop %v762
    %v765 = vmul.f32 %v754, %v763
    %v766 = vmul.f32 %v756, %v764
    %v767 = vpack.c.bf16 %v765, %v765
    %v768 = vpack.c.bf16 %v766, %v766
    %769 = vrot.lane.b32.xlu0 %v203, 48
    %v770 = vpop.permute.xlu0 %769
    %v772 = vsel %vm208, %v767, 0
    %v775 = vsel %vm333, %v770, 0
    %777 = vmatprep.subr.bf16.mxu0 0
    %778 = vmatpush1.bf16.msra.mxu0 %v775
    %779 = vmatprep.subr.bf16.mxu0 0
    %780 = vmatpush1.bf16.msra.mxu0 0
    %781 = vmatprep.subr.bf16.mxu0 0
    %782 = vmatpush1.bf16.msra.mxu0 0
    %783 = vmatprep.subr.bf16.mxu0 0
    %784 = vmatpush1.bf16.msra.mxu0 0
    %785 = vmatprep.subr.bf16.mxu0 0
    %786 = vmatpush1.bf16.msra.mxu0 0
    %787 = vmatprep.subr.bf16.mxu0 0
    %788 = vmatpush1.bf16.msra.mxu0 0
    %789 = vmatprep.subr.bf16.mxu0 0
    %790 = vmatpush1.bf16.msra.mxu0 0
    %791 = vmatprep.subr.bf16.mxu0 0
    %792 = vmatpush1.bf16.msra.mxu0 0
    %793 = vmatprep.subr.bf16.mxu0 0
    %794 = vmatpush1.bf16.msra.mxu0 0
    %795 = vmatprep.subr.bf16.mxu0 0
    %796 = vmatpush1.bf16.msra.mxu0 0
    %797 = vmatprep.subr.bf16.mxu0 0
    %798 = vmatpush1.bf16.msra.mxu0 0
    %799 = vmatprep.subr.bf16.mxu0 0
    %800 = vmatpush1.bf16.msra.mxu0 0
    %801 = vmatprep.subr.bf16.mxu0 0
    %802 = vmatpush1.bf16.msra.mxu0 0
    %803 = vmatprep.subr.bf16.mxu0 0
    %804 = vmatpush1.bf16.msra.mxu0 0
    %805 = vmatprep.subr.bf16.mxu0 0
    %806 = vmatpush1.bf16.msra.mxu0 0
    %807 = vmatprep.subr.bf16.mxu0 0
    %808 = vmatpush1.bf16.msra.mxu0 0
    %809 = vmatprep.mubr.bf16.mxu0 0
    %810 = vmatmul.mubr.bf16.gmra.mrb[0].mxu0 %v772
    %v811 = vpop.f32.mrb[0].mxu0
    %v812 = vadd.f32 0.0, %v811
    %v813 = vpop.f32.mrb[0].mxu0
    %v814 = vpop.f32.mrb[0].mxu0
    %v815 = vpop.f32.mrb[0].mxu0
    %816 = vdwg.mxu0
    %817 = vrot.lane.b32.xlu0 %v204, 48
    %v818 = vpop.permute.xlu0 %817
    %v820 = vsel %vm208, %v768, 0
    %v823 = vsel %vm333, %v818, 0
    %825 = vmatprep.subr.bf16.mxu0 0
    %826 = vmatpush1.bf16.msra.mxu0 %v823
    %827 = vmatprep.subr.bf16.mxu0 0
    %828 = vmatpush1.bf16.msra.mxu0 0
    %829 = vmatprep.subr.bf16.mxu0 0
    %830 = vmatpush1.bf16.msra.mxu0 0
    %831 = vmatprep.subr.bf16.mxu0 0
    %832 = vmatpush1.bf16.msra.mxu0 0
    %833 = vmatprep.subr.bf16.mxu0 0
    %834 = vmatpush1.bf16.msra.mxu0 0
    %835 = vmatprep.subr.bf16.mxu0 0
    %836 = vmatpush1.bf16.msra.mxu0 0
    %837 = vmatprep.subr.bf16.mxu0 0
    %838 = vmatpush1.bf16.msra.mxu0 0
    %839 = vmatprep.subr.bf16.mxu0 0
    %840 = vmatpush1.bf16.msra.mxu0 0
    %841 = vmatprep.subr.bf16.mxu0 0
    %842 = vmatpush1.bf16.msra.mxu0 0
    %843 = vmatprep.subr.bf16.mxu0 0
    %844 = vmatpush1.bf16.msra.mxu0 0
    %845 = vmatprep.subr.bf16.mxu0 0
    %846 = vmatpush1.bf16.msra.mxu0 0
    %847 = vmatprep.subr.bf16.mxu0 0
    %848 = vmatpush1.bf16.msra.mxu0 0
    %849 = vmatprep.subr.bf16.mxu0 0
    %850 = vmatpush1.bf16.msra.mxu0 0
    %851 = vmatprep.subr.bf16.mxu0 0
    %852 = vmatpush1.bf16.msra.mxu0 0
    %853 = vmatprep.subr.bf16.mxu0 0
    %854 = vmatpush1.bf16.msra.mxu0 0
    %855 = vmatprep.subr.bf16.mxu0 0
    %856 = vmatpush1.bf16.msra.mxu0 0
    %857 = vmatprep.mubr.bf16.mxu0 0
    %858 = vmatmul.mubr.bf16.gmra.mrb[0].mxu0 %v820
    %v859 = vpop.f32.mrb[0].mxu0
    %v860 = vadd.f32 0.0, %v859
    %v861 = vpop.f32.mrb[0].mxu0
    %v862 = vpop.f32.mrb[0].mxu0
    %v863 = vpop.f32.mrb[0].mxu0
    %864 = vdwg.mxu0
    %865 = vrot.lane.b32.xlu0 %v203, 104
    %v866 = vpop.permute.xlu0 %865
    %867 = vrot.lane.b32.xlu0 %v203, 72
    %v868 = vpop.permute.xlu0 %867
    %v870 = vsel %vm208, %v866, 0
    %v873 = vsel %vm208, %v868, 0
    %875 = vmatprep.subr.bf16.mxu0 0
    %876 = vmatpush1.bf16.xpose.msra.mxu0 %v873
    %877 = vmatprep.subr.bf16.mxu0 0
    %878 = vmatpush1.bf16.xpose.msra.mxu0 0
    %879 = vmatprep.subr.bf16.mxu0 0
    %880 = vmatpush1.bf16.xpose.msra.mxu0 0
    %881 = vmatprep.subr.bf16.mxu0 0
    %882 = vmatpush1.bf16.xpose.msra.mxu0 0
    %883 = vmatprep.subr.bf16.mxu0 0
    %884 = vmatpush1.bf16.xpose.msra.mxu0 0
    %885 = vmatprep.subr.bf16.mxu0 0
    %886 = vmatpush1.bf16.xpose.msra.mxu0 0
    %887 = vmatprep.subr.bf16.mxu0 0
    %888 = vmatpush1.bf16.xpose.msra.mxu0 0
    %889 = vmatprep.subr.bf16.mxu0 0
    %890 = vmatpush1.bf16.xpose.msra.mxu0 0
    %891 = vmatprep.subr.bf16.mxu0 0
    %892 = vmatpush1.bf16.xpose.msra.mxu0 0
    %893 = vmatprep.subr.bf16.mxu0 0
    %894 = vmatpush1.bf16.xpose.msra.mxu0 0
    %895 = vmatprep.subr.bf16.mxu0 0
    %896 = vmatpush1.bf16.xpose.msra.mxu0 0
    %897 = vmatprep.subr.bf16.mxu0 0
    %898 = vmatpush1.bf16.xpose.msra.mxu0 0
    %899 = vmatprep.subr.bf16.mxu0 0
    %900 = vmatpush1.bf16.xpose.msra.mxu0 0
    %901 = vmatprep.subr.bf16.mxu0 0
    %902 = vmatpush1.bf16.xpose.msra.mxu0 0
    %903 = vmatprep.subr.bf16.mxu0 0
    %904 = vmatpush1.bf16.xpose.msra.mxu0 0
    %905 = vmatprep.subr.bf16.mxu0 0
    %906 = vmatpush1.bf16.xpose.msra.mxu0 0
    %907 = vmatprep.mubr.bf16.mxu0 0
    %908 = vmatmul.mubr.bf16.gmra.mrb[0].mxu0 %v870
    %v909 = vpop.f32.mrb[0].mxu0
    %v910 = vadd.f32 %v130, %v909
    %v911 = vpop.f32.mrb[0].mxu0
    %v912 = vpop.f32.mrb[0].mxu0
    %v913 = vpop.f32.mrb[0].mxu0
    %914 = vdwg.mxu0
    %915 = vrot.lane.b32.xlu0 %v204, 104
    %v916 = vpop.permute.xlu0 %915
    %917 = vrot.lane.b32.xlu0 %v204, 72
    %v918 = vpop.permute.xlu0 %917
    %v920 = vsel %vm208, %v916, 0
    %v923 = vsel %vm208, %v918, 0
    %925 = vmatprep.subr.bf16.mxu0 0
    %926 = vmatpush1.bf16.xpose.msra.mxu0 %v923
    %927 = vmatprep.subr.bf16.mxu0 0
    %928 = vmatpush1.bf16.xpose.msra.mxu0 0
    %929 = vmatprep.subr.bf16.mxu0 0
    %930 = vmatpush1.bf16.xpose.msra.mxu0 0
    %931 = vmatprep.subr.bf16.mxu0 0
    %932 = vmatpush1.bf16.xpose.msra.mxu0 0
    %933 = vmatprep.subr.bf16.mxu0 0
    %934 = vmatpush1.bf16.xpose.msra.mxu0 0
    %935 = vmatprep.subr.bf16.mxu0 0
    %936 = vmatpush1.bf16.xpose.msra.mxu0 0
    %937 = vmatprep.subr.bf16.mxu0 0
    %938 = vmatpush1.bf16.xpose.msra.mxu0 0
    %939 = vmatprep.subr.bf16.mxu0 0
    %940 = vmatpush1.bf16.xpose.msra.mxu0 0
    %941 = vmatprep.subr.bf16.mxu0 0
    %942 = vmatpush1.bf16.xpose.msra.mxu0 0
    %943 = vmatprep.subr.bf16.mxu0 0
    %944 = vmatpush1.bf16.xpose.msra.mxu0 0
    %945 = vmatprep.subr.bf16.mxu0 0
    %946 = vmatpush1.bf16.xpose.msra.mxu0 0
    %947 = vmatprep.subr.bf16.mxu0 0
    %948 = vmatpush1.bf16.xpose.msra.mxu0 0
    %949 = vmatprep.subr.bf16.mxu0 0
    %950 = vmatpush1.bf16.xpose.msra.mxu0 0
    %951 = vmatprep.subr.bf16.mxu0 0
    %952 = vmatpush1.bf16.xpose.msra.mxu0 0
    %953 = vmatprep.subr.bf16.mxu0 0
    %954 = vmatpush1.bf16.xpose.msra.mxu0 0
    %955 = vmatprep.subr.bf16.mxu0 0
    %956 = vmatpush1.bf16.xpose.msra.mxu0 0
    %957 = vmatprep.mubr.bf16.mxu0 0
    %958 = vmatmul.mubr.bf16.gmra.mrb[0].mxu0 %v920
    %v959 = vpop.f32.mrb[0].mxu0
    %v960 = vadd.f32 %v134, %v959
    %v961 = vpop.f32.mrb[0].mxu0
    %v962 = vpop.f32.mrb[0].mxu0
    %v963 = vpop.f32.mrb[0].mxu0
    %964 = vdwg.mxu0
    %v965 = vsel %vm208, %v910, -inf
    %966 = vmax.xlane.f32.xlu0 %v965
    %v967 = vpop.xlane.xlu0 %966
    %v968 = vsel %vm208, %v960, -inf
    %969 = vmax.xlane.f32.xlu0 %v968
    %v970 = vpop.xlane.xlu0 %969
    %v971 = vsub.f32 %v910, %v967
    %v972 = vsub.f32 %v960, %v970
    %v973 = vmul.f32 %v971, 1.442695
    %v974 = vpow.pop %v973
    %v975 = vmul.f32 %v972, 1.442695
    %v976 = vpow.pop %v975
    %v977 = vsel %vm208, %v974, 0.0
    %978 = vadd.xlane.f32.xlu0 %v977
    %v979 = vpop.xlane.xlu0 %978
    %v980 = vsel %vm208, %v976, 0.0
    %981 = vadd.xlane.f32.xlu0 %v980
    %v982 = vpop.xlane.xlu0 %981
    %v983 = vrcp.pop %v979
    %v984 = vrcp.pop %v982
    %v985 = vmul.f32 %v974, %v983
    %v986 = vmul.f32 %v976, %v984
    %v987 = vpack.c.bf16 %v985, %v985
    %v988 = vpack.c.bf16 %v986, %v986
    %989 = vrot.lane.b32.xlu0 %v203, 40
    %v990 = vpop.permute.xlu0 %989
    %v992 = vsel %vm208, %v987, 0
    %v995 = vsel %vm333, %v990, 0
    %997 = vmatprep.subr.bf16.mxu0 0
    %998 = vmatpush1.bf16.msra.mxu0 %v995
    %999 = vmatprep.subr.bf16.mxu0 0
    %1000 = vmatpush1.bf16.msra.mxu0 0
    %1001 = vmatprep.subr.bf16.mxu0 0
    %1002 = vmatpush1.bf16.msra.mxu0 0
    %1003 = vmatprep.subr.bf16.mxu0 0
    %1004 = vmatpush1.bf16.msra.mxu0 0
    %1005 = vmatprep.subr.bf16.mxu0 0
    %1006 = vmatpush1.bf16.msra.mxu0 0
    %1007 = vmatprep.subr.bf16.mxu0 0
    %1008 = vmatpush1.bf16.msra.mxu0 0
    %1009 = vmatprep.subr.bf16.mxu0 0
    %1010 = vmatpush1.bf16.msra.mxu0 0
    %1011 = vmatprep.subr.bf16.mxu0 0
    %1012 = vmatpush1.bf16.msra.mxu0 0
    %1013 = vmatprep.subr.bf16.mxu0 0
    %1014 = vmatpush1.bf16.msra.mxu0 0
    %1015 = vmatprep.subr.bf16.mxu0 0
    %1016 = vmatpush1.bf16.msra.mxu0 0
    %1017 = vmatprep.subr.bf16.mxu0 0
    %1018 = vmatpush1.bf16.msra.mxu0 0
    %1019 = vmatprep.subr.bf16.mxu0 0
    %1020 = vmatpush1.bf16.msra.mxu0 0
    %1021 = vmatprep.subr.bf16.mxu0 0
    %1022 = vmatpush1.bf16.msra.mxu0 0
    %1023 = vmatprep.subr.bf16.mxu0 0
    %1024 = vmatpush1.bf16.msra.mxu0 0
    %1025 = vmatprep.subr.bf16.mxu0 0
    %1026 = vmatpush1.bf16.msra.mxu0 0
    %1027 = vmatprep.subr.bf16.mxu0 0
    %1028 = vmatpush1.bf16.msra.mxu0 0
    %1029 = vmatprep.mubr.bf16.mxu0 0
    %1030 = vmatmul.mubr.bf16.gmra.mrb[0].mxu0 %v992
    %v1031 = vpop.f32.mrb[0].mxu0
    %v1032 = vadd.f32 0.0, %v1031
    %v1033 = vpop.f32.mrb[0].mxu0
    %v1034 = vpop.f32.mrb[0].mxu0
    %v1035 = vpop.f32.mrb[0].mxu0
    %1036 = vdwg.mxu0
    %1037 = vrot.lane.b32.xlu0 %v204, 40
    %v1038 = vpop.permute.xlu0 %1037
    %v1040 = vsel %vm208, %v988, 0
    %v1043 = vsel %vm333, %v1038, 0
    %1045 = vmatprep.subr.bf16.mxu0 0
    %1046 = vmatpush1.bf16.msra.mxu0 %v1043
    %1047 = vmatprep.subr.bf16.mxu0 0
    %1048 = vmatpush1.bf16.msra.mxu0 0
    %1049 = vmatprep.subr.bf16.mxu0 0
    %1050 = vmatpush1.bf16.msra.mxu0 0
    %1051 = vmatprep.subr.bf16.mxu0 0
    %1052 = vmatpush1.bf16.msra.mxu0 0
    %1053 = vmatprep.subr.bf16.mxu0 0
    %1054 = vmatpush1.bf16.msra.mxu0 0
    %1055 = vmatprep.subr.bf16.mxu0 0
    %1056 = vmatpush1.bf16.msra.mxu0 0
    %1057 = vmatprep.subr.bf16.mxu0 0
    %1058 = vmatpush1.bf16.msra.mxu0 0
    %1059 = vmatprep.subr.bf16.mxu0 0
    %1060 = vmatpush1.bf16.msra.mxu0 0
    %1061 = vmatprep.subr.bf16.mxu0 0
    %1062 = vmatpush1.bf16.msra.mxu0 0
    %1063 = vmatprep.subr.bf16.mxu0 0
    %1064 = vmatpush1.bf16.msra.mxu0 0
    %1065 = vmatprep.subr.bf16.mxu0 0
    %1066 = vmatpush1.bf16.msra.mxu0 0
    %1067 = vmatprep.subr.bf16.mxu0 0
    %1068 = vmatpush1.bf16.msra.mxu0 0
    %1069 = vmatprep.subr.bf16.mxu0 0
    %1070 = vmatpush1.bf16.msra.mxu0 0
    %1071 = vmatprep.subr.bf16.mxu0 0
    %1072 = vmatpush1.bf16.msra.mxu0 0
    %1073 = vmatprep.subr.bf16.mxu0 0
    %1074 = vmatpush1.bf16.msra.mxu0 0
    %1075 = vmatprep.subr.bf16.mxu0 0
    %1076 = vmatpush1.bf16.msra.mxu0 0
    %1077 = vmatprep.mubr.bf16.mxu0 0
    %1078 = vmatmul.mubr.bf16.gmra.mrb[0].mxu0 %v1040
    %v1079 = vpop.f32.mrb[0].mxu0
    %v1080 = vadd.f32 0.0, %v1079
    %v1081 = vpop.f32.mrb[0].mxu0
    %v1082 = vpop.f32.mrb[0].mxu0
    %v1083 = vpop.f32.mrb[0].mxu0
    %1084 = vdwg.mxu0
    %1087 = vrot.lane.b32.xlu0 %v592, 8
    %v1088 = vpop.permute.xlu0 %1087
    %1089 = vrot.lane.b32.xlu0 %v640, 8
    %v1090 = vpop.permute.xlu0 %1089
    %1095 = vrot.lane.b32.xlu0 %v812, 16
    %v1096 = vpop.permute.xlu0 %1095
    %1097 = vrot.lane.b32.xlu0 %v860, 16
    %v1098 = vpop.permute.xlu0 %1097
    %1103 = vrot.lane.b32.xlu0 %v1032, 24
    %v1104 = vpop.permute.xlu0 %1103
    %1105 = vrot.lane.b32.xlu0 %v1080, 24
    %v1106 = vpop.permute.xlu0 %1105
    %v1109 = vsel %vm208, %v372, %v1088
    %v1110 = vsel %vm208, %v420, %v1090
    %vm1111 = vcmask 130048
    %v1112 = vsel %vm1111, %v1109, %v1096
    %v1113 = vsel %vm1111, %v1110, %v1098
    %vm1114 = vcmask 195584
    %v1115 = vsel %vm1114, %v1112, %v1104
    %v1116 = vsel %vm1114, %v1113, %v1106
    %v1117 = vpack.c.bf16 %v1116, %v1115
    %v1118 = vld [vmem:[%s5] sm:$0xf]
    %v1119 = vld [vmem:[%s5 + $0x4] sm:$0xf]
    %v1120 = vld [vmem:[%s5 + $0x8] sm:$0xf]
    %v1121 = vld [vmem:[%s5 + $0xc] sm:$0xf]
    %v1122 = vlaneseq
    %v1123 = vshrl.u32 %v1122, 7
    %v1124 = vsub.s32 1, %v1123
    %v1125 = vrot.slane %v137, %v1124
    %v1130 = vunpack.c.l.b16 %v1118
    %v1131 = vunpack.c.l.b16 %v1119
    %v1132 = vunpack.c.l.b16 %v1120
    %v1133 = vunpack.c.l.b16 %v1121
    %v1134 = vpack.c.b16 %v1131, %v1130
    %v1135 = vpack.c.b16 %v1133, %v1132
    %v1139 = vsel %vm79, %v1117, 0
    %1141 = vmatprep.subr.bf16.mxu0 0
    %1142 = vmatpush1.bf16.msra.mxu0 %v1134
    %1143 = vmatprep.subr.bf16.mxu0 0
    %1144 = vmatpush1.bf16.msra.mxu0 %v1135
    %1145 = vmatprep.subr.bf16.mxu0 0
    %1146 = vmatpush1.bf16.msra.mxu0 0
    %1147 = vmatprep.subr.bf16.mxu0 0
    %1148 = vmatpush1.bf16.msra.mxu0 0
    %1149 = vmatprep.subr.bf16.mxu0 0
    %1150 = vmatpush1.bf16.msra.mxu0 0
    %1151 = vmatprep.subr.bf16.mxu0 0
    %1152 = vmatpush1.bf16.msra.mxu0 0
    %1153 = vmatprep.subr.bf16.mxu0 0
    %1154 = vmatpush1.bf16.msra.mxu0 0
    %1155 = vmatprep.subr.bf16.mxu0 0
    %1156 = vmatpush1.bf16.msra.mxu0 0
    %1157 = vmatprep.subr.bf16.mxu0 0
    %1158 = vmatpush1.bf16.msra.mxu0 0
    %1159 = vmatprep.subr.bf16.mxu0 0
    %1160 = vmatpush1.bf16.msra.mxu0 0
    %1161 = vmatprep.subr.bf16.mxu0 0
    %1162 = vmatpush1.bf16.msra.mxu0 0
    %1163 = vmatprep.subr.bf16.mxu0 0
    %1164 = vmatpush1.bf16.msra.mxu0 0
    %1165 = vmatprep.subr.bf16.mxu0 0
    %1166 = vmatpush1.bf16.msra.mxu0 0
    %1167 = vmatprep.subr.bf16.mxu0 0
    %1168 = vmatpush1.bf16.msra.mxu0 0
    %1169 = vmatprep.subr.bf16.mxu0 0
    %1170 = vmatpush1.bf16.msra.mxu0 0
    %1171 = vmatprep.subr.bf16.mxu0 0
    %1172 = vmatpush1.bf16.msra.mxu0 0
    %1173 = vmatprep.mubr.bf16.mxu0 0
    %1174 = vmatmul.mubr.bf16.gmra.mrb[0].mxu0 %v1139
    %v1175 = vpop.f32.mrb[0].mxu0
    %v1176 = vadd.f32 %v1125, %v1175
    %v1177 = vpop.f32.mrb[0].mxu0
    %v1178 = vpop.f32.mrb[0].mxu0
    %v1179 = vadd.f32 %v1125, %v1178
    %v1180 = vpop.f32.mrb[0].mxu0
    %1181 = vdwg.mxu0
    %v1182 = vadd.f32 %v117, %v1176
    %v1183 = vadd.f32 %v118, %v1179
    %v1184 = vsel %vm79, %v1182, 0.0
    %1185 = vadd.xlane.f32.xlu0 %v1184
    %v1186 = vpop.xlane.xlu0 %1185
    %v1187 = vsel %vm79, %v1183, 0.0
    %1188 = vadd.xlane.f32.xlu0 %v1187
    %v1189 = vpop.xlane.xlu0 %1188
    %v1190 = vmul.f32 %v1186, %v86
    %v1191 = vmul.f32 %v1189, %v86
    %v1192 = vsub.f32 %v1182, %v1190
    %v1193 = vsub.f32 %v1183, %v1191
    %v1194 = vmul.f32 %v1192, %v1192
    %v1195 = vmul.f32 %v1193, %v1193
    %v1196 = vsel %vm79, %v1194, 0.0
    %1197 = vadd.xlane.f32.xlu0 %v1196
    %v1198 = vpop.xlane.xlu0 %1197
    %v1199 = vsel %vm79, %v1195, 0.0
    %1200 = vadd.xlane.f32.xlu0 %v1199
    %v1201 = vpop.xlane.xlu0 %1200
    %v1202 = vmul.f32 %v1198, %v86
    %v1203 = vmul.f32 %v1201, %v86
    %v1204 = vadd.f32 %v1202, 1e-12
    %v1205 = vadd.f32 %v1203, 1e-12
    %v1206 = vrsqrt.pop %v1204
    %v1207 = vrsqrt.pop %v1205
    %v1208 = vmul.f32 %v1192, %v1206
    %v1209 = vmul.f32 %v1193, %v1207
    %v1210 = vlaneseq
    %v1211 = vshrl.u32 %v1210, 7
    %v1212 = vsub.s32 4, %v1211
    %v1213 = vrot.slane %v137, %v1212
    %v1214 = vmul.f32 %v1208, %v1213
    %v1215 = vmul.f32 %v1209, %v1213
    %v1216 = vlaneseq
    %v1217 = vshrl.u32 %v1216, 7
    %v1218 = vsub.s32 5, %v1217
    %v1219 = vrot.slane %v137, %v1218
    %v1220 = vadd.f32 %v1214, %v1219
    %v1221 = vadd.f32 %v1215, %v1219
    %v1222 = vpack.c.bf16 %v1221, %v1220
    %v1223 = vld [vmem:[%s6] sm:$0xf]
    %v1224 = vld [vmem:[%s6 + $0x4] sm:$0xf]
    %v1225 = vld [vmem:[%s6 + $0x8] sm:$0xf]
    %v1226 = vld [vmem:[%s6 + $0xc] sm:$0xf]
    %v1227 = vlaneseq
    %v1228 = vshrl.u32 %v1227, 7
    %v1229 = vsub.s32 2, %v1228
    %v1230 = vrot.slane %v137, %v1229
    %v1235 = vunpack.c.l.b16 %v1223
    %v1236 = vunpack.c.l.b16 %v1224
    %v1237 = vunpack.c.l.b16 %v1225
    %v1238 = vunpack.c.l.b16 %v1226
    %v1239 = vpack.c.b16 %v1236, %v1235
    %v1240 = vpack.c.b16 %v1238, %v1237
    %v1244 = vsel %vm79, %v1222, 0
    %1246 = vmatprep.subr.bf16.mxu0 0
    %1247 = vmatpush1.bf16.msra.mxu0 %v1239
    %1248 = vmatprep.subr.bf16.mxu0 0
    %1249 = vmatpush1.bf16.msra.mxu0 %v1240
    %1250 = vmatprep.subr.bf16.mxu0 0
    %1251 = vmatpush1.bf16.msra.mxu0 0
    %1252 = vmatprep.subr.bf16.mxu0 0
    %1253 = vmatpush1.bf16.msra.mxu0 0
    %1254 = vmatprep.subr.bf16.mxu0 0
    %1255 = vmatpush1.bf16.msra.mxu0 0
    %1256 = vmatprep.subr.bf16.mxu0 0
    %1257 = vmatpush1.bf16.msra.mxu0 0
    %1258 = vmatprep.subr.bf16.mxu0 0
    %1259 = vmatpush1.bf16.msra.mxu0 0
    %1260 = vmatprep.subr.bf16.mxu0 0
    %1261 = vmatpush1.bf16.msra.mxu0 0
    %1262 = vmatprep.subr.bf16.mxu0 0
    %1263 = vmatpush1.bf16.msra.mxu0 0
    %1264 = vmatprep.subr.bf16.mxu0 0
    %1265 = vmatpush1.bf16.msra.mxu0 0
    %1266 = vmatprep.subr.bf16.mxu0 0
    %1267 = vmatpush1.bf16.msra.mxu0 0
    %1268 = vmatprep.subr.bf16.mxu0 0
    %1269 = vmatpush1.bf16.msra.mxu0 0
    %1270 = vmatprep.subr.bf16.mxu0 0
    %1271 = vmatpush1.bf16.msra.mxu0 0
    %1272 = vmatprep.subr.bf16.mxu0 0
    %1273 = vmatpush1.bf16.msra.mxu0 0
    %1274 = vmatprep.subr.bf16.mxu0 0
    %1275 = vmatpush1.bf16.msra.mxu0 0
    %1276 = vmatprep.subr.bf16.mxu0 0
    %1277 = vmatpush1.bf16.msra.mxu0 0
    %1278 = vmatprep.mubr.bf16.mxu0 0
    %1279 = vmatmul.mubr.bf16.gmra.mrb[0].mxu0 %v1244
    %v1280 = vpop.f32.mrb[0].mxu0
    %v1281 = vadd.f32 %v1230, %v1280
    %v1282 = vpop.f32.mrb[0].mxu0
    %v1283 = vpop.f32.mrb[0].mxu0
    %v1284 = vadd.f32 %v1230, %v1283
    %v1285 = vpop.f32.mrb[0].mxu0
    %1286 = vdwg.mxu0
    %v1287 = vmul.f32 %v1281, 0.5
    %v1288 = vmul.f32 %v1284, 0.5
    %v1289 = vmul.f32 %v1281, 0.044715
    %v1290 = vmul.f32 %v1284, 0.044715
    %v1291 = vmul.f32 %v1289, %v1281
    %v1292 = vmul.f32 %v1290, %v1284
    %v1293 = vmul.f32 %v1291, %v1281
    %v1294 = vmul.f32 %v1292, %v1284
    %v1295 = vadd.f32 %v1281, %v1293
    %v1296 = vadd.f32 %v1284, %v1294
    %v1297 = vmul.f32 %v1295, 0.7978846
    %v1298 = vmul.f32 %v1296, 0.7978846
    %v1299 = vtanh.pop %v1297
    %v1300 = vtanh.pop %v1298
    %v1301 = vadd.f32 %v1299, 1.0
    %v1302 = vadd.f32 %v1300, 1.0
    %v1303 = vmul.f32 %v1287, %v1301
    %v1304 = vmul.f32 %v1288, %v1302
    %v1305 = vpack.c.bf16 %v1304, %v1303
    %v1306 = vld [vmem:[%s7] sm:$0xf]
    %v1307 = vld [vmem:[%s7 + $0x4] sm:$0xf]
    %v1308 = vld [vmem:[%s7 + $0x8] sm:$0xf]
    %v1309 = vld [vmem:[%s7 + $0xc] sm:$0xf]
    %v1310 = vld [vmem:[%s7 + $0x10] sm:$0xf]
    %v1311 = vld [vmem:[%s7 + $0x14] sm:$0xf]
    %v1312 = vld [vmem:[%s7 + $0x18] sm:$0xf]
    %v1313 = vld [vmem:[%s7 + $0x1c] sm:$0xf]
    %v1314 = vlaneseq
    %v1315 = vshrl.u32 %v1314, 7
    %v1316 = vsub.s32 3, %v1315
    %v1317 = vrot.slane %v137, %v1316
    %v1326 = vunpack.c.l.b16 %v1306
    %v1327 = vunpack.c.l.b16 %v1307
    %v1328 = vunpack.c.l.b16 %v1308
    %v1329 = vunpack.c.l.b16 %v1309
    %v1330 = vunpack.c.l.b16 %v1310
    %v1331 = vunpack.c.l.b16 %v1311
    %v1332 = vunpack.c.l.b16 %v1312
    %v1333 = vunpack.c.l.b16 %v1313
    %v1334 = vpack.c.b16 %v1327, %v1326
    %v1335 = vpack.c.b16 %v1329, %v1328
    %v1336 = vpack.c.b16 %v1331, %v1330
    %v1337 = vpack.c.b16 %v1333, %v1332
    %vm1342 = vcmask 523264
    %v1344 = vsel %vm1342, %v1305, 0
    %1346 = vmatprep.subr.bf16.mxu0 0
    %1347 = vmatpush1.bf16.msra.mxu0 %v1334
    %1348 = vmatprep.subr.bf16.mxu0 0
    %1349 = vmatpush1.bf16.msra.mxu0 %v1335
    %1350 = vmatprep.subr.bf16.mxu0 0
    %1351 = vmatpush1.bf16.msra.mxu0 %v1336
    %1352 = vmatprep.subr.bf16.mxu0 0
    %1353 = vmatpush1.bf16.msra.mxu0 %v1337
    %1354 = vmatprep.subr.bf16.mxu0 0
    %1355 = vmatpush1.bf16.msra.mxu0 0
    %1356 = vmatprep.subr.bf16.mxu0 0
    %1357 = vmatpush1.bf16.msra.mxu0 0
    %1358 = vmatprep.subr.bf16.mxu0 0
    %1359 = vmatpush1.bf16.msra.mxu0 0
    %1360 = vmatprep.subr.bf16.mxu0 0
    %1361 = vmatpush1.bf16.msra.mxu0 0
    %1362 = vmatprep.subr.bf16.mxu0 0
    %1363 = vmatpush1.bf16.msra.mxu0 0
    %1364 = vmatprep.subr.bf16.mxu0 0
    %1365 = vmatpush1.bf16.msra.mxu0 0
    %1366 = vmatprep.subr.bf16.mxu0 0
    %1367 = vmatpush1.bf16.msra.mxu0 0
    %1368 = vmatprep.subr.bf16.mxu0 0
    %1369 = vmatpush1.bf16.msra.mxu0 0
    %1370 = vmatprep.subr.bf16.mxu0 0
    %1371 = vmatpush1.bf16.msra.mxu0 0
    %1372 = vmatprep.subr.bf16.mxu0 0
    %1373 = vmatpush1.bf16.msra.mxu0 0
    %1374 = vmatprep.subr.bf16.mxu0 0
    %1375 = vmatpush1.bf16.msra.mxu0 0
    %1376 = vmatprep.subr.bf16.mxu0 0
    %1377 = vmatpush1.bf16.msra.mxu0 0
    %1378 = vmatprep.mubr.bf16.mxu0 0
    %1379 = vmatmul.mubr.bf16.gmra.mrb[0].mxu0 %v1344
    %v1380 = vpop.f32.mrb[0].mxu0
    %v1381 = vadd.f32 %v1317, %v1380
    %v1382 = vpop.f32.mrb[0].mxu0
    %v1383 = vpop.f32.mrb[0].mxu0
    %v1384 = vadd.f32 %v1317, %v1383
    %v1385 = vpop.f32.mrb[0].mxu0
    %1386 = vdwg.mxu0
    %v1387 = vadd.f32 %v1220, %v1381
    %v1388 = vadd.f32 %v1221, %v1384
    %v1389 = vsel %vm79, %v1387, 0.0
    %1390 = vadd.xlane.f32.xlu0 %v1389
    %v1391 = vpop.xlane.xlu0 %1390
    %v1392 = vsel %vm79, %v1388, 0.0
    %1393 = vadd.xlane.f32.xlu0 %v1392
    %v1394 = vpop.xlane.xlu0 %1393
    %v1395 = vmul.f32 %v1391, %v86
    %v1396 = vmul.f32 %v1394, %v86
    %v1397 = vsub.f32 %v1387, %v1395
    %v1398 = vsub.f32 %v1388, %v1396
    %v1399 = vmul.f32 %v1397, %v1397
    %v1400 = vmul.f32 %v1398, %v1398
    %v1401 = vsel %vm79, %v1399, 0.0
    %1402 = vadd.xlane.f32.xlu0 %v1401
    %v1403 = vpop.xlane.xlu0 %1402
    %v1404 = vsel %vm79, %v1400, 0.0
    %1405 = vadd.xlane.f32.xlu0 %v1404
    %v1406 = vpop.xlane.xlu0 %1405
    %v1407 = vmul.f32 %v1403, %v86
    %v1408 = vmul.f32 %v1406, %v86
    %v1409 = vadd.f32 %v1407, 1e-12
    %v1410 = vadd.f32 %v1408, 1e-12
    %v1411 = vrsqrt.pop %v1409
    %v1412 = vrsqrt.pop %v1410
    %v1413 = vmul.f32 %v1397, %v1411
    %v1414 = vmul.f32 %v1398, %v1412
    %v1415 = vlaneseq
    %v1416 = vshrl.u32 %v1415, 7
    %v1417 = vsub.s32 6, %v1416
    %v1418 = vrot.slane %v137, %v1417
    %v1419 = vmul.f32 %v1413, %v1418
    %v1420 = vmul.f32 %v1414, %v1418
    %v1421 = vlaneseq
    %v1422 = vshrl.u32 %v1421, 7
    %v1423 = vsub.s32 7, %v1422
    %v1424 = vrot.slane %v137, %v1423
    %v1425 = vadd.f32 %v1419, %v1424
    %v1426 = vadd.f32 %v1420, %v1424
    %s1427 = scalar_lea.vmem [#allocation7], 8
    %v1428 = vld [vmem:[%s1427] sm:$0xff]
    %v1429 = vpack.c.bf16 %v1426, %v1425
    %s1430 = scalar_lea.vmem %s4, 16
    %v1431 = vld [vmem:[%s1430] sm:$0xf]
    %v1432 = vld [vmem:[%s1430 + $0x4] sm:$0xf]
    %v1433 = vld [vmem:[%s1430 + $0x8] sm:$0xf]
    %v1434 = vld [vmem:[%s1430 + $0xc] sm:$0xf]
    %v1435 = vlaneseq
    %v1436 = vshrl.u32 %v1435, 7
    %v1437 = vsub.s32 0, %v1436
    %v1438 = vrot.slane %v1428, %v1437
    %v1443 = vunpack.c.l.b16 %v1431
    %v1444 = vunpack.c.l.b16 %v1432
    %v1445 = vunpack.c.l.b16 %v1433
    %v1446 = vunpack.c.l.b16 %v1434
    %v1447 = vpack.c.b16 %v1444, %v1443
    %v1448 = vpack.c.b16 %v1446, %v1445
    %v1452 = vsel %vm79, %v1429, 0
    %1454 = vmatprep.subr.bf16.mxu0 0
    %1455 = vmatpush1.bf16.msra.mxu0 %v1447
    %1456 = vmatprep.subr.bf16.mxu0 0
    %1457 = vmatpush1.bf16.msra.mxu0 %v1448
    %1458 = vmatprep.subr.bf16.mxu0 0
    %1459 = vmatpush1.bf16.msra.mxu0 0
    %1460 = vmatprep.subr.bf16.mxu0 0
    %1461 = vmatpush1.bf16.msra.mxu0 0
    %1462 = vmatprep.subr.bf16.mxu0 0
    %1463 = vmatpush1.bf16.msra.mxu0 0
    %1464 = vmatprep.subr.bf16.mxu0 0
    %1465 = vmatpush1.bf16.msra.mxu0 0
    %1466 = vmatprep.subr.bf16.mxu0 0
    %1467 = vmatpush1.bf16.msra.mxu0 0
    %1468 = vmatprep.subr.bf16.mxu0 0
    %1469 = vmatpush1.bf16.msra.mxu0 0
    %1470 = vmatprep.subr.bf16.mxu0 0
    %1471 = vmatpush1.bf16.msra.mxu0 0
    %1472 = vmatprep.subr.bf16.mxu0 0
    %1473 = vmatpush1.bf16.msra.mxu0 0
    %1474 = vmatprep.subr.bf16.mxu0 0
    %1475 = vmatpush1.bf16.msra.mxu0 0
    %1476 = vmatprep.subr.bf16.mxu0 0
    %1477 = vmatpush1.bf16.msra.mxu0 0
    %1478 = vmatprep.subr.bf16.mxu0 0
    %1479 = vmatpush1.bf16.msra.mxu0 0
    %1480 = vmatprep.subr.bf16.mxu0 0
    %1481 = vmatpush1.bf16.msra.mxu0 0
    %1482 = vmatprep.subr.bf16.mxu0 0
    %1483 = vmatpush1.bf16.msra.mxu0 0
    %1484 = vmatprep.subr.bf16.mxu0 0
    %1485 = vmatpush1.bf16.msra.mxu0 0
    %1486 = vmatprep.mubr.bf16.mxu0 0
    %1487 = vmatmul.mubr.bf16.gmra.mrb[0].mxu0 %v1452
    %v1488 = vpop.f32.mrb[0].mxu0
    %v1489 = vadd.f32 %v1438, %v1488
    %v1490 = vpop.f32.mrb[0].mxu0
    %v1491 = vpop.f32.mrb[0].mxu0
    %v1492 = vadd.f32 %v1438, %v1491
    %v1493 = vpop.f32.mrb[0].mxu0
    %1494 = vdwg.mxu0
    %v1495 = vpack.c.bf16 %v1489, %v1489
    %v1496 = vpack.c.bf16 %v1492, %v1492
    %1498 = vrot.lane.b32.xlu0 %v1495, 96
    %v1499 = vpop.permute.xlu0 %1498
    %v1501 = vsel %vm208, %v1495, 0
    %v1504 = vsel %vm208, %v1499, 0
    %1506 = vmatprep.subr.bf16.mxu0 0
    %1507 = vmatpush1.bf16.xpose.msra.mxu0 %v1504
    %1508 = vmatprep.subr.bf16.mxu0 0
    %1509 = vmatpush1.bf16.xpose.msra.mxu0 0
    %1510 = vmatprep.subr.bf16.mxu0 0
    %1511 = vmatpush1.bf16.xpose.msra.mxu0 0
    %1512 = vmatprep.subr.bf16.mxu0 0
    %1513 = vmatpush1.bf16.xpose.msra.mxu0 0
    %1514 = vmatprep.subr.bf16.mxu0 0
    %1515 = vmatpush1.bf16.xpose.msra.mxu0 0
    %1516 = vmatprep.subr.bf16.mxu0 0
    %1517 = vmatpush1.bf16.xpose.msra.mxu0 0
    %1518 = vmatprep.subr.bf16.mxu0 0
    %1519 = vmatpush1.bf16.xpose.msra.mxu0 0
    %1520 = vmatprep.subr.bf16.mxu0 0
    %1521 = vmatpush1.bf16.xpose.msra.mxu0 0
    %1522 = vmatprep.subr.bf16.mxu0 0
    %1523 = vmatpush1.bf16.xpose.msra.mxu0 0
    %1524 = vmatprep.subr.bf16.mxu0 0
    %1525 = vmatpush1.bf16.xpose.msra.mxu0 0
    %1526 = vmatprep.subr.bf16.mxu0 0
    %1527 = vmatpush1.bf16.xpose.msra.mxu0 0
    %1528 = vmatprep.subr.bf16.mxu0 0
    %1529 = vmatpush1.bf16.xpose.msra.mxu0 0
    %1530 = vmatprep.subr.bf16.mxu0 0
    %1531 = vmatpush1.bf16.xpose.msra.mxu0 0
    %1532 = vmatprep.subr.bf16.mxu0 0
    %1533 = vmatpush1.bf16.xpose.msra.mxu0 0
    %1534 = vmatprep.subr.bf16.mxu0 0
    %1535 = vmatpush1.bf16.xpose.msra.mxu0 0
    %1536 = vmatprep.subr.bf16.mxu0 0
    %1537 = vmatpush1.bf16.xpose.msra.mxu0 0
    %1538 = vmatprep.mubr.bf16.mxu0 0
    %1539 = vmatmul.mubr.bf16.gmra.mrb[0].mxu0 %v1501
    %v1540 = vpop.f32.mrb[0].mxu0
    %v1541 = vadd.f32 %v130, %v1540
    %v1542 = vpop.f32.mrb[0].mxu0
    %v1543 = vpop.f32.mrb[0].mxu0
    %v1544 = vpop.f32.mrb[0].mxu0
    %1545 = vdwg.mxu0
    %1547 = vrot.lane.b32.xlu0 %v1496, 96
    %v1548 = vpop.permute.xlu0 %1547
    %v1550 = vsel %vm208, %v1496, 0
    %v1553 = vsel %vm208, %v1548, 0
    %1555 = vmatprep.subr.bf16.mxu0 0
    %1556 = vmatpush1.bf16.xpose.msra.mxu0 %v1553
    %1557 = vmatprep.subr.bf16.mxu0 0
    %1558 = vmatpush1.bf16.xpose.msra.mxu0 0
    %1559 = vmatprep.subr.bf16.mxu0 0
    %1560 = vmatpush1.bf16.xpose.msra.mxu0 0
    %1561 = vmatprep.subr.bf16.mxu0 0
    %1562 = vmatpush1.bf16.xpose.msra.mxu0 0
    %1563 = vmatprep.subr.bf16.mxu0 0
    %1564 = vmatpush1.bf16.xpose.msra.mxu0 0
    %1565 = vmatprep.subr.bf16.mxu0 0
    %1566 = vmatpush1.bf16.xpose.msra.mxu0 0
    %1567 = vmatprep.subr.bf16.mxu0 0
    %1568 = vmatpush1.bf16.xpose.msra.mxu0 0
    %1569 = vmatprep.subr.bf16.mxu0 0
    %1570 = vmatpush1.bf16.xpose.msra.mxu0 0
    %1571 = vmatprep.subr.bf16.mxu0 0
    %1572 = vmatpush1.bf16.xpose.msra.mxu0 0
    %1573 = vmatprep.subr.bf16.mxu0 0
    %1574 = vmatpush1.bf16.xpose.msra.mxu0 0
    %1575 = vmatprep.subr.bf16.mxu0 0
    %1576 = vmatpush1.bf16.xpose.msra.mxu0 0
    %1577 = vmatprep.subr.bf16.mxu0 0
    %1578 = vmatpush1.bf16.xpose.msra.mxu0 0
    %1579 = vmatprep.subr.bf16.mxu0 0
    %1580 = vmatpush1.bf16.xpose.msra.mxu0 0
    %1581 = vmatprep.subr.bf16.mxu0 0
    %1582 = vmatpush1.bf16.xpose.msra.mxu0 0
    %1583 = vmatprep.subr.bf16.mxu0 0
    %1584 = vmatpush1.bf16.xpose.msra.mxu0 0
    %1585 = vmatprep.subr.bf16.mxu0 0
    %1586 = vmatpush1.bf16.xpose.msra.mxu0 0
    %1587 = vmatprep.mubr.bf16.mxu0 0
    %1588 = vmatmul.mubr.bf16.gmra.mrb[0].mxu0 %v1550
    %v1589 = vpop.f32.mrb[0].mxu0
    %v1590 = vadd.f32 %v134, %v1589
    %v1591 = vpop.f32.mrb[0].mxu0
    %v1592 = vpop.f32.mrb[0].mxu0
    %v1593 = vpop.f32.mrb[0].mxu0
    %1594 = vdwg.mxu0
    %v1595 = vsel %vm208, %v1541, -inf
    %1596 = vmax.xlane.f32.xlu0 %v1595
    %v1597 = vpop.xlane.xlu0 %1596
    %v1598 = vsel %vm208, %v1590, -inf
    %1599 = vmax.xlane.f32.xlu0 %v1598
    %v1600 = vpop.xlane.xlu0 %1599
    %v1601 = vsub.f32 %v1541, %v1597
    %v1602 = vsub.f32 %v1590, %v1600
    %v1603 = vmul.f32 %v1601, 1.442695
    %v1604 = vpow.pop %v1603
    %v1605 = vmul.f32 %v1602, 1.442695
    %v1606 = vpow.pop %v1605
    %v1607 = vsel %vm208, %v1604, 0.0
    %1608 = vadd.xlane.f32.xlu0 %v1607
    %v1609 = vpop.xlane.xlu0 %1608
    %v1610 = vsel %vm208, %v1606, 0.0
    %1611 = vadd.xlane.f32.xlu0 %v1610
    %v1612 = vpop.xlane.xlu0 %1611
    %v1613 = vrcp.pop %v1609
    %v1614 = vrcp.pop %v1612
    %v1615 = vmul.f32 %v1604, %v1613
    %v1616 = vmul.f32 %v1606, %v1614
    %v1617 = vpack.c.bf16 %v1615, %v1615
    %v1618 = vpack.c.bf16 %v1616, %v1616
    %1619 = vrot.lane.b32.xlu0 %v1495, 64
    %v1620 = vpop.permute.xlu0 %1619
    %v1622 = vsel %vm208, %v1617, 0
    %v1625 = vsel %vm333, %v1620, 0
    %1627 = vmatprep.subr.bf16.mxu0 0
    %1628 = vmatpush1.bf16.msra.mxu0 %v1625
    %1629 = vmatprep.subr.bf16.mxu0 0
    %1630 = vmatpush1.bf16.msra.mxu0 0
    %1631 = vmatprep.subr.bf16.mxu0 0
    %1632 = vmatpush1.bf16.msra.mxu0 0
    %1633 = vmatprep.subr.bf16.mxu0 0
    %1634 = vmatpush1.bf16.msra.mxu0 0
    %1635 = vmatprep.subr.bf16.mxu0 0
    %1636 = vmatpush1.bf16.msra.mxu0 0
    %1637 = vmatprep.subr.bf16.mxu0 0
    %1638 = vmatpush1.bf16.msra.mxu0 0
    %1639 = vmatprep.subr.bf16.mxu0 0
    %1640 = vmatpush1.bf16.msra.mxu0 0
    %1641 = vmatprep.subr.bf16.mxu0 0
    %1642 = vmatpush1.bf16.msra.mxu0 0
    %1643 = vmatprep.subr.bf16.mxu0 0
    %1644 = vmatpush1.bf16.msra.mxu0 0
    %1645 = vmatprep.subr.bf16.mxu0 0
    %1646 = vmatpush1.bf16.msra.mxu0 0
    %1647 = vmatprep.subr.bf16.mxu0 0
    %1648 = vmatpush1.bf16.msra.mxu0 0
    %1649 = vmatprep.subr.bf16.mxu0 0
    %1650 = vmatpush1.bf16.msra.mxu0 0
    %1651 = vmatprep.subr.bf16.mxu0 0
    %1652 = vmatpush1.bf16.msra.mxu0 0
    %1653 = vmatprep.subr.bf16.mxu0 0
    %1654 = vmatpush1.bf16.msra.mxu0 0
    %1655 = vmatprep.subr.bf16.mxu0 0
    %1656 = vmatpush1.bf16.msra.mxu0 0
    %1657 = vmatprep.subr.bf16.mxu0 0
    %1658 = vmatpush1.bf16.msra.mxu0 0
    %1659 = vmatprep.mubr.bf16.mxu0 0
    %1660 = vmatmul.mubr.bf16.gmra.mrb[0].mxu0 %v1622
    %v1661 = vpop.f32.mrb[0].mxu0
    %v1662 = vadd.f32 0.0, %v1661
    %v1663 = vpop.f32.mrb[0].mxu0
    %v1664 = vpop.f32.mrb[0].mxu0
    %v1665 = vpop.f32.mrb[0].mxu0
    %1666 = vdwg.mxu0
    %1667 = vrot.lane.b32.xlu0 %v1496, 64
    %v1668 = vpop.permute.xlu0 %1667
    %v1670 = vsel %vm208, %v1618, 0
    %v1673 = vsel %vm333, %v1668, 0
    %1675 = vmatprep.subr.bf16.mxu0 0
    %1676 = vmatpush1.bf16.msra.mxu0 %v1673
    %1677 = vmatprep.subr.bf16.mxu0 0
    %1678 = vmatpush1.bf16.msra.mxu0 0
    %1679 = vmatprep.subr.bf16.mxu0 0
    %1680 = vmatpush1.bf16.msra.mxu0 0
    %1681 = vmatprep.subr.bf16.mxu0 0
    %1682 = vmatpush1.bf16.msra.mxu0 0
    %1683 = vmatprep.subr.bf16.mxu0 0
    %1684 = vmatpush1.bf16.msra.mxu0 0
    %1685 = vmatprep.subr.bf16.mxu0 0
    %1686 = vmatpush1.bf16.msra.mxu0 0
    %1687 = vmatprep.subr.bf16.mxu0 0
    %1688 = vmatpush1.bf16.msra.mxu0 0
    %1689 = vmatprep.subr.bf16.mxu0 0
    %1690 = vmatpush1.bf16.msra.mxu0 0
    %1691 = vmatprep.subr.bf16.mxu0 0
    %1692 = vmatpush1.bf16.msra.mxu0 0
    %1693 = vmatprep.subr.bf16.mxu0 0
    %1694 = vmatpush1.bf16.msra.mxu0 0
    %1695 = vmatprep.subr.bf16.mxu0 0
    %1696 = vmatpush1.bf16.msra.mxu0 0
    %1697 = vmatprep.subr.bf16.mxu0 0
    %1698 = vmatpush1.bf16.msra.mxu0 0
    %1699 = vmatprep.subr.bf16.mxu0 0
    %1700 = vmatpush1.bf16.msra.mxu0 0
    %1701 = vmatprep.subr.bf16.mxu0 0
    %1702 = vmatpush1.bf16.msra.mxu0 0
    %1703 = vmatprep.subr.bf16.mxu0 0
    %1704 = vmatpush1.bf16.msra.mxu0 0
    %1705 = vmatprep.subr.bf16.mxu0 0
    %1706 = vmatpush1.bf16.msra.mxu0 0
    %1707 = vmatprep.mubr.bf16.mxu0 0
    %1708 = vmatmul.mubr.bf16.gmra.mrb[0].mxu0 %v1670
    %v1709 = vpop.f32.mrb[0].mxu0
    %v1710 = vadd.f32 0.0, %v1709
    %v1711 = vpop.f32.mrb[0].mxu0
    %v1712 = vpop.f32.mrb[0].mxu0
    %v1713 = vpop.f32.mrb[0].mxu0
    %1714 = vdwg.mxu0
    %1715 = vrot.lane.b32.xlu0 %v1495, 120
    %v1716 = vpop.permute.xlu0 %1715
    %1717 = vrot.lane.b32.xlu0 %v1495, 88
    %v1718 = vpop.permute.xlu0 %1717
    %v1720 = vsel %vm208, %v1716, 0
    %v1723 = vsel %vm208, %v1718, 0
    %1725 = vmatprep.subr.bf16.mxu0 0
    %1726 = vmatpush1.bf16.xpose.msra.mxu0 %v1723
    %1727 = vmatprep.subr.bf16.mxu0 0
    %1728 = vmatpush1.bf16.xpose.msra.mxu0 0
    %1729 = vmatprep.subr.bf16.mxu0 0
    %1730 = vmatpush1.bf16.xpose.msra.mxu0 0
    %1731 = vmatprep.subr.bf16.mxu0 0
    %1732 = vmatpush1.bf16.xpose.msra.mxu0 0
    %1733 = vmatprep.subr.bf16.mxu0 0
    %1734 = vmatpush1.bf16.xpose.msra.mxu0 0
    %1735 = vmatprep.subr.bf16.mxu0 0
    %1736 = vmatpush1.bf16.xpose.msra.mxu0 0
    %1737 = vmatprep.subr.bf16.mxu0 0
    %1738 = vmatpush1.bf16.xpose.msra.mxu0 0
    %1739 = vmatprep.subr.bf16.mxu0 0
    %1740 = vmatpush1.bf16.xpose.msra.mxu0 0
    %1741 = vmatprep.subr.bf16.mxu0 0
    %1742 = vmatpush1.bf16.xpose.msra.mxu0 0
    %1743 = vmatprep.subr.bf16.mxu0 0
    %1744 = vmatpush1.bf16.xpose.msra.mxu0 0
    %1745 = vmatprep.subr.bf16.mxu0 0
    %1746 = vmatpush1.bf16.xpose.msra.mxu0 0
    %1747 = vmatprep.subr.bf16.mxu0 0
    %1748 = vmatpush1.bf16.xpose.msra.mxu0 0
    %1749 = vmatprep.subr.bf16.mxu0 0
    %1750 = vmatpush1.bf16.xpose.msra.mxu0 0
    %1751 = vmatprep.subr.bf16.mxu0 0
    %1752 = vmatpush1.bf16.xpose.msra.mxu0 0
    %1753 = vmatprep.subr.bf16.mxu0 0
    %1754 = vmatpush1.bf16.xpose.msra.mxu0 0
    %1755 = vmatprep.subr.bf16.mxu0 0
    %1756 = vmatpush1.bf16.xpose.msra.mxu0 0
    %1757 = vmatprep.mubr.bf16.mxu0 0
    %1758 = vmatmul.mubr.bf16.gmra.mrb[0].mxu0 %v1720
    %v1759 = vpop.f32.mrb[0].mxu0
    %v1760 = vadd.f32 %v130, %v1759
    %v1761 = vpop.f32.mrb[0].mxu0
    %v1762 = vpop.f32.mrb[0].mxu0
    %v1763 = vpop.f32.mrb[0].mxu0
    %1764 = vdwg.mxu0
    %1765 = vrot.lane.b32.xlu0 %v1496, 120
    %v1766 = vpop.permute.xlu0 %1765
    %1767 = vrot.lane.b32.xlu0 %v1496, 88
    %v1768 = vpop.permute.xlu0 %1767
    %v1770 = vsel %vm208, %v1766, 0
    %v1773 = vsel %vm208, %v1768, 0
    %1775 = vmatprep.subr.bf16.mxu0 0
    %1776 = vmatpush1.bf16.xpose.msra.mxu0 %v1773
    %1777 = vmatprep.subr.bf16.mxu0 0
    %1778 = vmatpush1.bf16.xpose.msra.mxu0 0
    %1779 = vmatprep.subr.bf16.mxu0 0
    %1780 = vmatpush1.bf16.xpose.msra.mxu0 0
    %1781 = vmatprep.subr.bf16.mxu0 0
    %1782 = vmatpush1.bf16.xpose.msra.mxu0 0
    %1783 = vmatprep.subr.bf16.mxu0 0
    %1784 = vmatpush1.bf16.xpose.msra.mxu0 0
    %1785 = vmatprep.subr.bf16.mxu0 0
    %1786 = vmatpush1.bf16.xpose.msra.mxu0 0
    %1787 = vmatprep.subr.bf16.mxu0 0
    %1788 = vmatpush1.bf16.xpose.msra.mxu0 0
    %1789 = vmatprep.subr.bf16.mxu0 0
    %1790 = vmatpush1.bf16.xpose.msra.mxu0 0
    %1791 = vmatprep.subr.bf16.mxu0 0
    %1792 = vmatpush1.bf16.xpose.msra.mxu0 0
    %1793 = vmatprep.subr.bf16.mxu0 0
    %1794 = vmatpush1.bf16.xpose.msra.mxu0 0
    %1795 = vmatprep.subr.bf16.mxu0 0
    %1796 = vmatpush1.bf16.xpose.msra.mxu0 0
    %1797 = vmatprep.subr.bf16.mxu0 0
    %1798 = vmatpush1.bf16.xpose.msra.mxu0 0
    %1799 = vmatprep.subr.bf16.mxu0 0
    %1800 = vmatpush1.bf16.xpose.msra.mxu0 0
    %1801 = vmatprep.subr.bf16.mxu0 0
    %1802 = vmatpush1.bf16.xpose.msra.mxu0 0
    %1803 = vmatprep.subr.bf16.mxu0 0
    %1804 = vmatpush1.bf16.xpose.msra.mxu0 0
    %1805 = vmatprep.subr.bf16.mxu0 0
    %1806 = vmatpush1.bf16.xpose.msra.mxu0 0
    %1807 = vmatprep.mubr.bf16.mxu0 0
    %1808 = vmatmul.mubr.bf16.gmra.mrb[0].mxu0 %v1770
    %v1809 = vpop.f32.mrb[0].mxu0
    %v1810 = vadd.f32 %v134, %v1809
    %v1811 = vpop.f32.mrb[0].mxu0
    %v1812 = vpop.f32.mrb[0].mxu0
    %v1813 = vpop.f32.mrb[0].mxu0
    %1814 = vdwg.mxu0
    %v1815 = vsel %vm208, %v1760, -inf
    %1816 = vmax.xlane.f32.xlu0 %v1815
    %v1817 = vpop.xlane.xlu0 %1816
    %v1818 = vsel %vm208, %v1810, -inf
    %1819 = vmax.xlane.f32.xlu0 %v1818
    %v1820 = vpop.xlane.xlu0 %1819
    %v1821 = vsub.f32 %v1760, %v1817
    %v1822 = vsub.f32 %v1810, %v1820
    %v1823 = vmul.f32 %v1821, 1.442695
    %v1824 = vpow.pop %v1823
    %v1825 = vmul.f32 %v1822, 1.442695
    %v1826 = vpow.pop %v1825
    %v1827 = vsel %vm208, %v1824, 0.0
    %1828 = vadd.xlane.f32.xlu0 %v1827
    %v1829 = vpop.xlane.xlu0 %1828
    %v1830 = vsel %vm208, %v1826, 0.0
    %1831 = vadd.xlane.f32.xlu0 %v1830
    %v1832 = vpop.xlane.xlu0 %1831
    %v1833 = vrcp.pop %v1829
    %v1834 = vrcp.pop %v1832
    %v1835 = vmul.f32 %v1824, %v1833
    %v1836 = vmul.f32 %v1826, %v1834
    %v1837 = vpack.c.bf16 %v1835, %v1835
    %v1838 = vpack.c.bf16 %v1836, %v1836
    %1839 = vrot.lane.b32.xlu0 %v1495, 56
    %v1840 = vpop.permute.xlu0 %1839
    %v1842 = vsel %vm208, %v1837, 0
    %v1845 = vsel %vm333, %v1840, 0
    %1847 = vmatprep.subr.bf16.mxu0 0
    %1848 = vmatpush1.bf16.msra.mxu0 %v1845
    %1849 = vmatprep.subr.bf16.mxu0 0
    %1850 = vmatpush1.bf16.msra.mxu0 0
    %1851 = vmatprep.subr.bf16.mxu0 0
    %1852 = vmatpush1.bf16.msra.mxu0 0
    %1853 = vmatprep.subr.bf16.mxu0 0
    %1854 = vmatpush1.bf16.msra.mxu0 0
    %1855 = vmatprep.subr.bf16.mxu0 0
    %1856 = vmatpush1.bf16.msra.mxu0 0
    %1857 = vmatprep.subr.bf16.mxu0 0
    %1858 = vmatpush1.bf16.msra.mxu0 0
    %1859 = vmatprep.subr.bf16.mxu0 0
    %1860 = vmatpush1.bf16.msra.mxu0 0
    %1861 = vmatprep.subr.bf16.mxu0 0
    %1862 = vmatpush1.bf16.msra.mxu0 0
    %1863 = vmatprep.subr.bf16.mxu0 0
    %1864 = vmatpush1.bf16.msra.mxu0 0
    %1865 = vmatprep.subr.bf16.mxu0 0
    %1866 = vmatpush1.bf16.msra.mxu0 0
    %1867 = vmatprep.subr.bf16.mxu0 0
    %1868 = vmatpush1.bf16.msra.mxu0 0
    %1869 = vmatprep.subr.bf16.mxu0 0
    %1870 = vmatpush1.bf16.msra.mxu0 0
    %1871 = vmatprep.subr.bf16.mxu0 0
    %1872 = vmatpush1.bf16.msra.mxu0 0
    %1873 = vmatprep.subr.bf16.mxu0 0
    %1874 = vmatpush1.bf16.msra.mxu0 0
    %1875 = vmatprep.subr.bf16.mxu0 0
    %1876 = vmatpush1.bf16.msra.mxu0 0
    %1877 = vmatprep.subr.bf16.mxu0 0
    %1878 = vmatpush1.bf16.msra.mxu0 0
    %1879 = vmatprep.mubr.bf16.mxu0 0
    %1880 = vmatmul.mubr.bf16.gmra.mrb[0].mxu0 %v1842
    %v1881 = vpop.f32.mrb[0].mxu0
    %v1882 = vadd.f32 0.0, %v1881
    %v1883 = vpop.f32.mrb[0].mxu0
    %v1884 = vpop.f32.mrb[0].mxu0
    %v1885 = vpop.f32.mrb[0].mxu0
    %1886 = vdwg.mxu0
    %1887 = vrot.lane.b32.xlu0 %v1496, 56
    %v1888 = vpop.permute.xlu0 %1887
    %v1890 = vsel %vm208, %v1838, 0
    %v1893 = vsel %vm333, %v1888, 0
    %1895 = vmatprep.subr.bf16.mxu0 0
    %1896 = vmatpush1.bf16.msra.mxu0 %v1893
    %1897 = vmatprep.subr.bf16.mxu0 0
    %1898 = vmatpush1.bf16.msra.mxu0 0
    %1899 = vmatprep.subr.bf16.mxu0 0
    %1900 = vmatpush1.bf16.msra.mxu0 0
    %1901 = vmatprep.subr.bf16.mxu0 0
    %1902 = vmatpush1.bf16.msra.mxu0 0
    %1903 = vmatprep.subr.bf16.mxu0 0
    %1904 = vmatpush1.bf16.msra.mxu0 0
    %1905 = vmatprep.subr.bf16.mxu0 0
    %1906 = vmatpush1.bf16.msra.mxu0 0
    %1907 = vmatprep.subr.bf16.mxu0 0
    %1908 = vmatpush1.bf16.msra.mxu0 0
    %1909 = vmatprep.subr.bf16.mxu0 0
    %1910 = vmatpush1.bf16.msra.mxu0 0
    %1911 = vmatprep.subr.bf16.mxu0 0
    %1912 = vmatpush1.bf16.msra.mxu0 0
    %1913 = vmatprep.subr.bf16.mxu0 0
    %1914 = vmatpush1.bf16.msra.mxu0 0
    %1915 = vmatprep.subr.bf16.mxu0 0
    %1916 = vmatpush1.bf16.msra.mxu0 0
    %1917 = vmatprep.subr.bf16.mxu0 0
    %1918 = vmatpush1.bf16.msra.mxu0 0
    %1919 = vmatprep.subr.bf16.mxu0 0
    %1920 = vmatpush1.bf16.msra.mxu0 0
    %1921 = vmatprep.subr.bf16.mxu0 0
    %1922 = vmatpush1.bf16.msra.mxu0 0
    %1923 = vmatprep.subr.bf16.mxu0 0
    %1924 = vmatpush1.bf16.msra.mxu0 0
    %1925 = vmatprep.subr.bf16.mxu0 0
    %1926 = vmatpush1.bf16.msra.mxu0 0
    %1927 = vmatprep.mubr.bf16.mxu0 0
    %1928 = vmatmul.mubr.bf16.gmra.mrb[0].mxu0 %v1890
    %v1929 = vpop.f32.mrb[0].mxu0
    %v1930 = vadd.f32 0.0, %v1929
    %v1931 = vpop.f32.mrb[0].mxu0
    %v1932 = vpop.f32.mrb[0].mxu0
    %v1933 = vpop.f32.mrb[0].mxu0
    %1934 = vdwg.mxu0
    %1935 = vrot.lane.b32.xlu0 %v1495, 112
    %v1936 = vpop.permute.xlu0 %1935
    %1937 = vrot.lane.b32.xlu0 %v1495, 80
    %v1938 = vpop.permute.xlu0 %1937
    %v1940 = vsel %vm208, %v1936, 0
    %v1943 = vsel %vm208, %v1938, 0
    %1945 = vmatprep.subr.bf16.mxu0 0
    %1946 = vmatpush1.bf16.xpose.msra.mxu0 %v1943
    %1947 = vmatprep.subr.bf16.mxu0 0
    %1948 = vmatpush1.bf16.xpose.msra.mxu0 0
    %1949 = vmatprep.subr.bf16.mxu0 0
    %1950 = vmatpush1.bf16.xpose.msra.mxu0 0
    %1951 = vmatprep.subr.bf16.mxu0 0
    %1952 = vmatpush1.bf16.xpose.msra.mxu0 0
    %1953 = vmatprep.subr.bf16.mxu0 0
    %1954 = vmatpush1.bf16.xpose.msra.mxu0 0
    %1955 = vmatprep.subr.bf16.mxu0 0
    %1956 = vmatpush1.bf16.xpose.msra.mxu0 0
    %1957 = vmatprep.subr.bf16.mxu0 0
    %1958 = vmatpush1.bf16.xpose.msra.mxu0 0
    %1959 = vmatprep.subr.bf16.mxu0 0
    %1960 = vmatpush1.bf16.xpose.msra.mxu0 0
    %1961 = vmatprep.subr.bf16.mxu0 0
    %1962 = vmatpush1.bf16.xpose.msra.mxu0 0
    %1963 = vmatprep.subr.bf16.mxu0 0
    %1964 = vmatpush1.bf16.xpose.msra.mxu0 0
    %1965 = vmatprep.subr.bf16.mxu0 0
    %1966 = vmatpush1.bf16.xpose.msra.mxu0 0
    %1967 = vmatprep.subr.bf16.mxu0 0
    %1968 = vmatpush1.bf16.xpose.msra.mxu0 0
    %1969 = vmatprep.subr.bf16.mxu0 0
    %1970 = vmatpush1.bf16.xpose.msra.mxu0 0
    %1971 = vmatprep.subr.bf16.mxu0 0
    %1972 = vmatpush1.bf16.xpose.msra.mxu0 0
    %1973 = vmatprep.subr.bf16.mxu0 0
    %1974 = vmatpush1.bf16.xpose.msra.mxu0 0
    %1975 = vmatprep.subr.bf16.mxu0 0
    %1976 = vmatpush1.bf16.xpose.msra.mxu0 0
    %1977 = vmatprep.mubr.bf16.mxu0 0
    %1978 = vmatmul.mubr.bf16.gmra.mrb[0].mxu0 %v1940
    %v1979 = vpop.f32.mrb[0].mxu0
    %v1980 = vadd.f32 %v130, %v1979
    %v1981 = vpop.f32.mrb[0].mxu0
    %v1982 = vpop.f32.mrb[0].mxu0
    %v1983 = vpop.f32.mrb[0].mxu0
    %1984 = vdwg.mxu0
    %1985 = vrot.lane.b32.xlu0 %v1496, 112
    %v1986 = vpop.permute.xlu0 %1985
    %1987 = vrot.lane.b32.xlu0 %v1496, 80
    %v1988 = vpop.permute.xlu0 %1987
    %v1990 = vsel %vm208, %v1986, 0
    %v1993 = vsel %vm208, %v1988, 0
    %1995 = vmatprep.subr.bf16.mxu0 0
    %1996 = vmatpush1.bf16.xpose.msra.mxu0 %v1993
    %1997 = vmatprep.subr.bf16.mxu0 0
    %1998 = vmatpush1.bf16.xpose.msra.mxu0 0
    %1999 = vmatprep.subr.bf16.mxu0 0
    %2000 = vmatpush1.bf16.xpose.msra.mxu0 0
    %2001 = vmatprep.subr.bf16.mxu0 0
    %2002 = vmatpush1.bf16.xpose.msra.mxu0 0
    %2003 = vmatprep.subr.bf16.mxu0 0
    %2004 = vmatpush1.bf16.xpose.msra.mxu0 0
    %2005 = vmatprep.subr.bf16.mxu0 0
    %2006 = vmatpush1.bf16.xpose.msra.mxu0 0
    %2007 = vmatprep.subr.bf16.mxu0 0
    %2008 = vmatpush1.bf16.xpose.msra.mxu0 0
    %2009 = vmatprep.subr.bf16.mxu0 0
    %2010 = vmatpush1.bf16.xpose.msra.mxu0 0
    %2011 = vmatprep.subr.bf16.mxu0 0
    %2012 = vmatpush1.bf16.xpose.msra.mxu0 0
    %2013 = vmatprep.subr.bf16.mxu0 0
    %2014 = vmatpush1.bf16.xpose.msra.mxu0 0
    %2015 = vmatprep.subr.bf16.mxu0 0
    %2016 = vmatpush1.bf16.xpose.msra.mxu0 0
    %2017 = vmatprep.subr.bf16.mxu0 0
    %2018 = vmatpush1.bf16.xpose.msra.mxu0 0
    %2019 = vmatprep.subr.bf16.mxu0 0
    %2020 = vmatpush1.bf16.xpose.msra.mxu0 0
    %2021 = vmatprep.subr.bf16.mxu0 0
    %2022 = vmatpush1.bf16.xpose.msra.mxu0 0
    %2023 = vmatprep.subr.bf16.mxu0 0
    %2024 = vmatpush1.bf16.xpose.msra.mxu0 0
    %2025 = vmatprep.subr.bf16.mxu0 0
    %2026 = vmatpush1.bf16.xpose.msra.mxu0 0
    %2027 = vmatprep.mubr.bf16.mxu0 0
    %2028 = vmatmul.mubr.bf16.gmra.mrb[0].mxu0 %v1990
    %v2029 = vpop.f32.mrb[0].mxu0
    %v2030 = vadd.f32 %v134, %v2029
    %v2031 = vpop.f32.mrb[0].mxu0
    %v2032 = vpop.f32.mrb[0].mxu0
    %v2033 = vpop.f32.mrb[0].mxu0
    %2034 = vdwg.mxu0
    %v2035 = vsel %vm208, %v1980, -inf
    %2036 = vmax.xlane.f32.xlu0 %v2035
    %v2037 = vpop.xlane.xlu0 %2036
    %v2038 = vsel %vm208, %v2030, -inf
    %2039 = vmax.xlane.f32.xlu0 %v2038
    %v2040 = vpop.xlane.xlu0 %2039
    %v2041 = vsub.f32 %v1980, %v2037
    %v2042 = vsub.f32 %v2030, %v2040
    %v2043 = vmul.f32 %v2041, 1.442695
    %v2044 = vpow.pop %v2043
    %v2045 = vmul.f32 %v2042, 1.442695
    %v2046 = vpow.pop %v2045
    %v2047 = vsel %vm208, %v2044, 0.0
    %2048 = vadd.xlane.f32.xlu0 %v2047
    %v2049 = vpop.xlane.xlu0 %2048
    %v2050 = vsel %vm208, %v2046, 0.0
    %2051 = vadd.xlane.f32.xlu0 %v2050
    %v2052 = vpop.xlane.xlu0 %2051
    %v2053 = vrcp.pop %v2049
    %v2054 = vrcp.pop %v2052
    %v2055 = vmul.f32 %v2044, %v2053
    %v2056 = vmul.f32 %v2046, %v2054
    %v2057 = vpack.c.bf16 %v2055, %v2055
    %v2058 = vpack.c.bf16 %v2056, %v2056
    %2059 = vrot.lane.b32.xlu0 %v1495, 48
    %v2060 = vpop.permute.xlu0 %2059
    %v2062 = vsel %vm208, %v2057, 0
    %v2065 = vsel %vm333, %v2060, 0
    %2067 = vmatprep.subr.bf16.mxu0 0
    %2068 = vmatpush1.bf16.msra.mxu0 %v2065
    %2069 = vmatprep.subr.bf16.mxu0 0
    %2070 = vmatpush1.bf16.msra.mxu0 0
    %2071 = vmatprep.subr.bf16.mxu0 0
    %2072 = vmatpush1.bf16.msra.mxu0 0
    %2073 = vmatprep.subr.bf16.mxu0 0
    %2074 = vmatpush1.bf16.msra.mxu0 0
    %2075 = vmatprep.subr.bf16.mxu0 0
    %2076 = vmatpush1.bf16.msra.mxu0 0
    %2077 = vmatprep.subr.bf16.mxu0 0
    %2078 = vmatpush1.bf16.msra.mxu0 0
    %2079 = vmatprep.subr.bf16.mxu0 0
    %2080 = vmatpush1.bf16.msra.mxu0 0
    %2081 = vmatprep.subr.bf16.mxu0 0
    %2082 = vmatpush1.bf16.msra.mxu0 0
    %2083 = vmatprep.subr.bf16.mxu0 0
    %2084 = vmatpush1.bf16.msra.mxu0 0
    %2085 = vmatprep.subr.bf16.mxu0 0
    %2086 = vmatpush1.bf16.msra.mxu0 0
    %2087 = vmatprep.subr.bf16.mxu0 0
    %2088 = vmatpush1.bf16.msra.mxu0 0
    %2089 = vmatprep.subr.bf16.mxu0 0
    %2090 = vmatpush1.bf16.msra.mxu0 0
    %2091 = vmatprep.subr.bf16.mxu0 0
    %2092 = vmatpush1.bf16.msra.mxu0 0
    %2093 = vmatprep.subr.bf16.mxu0 0
    %2094 = vmatpush1.bf16.msra.mxu0 0
    %2095 = vmatprep.subr.bf16.mxu0 0
    %2096 = vmatpush1.bf16.msra.mxu0 0
    %2097 = vmatprep.subr.bf16.mxu0 0
    %2098 = vmatpush1.bf16.msra.mxu0 0
    %2099 = vmatprep.mubr.bf16.mxu0 0
    %2100 = vmatmul.mubr.bf16.gmra.mrb[0].mxu0 %v2062
    %v2101 = vpop.f32.mrb[0].mxu0
    %v2102 = vadd.f32 0.0, %v2101
    %v2103 = vpop.f32.mrb[0].mxu0
    %v2104 = vpop.f32.mrb[0].mxu0
    %v2105 = vpop.f32.mrb[0].mxu0
    %2106 = vdwg.mxu0
    %2107 = vrot.lane.b32.xlu0 %v1496, 48
    %v2108 = vpop.permute.xlu0 %2107
    %v2110 = vsel %vm208, %v2058, 0
    %v2113 = vsel %vm333, %v2108, 0
    %2115 = vmatprep.subr.bf16.mxu0 0
    %2116 = vmatpush1.bf16.msra.mxu0 %v2113
    %2117 = vmatprep.subr.bf16.mxu0 0
    %2118 = vmatpush1.bf16.msra.mxu0 0
    %2119 = vmatprep.subr.bf16.mxu0 0
    %2120 = vmatpush1.bf16.msra.mxu0 0
    %2121 = vmatprep.subr.bf16.mxu0 0
    %2122 = vmatpush1.bf16.msra.mxu0 0
    %2123 = vmatprep.subr.bf16.mxu0 0
    %2124 = vmatpush1.bf16.msra.mxu0 0
    %2125 = vmatprep.subr.bf16.mxu0 0
    %2126 = vmatpush1.bf16.msra.mxu0 0
    %2127 = vmatprep.subr.bf16.mxu0 0
    %2128 = vmatpush1.bf16.msra.mxu0 0
    %2129 = vmatprep.subr.bf16.mxu0 0
    %2130 = vmatpush1.bf16.msra.mxu0 0
    %2131 = vmatprep.subr.bf16.mxu0 0
    %2132 = vmatpush1.bf16.msra.mxu0 0
    %2133 = vmatprep.subr.bf16.mxu0 0
    %2134 = vmatpush1.bf16.msra.mxu0 0
    %2135 = vmatprep.subr.bf16.mxu0 0
    %2136 = vmatpush1.bf16.msra.mxu0 0
    %2137 = vmatprep.subr.bf16.mxu0 0
    %2138 = vmatpush1.bf16.msra.mxu0 0
    %2139 = vmatprep.subr.bf16.mxu0 0
    %2140 = vmatpush1.bf16.msra.mxu0 0
    %2141 = vmatprep.subr.bf16.mxu0 0
    %2142 = vmatpush1.bf16.msra.mxu0 0
    %2143 = vmatprep.subr.bf16.mxu0 0
    %2144 = vmatpush1.bf16.msra.mxu0 0
    %2145 = vmatprep.subr.bf16.mxu0 0
    %2146 = vmatpush1.bf16.msra.mxu0 0
    %2147 = vmatprep.mubr.bf16.mxu0 0
    %2148 = vmatmul.mubr.bf16.gmra.mrb[0].mxu0 %v2110
    %v2149 = vpop.f32.mrb[0].mxu0
    %v2150 = vadd.f32 0.0, %v2149
    %v2151 = vpop.f32.mrb[0].mxu0
    %v2152 = vpop.f32.mrb[0].mxu0
    %v2153 = vpop.f32.mrb[0].mxu0
    %2154 = vdwg.mxu0
    %2155 = vrot.lane.b32.xlu0 %v1495, 104
    %v2156 = vpop.permute.xlu0 %2155
    %2157 = vrot.lane.b32.xlu0 %v1495, 72
    %v2158 = vpop.permute.xlu0 %2157
    %v2160 = vsel %vm208, %v2156, 0
    %v2163 = vsel %vm208, %v2158, 0
    %2165 = vmatprep.subr.bf16.mxu0 0
    %2166 = vmatpush1.bf16.xpose.msra.mxu0 %v2163
    %2167 = vmatprep.subr.bf16.mxu0 0
    %2168 = vmatpush1.bf16.xpose.msra.mxu0 0
    %2169 = vmatprep.subr.bf16.mxu0 0
    %2170 = vmatpush1.bf16.xpose.msra.mxu0 0
    %2171 = vmatprep.subr.bf16.mxu0 0
    %2172 = vmatpush1.bf16.xpose.msra.mxu0 0
    %2173 = vmatprep.subr.bf16.mxu0 0
    %2174 = vmatpush1.bf16.xpose.msra.mxu0 0
    %2175 = vmatprep.subr.bf16.mxu0 0
    %2176 = vmatpush1.bf16.xpose.msra.mxu0 0
    %2177 = vmatprep.subr.bf16.mxu0 0
    %2178 = vmatpush1.bf16.xpose.msra.mxu0 0
    %2179 = vmatprep.subr.bf16.mxu0 0
    %2180 = vmatpush1.bf16.xpose.msra.mxu0 0
    %2181 = vmatprep.subr.bf16.mxu0 0
    %2182 = vmatpush1.bf16.xpose.msra.mxu0 0
    %2183 = vmatprep.subr.bf16.mxu0 0
    %2184 = vmatpush1.bf16.xpose.msra.mxu0 0
    %2185 = vmatprep.subr.bf16.mxu0 0
    %2186 = vmatpush1.bf16.xpose.msra.mxu0 0
    %2187 = vmatprep.subr.bf16.mxu0 0
    %2188 = vmatpush1.bf16.xpose.msra.mxu0 0
    %2189 = vmatprep.subr.bf16.mxu0 0
    %2190 = vmatpush1.bf16.xpose.msra.mxu0 0
    %2191 = vmatprep.subr.bf16.mxu0 0
    %2192 = vmatpush1.bf16.xpose.msra.mxu0 0
    %2193 = vmatprep.subr.bf16.mxu0 0
    %2194 = vmatpush1.bf16.xpose.msra.mxu0 0
    %2195 = vmatprep.subr.bf16.mxu0 0
    %2196 = vmatpush1.bf16.xpose.msra.mxu0 0
    %2197 = vmatprep.mubr.bf16.mxu0 0
    %2198 = vmatmul.mubr.bf16.gmra.mrb[0].mxu0 %v2160
    %v2199 = vpop.f32.mrb[0].mxu0
    %v2200 = vadd.f32 %v130, %v2199
    %v2201 = vpop.f32.mrb[0].mxu0
    %v2202 = vpop.f32.mrb[0].mxu0
    %v2203 = vpop.f32.mrb[0].mxu0
    %2204 = vdwg.mxu0
    %2205 = vrot.lane.b32.xlu0 %v1496, 104
    %v2206 = vpop.permute.xlu0 %2205
    %2207 = vrot.lane.b32.xlu0 %v1496, 72
    %v2208 = vpop.permute.xlu0 %2207
    %v2210 = vsel %vm208, %v2206, 0
    %v2213 = vsel %vm208, %v2208, 0
    %2215 = vmatprep.subr.bf16.mxu0 0
    %2216 = vmatpush1.bf16.xpose.msra.mxu0 %v2213
    %2217 = vmatprep.subr.bf16.mxu0 0
    %2218 = vmatpush1.bf16.xpose.msra.mxu0 0
    %2219 = vmatprep.subr.bf16.mxu0 0
    %2220 = vmatpush1.bf16.xpose.msra.mxu0 0
    %2221 = vmatprep.subr.bf16.mxu0 0
    %2222 = vmatpush1.bf16.xpose.msra.mxu0 0
    %2223 = vmatprep.subr.bf16.mxu0 0
    %2224 = vmatpush1.bf16.xpose.msra.mxu0 0
    %2225 = vmatprep.subr.bf16.mxu0 0
    %2226 = vmatpush1.bf16.xpose.msra.mxu0 0
    %2227 = vmatprep.subr.bf16.mxu0 0
    %2228 = vmatpush1.bf16.xpose.msra.mxu0 0
    %2229 = vmatprep.subr.bf16.mxu0 0
    %2230 = vmatpush1.bf16.xpose.msra.mxu0 0
    %2231 = vmatprep.subr.bf16.mxu0 0
    %2232 = vmatpush1.bf16.xpose.msra.mxu0 0
    %2233 = vmatprep.subr.bf16.mxu0 0
    %2234 = vmatpush1.bf16.xpose.msra.mxu0 0
    %2235 = vmatprep.subr.bf16.mxu0 0
    %2236 = vmatpush1.bf16.xpose.msra.mxu0 0
    %2237 = vmatprep.subr.bf16.mxu0 0
    %2238 = vmatpush1.bf16.xpose.msra.mxu0 0
    %2239 = vmatprep.subr.bf16.mxu0 0
    %2240 = vmatpush1.bf16.xpose.msra.mxu0 0
    %2241 = vmatprep.subr.bf16.mxu0 0
    %2242 = vmatpush1.bf16.xpose.msra.mxu0 0
    %2243 = vmatprep.subr.bf16.mxu0 0
    %2244 = vmatpush1.bf16.xpose.msra.mxu0 0
    %2245 = vmatprep.subr.bf16.mxu0 0
    %2246 = vmatpush1.bf16.xpose.msra.mxu0 0
    %2247 = vmatprep.mubr.bf16.mxu0 0
    %2248 = vmatmul.mubr.bf16.gmra.mrb[0].mxu0 %v2210
    %v2249 = vpop.f32.mrb[0].mxu0
    %v2250 = vadd.f32 %v134, %v2249
    %v2251 = vpop.f32.mrb[0].mxu0
    %v2252 = vpop.f32.mrb[0].mxu0
    %v2253 = vpop.f32.mrb[0].mxu0
    %2254 = vdwg.mxu0
    %v2255 = vsel %vm208, %v2200, -inf
    %2256 = vmax.xlane.f32.xlu0 %v2255
    %v2257 = vpop.xlane.xlu0 %2256
    %v2258 = vsel %vm208, %v2250, -inf
    %2259 = vmax.xlane.f32.xlu0 %v2258
    %v2260 = vpop.xlane.xlu0 %2259
    %v2261 = vsub.f32 %v2200, %v2257
    %v2262 = vsub.f32 %v2250, %v2260
    %v2263 = vmul.f32 %v2261, 1.442695
    %v2264 = vpow.pop %v2263
    %v2265 = vmul.f32 %v2262, 1.442695
    %v2266 = vpow.pop %v2265
    %v2267 = vsel %vm208, %v2264, 0.0
    %2268 = vadd.xlane.f32.xlu0 %v2267
    %v2269 = vpop.xlane.xlu0 %2268
    %v2270 = vsel %vm208, %v2266, 0.0
    %2271 = vadd.xlane.f32.xlu0 %v2270
    %v2272 = vpop.xlane.xlu0 %2271
    %v2273 = vrcp.pop %v2269
    %v2274 = vrcp.pop %v2272
    %v2275 = vmul.f32 %v2264, %v2273
    %v2276 = vmul.f32 %v2266, %v2274
    %v2277 = vpack.c.bf16 %v2275, %v2275
    %v2278 = vpack.c.bf16 %v2276, %v2276
    %2279 = vrot.lane.b32.xlu0 %v1495, 40
    %v2280 = vpop.permute.xlu0 %2279
    %v2282 = vsel %vm208, %v2277, 0
    %v2285 = vsel %vm333, %v2280, 0
    %2287 = vmatprep.subr.bf16.mxu0 0
    %2288 = vmatpush1.bf16.msra.mxu0 %v2285
    %2289 = vmatprep.subr.bf16.mxu0 0
    %2290 = vmatpush1.bf16.msra.mxu0 0
    %2291 = vmatprep.subr.bf16.mxu0 0
    %2292 = vmatpush1.bf16.msra.mxu0 0
    %2293 = vmatprep.subr.bf16.mxu0 0
    %2294 = vmatpush1.bf16.msra.mxu0 0
    %2295 = vmatprep.subr.bf16.mxu0 0
    %2296 = vmatpush1.bf16.msra.mxu0 0
    %2297 = vmatprep.subr.bf16.mxu0 0
    %2298 = vmatpush1.bf16.msra.mxu0 0
    %2299 = vmatprep.subr.bf16.mxu0 0
    %2300 = vmatpush1.bf16.msra.mxu0 0
    %2301 = vmatprep.subr.bf16.mxu0 0
    %2302 = vmatpush1.bf16.msra.mxu0 0
    %2303 = vmatprep.subr.bf16.mxu0 0
    %2304 = vmatpush1.bf16.msra.mxu0 0
    %2305 = vmatprep.subr.bf16.mxu0 0
    %2306 = vmatpush1.bf16.msra.mxu0 0
    %2307 = vmatprep.subr.bf16.mxu0 0
    %2308 = vmatpush1.bf16.msra.mxu0 0
    %2309 = vmatprep.subr.bf16.mxu0 0
    %2310 = vmatpush1.bf16.msra.mxu0 0
    %2311 = vmatprep.subr.bf16.mxu0 0
    %2312 = vmatpush1.bf16.msra.mxu0 0
    %2313 = vmatprep.subr.bf16.mxu0 0
    %2314 = vmatpush1.bf16.msra.mxu0 0
    %2315 = vmatprep.subr.bf16.mxu0 0
    %2316 = vmatpush1.bf16.msra.mxu0 0
    %2317 = vmatprep.subr.bf16.mxu0 0
    %2318 = vmatpush1.bf16.msra.mxu0 0
    %2319 = vmatprep.mubr.bf16.mxu0 0
    %2320 = vmatmul.mubr.bf16.gmra.mrb[0].mxu0 %v2282
    %v2321 = vpop.f32.mrb[0].mxu0
    %v2322 = vadd.f32 0.0, %v2321
    %v2323 = vpop.f32.mrb[0].mxu0
    %v2324 = vpop.f32.mrb[0].mxu0
    %v2325 = vpop.f32.mrb[0].mxu0
    %2326 = vdwg.mxu0
    %2327 = vrot.lane.b32.xlu0 %v1496, 40
    %v2328 = vpop.permute.xlu0 %2327
    %v2330 = vsel %vm208, %v2278, 0
    %v2333 = vsel %vm333, %v2328, 0
    %2335 = vmatprep.subr.bf16.mxu0 0
    %2336 = vmatpush1.bf16.msra.mxu0 %v2333
    %2337 = vmatprep.subr.bf16.mxu0 0
    %2338 = vmatpush1.bf16.msra.mxu0 0
    %2339 = vmatprep.subr.bf16.mxu0 0
    %2340 = vmatpush1.bf16.msra.mxu0 0
    %2341 = vmatprep.subr.bf16.mxu0 0
    %2342 = vmatpush1.bf16.msra.mxu0 0
    %2343 = vmatprep.subr.bf16.mxu0 0
    %2344 = vmatpush1.bf16.msra.mxu0 0
    %2345 = vmatprep.subr.bf16.mxu0 0
    %2346 = vmatpush1.bf16.msra.mxu0 0
    %2347 = vmatprep.subr.bf16.mxu0 0
    %2348 = vmatpush1.bf16.msra.mxu0 0
    %2349 = vmatprep.subr.bf16.mxu0 0
    %2350 = vmatpush1.bf16.msra.mxu0 0
    %2351 = vmatprep.subr.bf16.mxu0 0
    %2352 = vmatpush1.bf16.msra.mxu0 0
    %2353 = vmatprep.subr.bf16.mxu0 0
    %2354 = vmatpush1.bf16.msra.mxu0 0
    %2355 = vmatprep.subr.bf16.mxu0 0
    %2356 = vmatpush1.bf16.msra.mxu0 0
    %2357 = vmatprep.subr.bf16.mxu0 0
    %2358 = vmatpush1.bf16.msra.mxu0 0
    %2359 = vmatprep.subr.bf16.mxu0 0
    %2360 = vmatpush1.bf16.msra.mxu0 0
    %2361 = vmatprep.subr.bf16.mxu0 0
    %2362 = vmatpush1.bf16.msra.mxu0 0
    %2363 = vmatprep.subr.bf16.mxu0 0
    %2364 = vmatpush1.bf16.msra.mxu0 0
    %2365 = vmatprep.subr.bf16.mxu0 0
    %2366 = vmatpush1.bf16.msra.mxu0 0
    %2367 = vmatprep.mubr.bf16.mxu0 0
    %2368 = vmatmul.mubr.bf16.gmra.mrb[0].mxu0 %v2330
    %v2369 = vpop.f32.mrb[0].mxu0
    %v2370 = vadd.f32 0.0, %v2369
    %v2371 = vpop.f32.mrb[0].mxu0
    %v2372 = vpop.f32.mrb[0].mxu0
    %v2373 = vpop.f32.mrb[0].mxu0
    %2374 = vdwg.mxu0
    %2377 = vrot.lane.b32.xlu0 %v1882, 8
    %v2378 = vpop.permute.xlu0 %2377
    %2379 = vrot.lane.b32.xlu0 %v1930, 8
    %v2380 = vpop.permute.xlu0 %2379
    %2385 = vrot.lane.b32.xlu0 %v2102, 16
    %v2386 = vpop.permute.xlu0 %2385
    %2387 = vrot.lane.b32.xlu0 %v2150, 16
    %v2388 = vpop.permute.xlu0 %2387
    %2393 = vrot.lane.b32.xlu0 %v2322, 24
    %v2394 = vpop.permute.xlu0 %2393
    %2395 = vrot.lane.b32.xlu0 %v2370, 24
    %v2396 = vpop.permute.xlu0 %2395
    %v2399 = vsel %vm208, %v1662, %v2378
    %v2400 = vsel %vm208, %v1710, %v2380
    %v2401 = vsel %vm1111, %v2399, %v2386
    %v2402 = vsel %vm1111, %v2400, %v2388
    %v2403 = vsel %vm1114, %v2401, %v2394
    %v2404 = vsel %vm1114, %v2402, %v2396
    %v2405 = vpack.c.bf16 %v2404, %v2403
    %s2406 = scalar_lea.vmem %s5, 16
    %v2407 = vld [vmem:[%s2406] sm:$0xf]
    %v2408 = vld [vmem:[%s2406 + $0x4] sm:$0xf]
    %v2409 = vld [vmem:[%s2406 + $0x8] sm:$0xf]
    %v2410 = vld [vmem:[%s2406 + $0xc] sm:$0xf]
    %v2411 = vlaneseq
    %v2412 = vshrl.u32 %v2411, 7
    %v2413 = vsub.s32 1, %v2412
    %v2414 = vrot.slane %v1428, %v2413
    %v2419 = vunpack.c.l.b16 %v2407
    %v2420 = vunpack.c.l.b16 %v2408
    %v2421 = vunpack.c.l.b16 %v2409
    %v2422 = vunpack.c.l.b16 %v2410
    %v2423 = vpack.c.b16 %v2420, %v2419
    %v2424 = vpack.c.b16 %v2422, %v2421
    %v2428 = vsel %vm79, %v2405, 0
    %2430 = vmatprep.subr.bf16.mxu0 0
    %2431 = vmatpush1.bf16.msra.mxu0 %v2423
    %2432 = vmatprep.subr.bf16.mxu0 0
    %2433 = vmatpush1.bf16.msra.mxu0 %v2424
    %2434 = vmatprep.subr.bf16.mxu0 0
    %2435 = vmatpush1.bf16.msra.mxu0 0
    %2436 = vmatprep.subr.bf16.mxu0 0
    %2437 = vmatpush1.bf16.msra.mxu0 0
    %2438 = vmatprep.subr.bf16.mxu0 0
    %2439 = vmatpush1.bf16.msra.mxu0 0
    %2440 = vmatprep.subr.bf16.mxu0 0
    %2441 = vmatpush1.bf16.msra.mxu0 0
    %2442 = vmatprep.subr.bf16.mxu0 0
    %2443 = vmatpush1.bf16.msra.mxu0 0
    %2444 = vmatprep.subr.bf16.mxu0 0
    %2445 = vmatpush1.bf16.msra.mxu0 0
    %2446 = vmatprep.subr.bf16.mxu0 0
    %2447 = vmatpush1.bf16.msra.mxu0 0
    %2448 = vmatprep.subr.bf16.mxu0 0
    %2449 = vmatpush1.bf16.msra.mxu0 0
    %2450 = vmatprep.subr.bf16.mxu0 0
    %2451 = vmatpush1.bf16.msra.mxu0 0
    %2452 = vmatprep.subr.bf16.mxu0 0
    %2453 = vmatpush1.bf16.msra.mxu0 0
    %2454 = vmatprep.subr.bf16.mxu0 0
    %2455 = vmatpush1.bf16.msra.mxu0 0
    %2456 = vmatprep.subr.bf16.mxu0 0
    %2457 = vmatpush1.bf16.msra.mxu0 0
    %2458 = vmatprep.subr.bf16.mxu0 0
    %2459 = vmatpush1.bf16.msra.mxu0 0
    %2460 = vmatprep.subr.bf16.mxu0 0
    %2461 = vmatpush1.bf16.msra.mxu0 0
    %2462 = vmatprep.mubr.bf16.mxu0 0
    %2463 = vmatmul.mubr.bf16.gmra.mrb[0].mxu0 %v2428
    %v2464 = vpop.f32.mrb[0].mxu0
    %v2465 = vadd.f32 %v2414, %v2464
    %v2466 = vpop.f32.mrb[0].mxu0
    %v2467 = vpop.f32.mrb[0].mxu0
    %v2468 = vadd.f32 %v2414, %v2467
    %v2469 = vpop.f32.mrb[0].mxu0
    %2470 = vdwg.mxu0
    %v2471 = vadd.f32 %v1425, %v2465
    %v2472 = vadd.f32 %v1426, %v2468
    %v2473 = vsel %vm79, %v2471, 0.0
    %2474 = vadd.xlane.f32.xlu0 %v2473
    %v2475 = vpop.xlane.xlu0 %2474
    %v2476 = vsel %vm79, %v2472, 0.0
    %2477 = vadd.xlane.f32.xlu0 %v2476
    %v2478 = vpop.xlane.xlu0 %2477
    %v2479 = vmul.f32 %v2475, %v86
    %v2480 = vmul.f32 %v2478, %v86
    %v2481 = vsub.f32 %v2471, %v2479
    %v2482 = vsub.f32 %v2472, %v2480
    %v2483 = vmul.f32 %v2481, %v2481
    %v2484 = vmul.f32 %v2482, %v2482
    %v2485 = vsel %vm79, %v2483, 0.0
    %2486 = vadd.xlane.f32.xlu0 %v2485
    %v2487 = vpop.xlane.xlu0 %2486
    %v2488 = vsel %vm79, %v2484, 0.0
    %2489 = vadd.xlane.f32.xlu0 %v2488
    %v2490 = vpop.xlane.xlu0 %2489
    %v2491 = vmul.f32 %v2487, %v86
    %v2492 = vmul.f32 %v2490, %v86
    %v2493 = vadd.f32 %v2491, 1e-12
    %v2494 = vadd.f32 %v2492, 1e-12
    %v2495 = vrsqrt.pop %v2493
    %v2496 = vrsqrt.pop %v2494
    %v2497 = vmul.f32 %v2481, %v2495
    %v2498 = vmul.f32 %v2482, %v2496
    %v2499 = vlaneseq
    %v2500 = vshrl.u32 %v2499, 7
    %v2501 = vsub.s32 4, %v2500
    %v2502 = vrot.slane %v1428, %v2501
    %v2503 = vmul.f32 %v2497, %v2502
    %v2504 = vmul.f32 %v2498, %v2502
    %v2505 = vlaneseq
    %v2506 = vshrl.u32 %v2505, 7
    %v2507 = vsub.s32 5, %v2506
    %v2508 = vrot.slane %v1428, %v2507
    %v2509 = vadd.f32 %v2503, %v2508
    %v2510 = vadd.f32 %v2504, %v2508
    %v2511 = vpack.c.bf16 %v2510, %v2509
    %s2512 = scalar_lea.vmem %s6, 16
    %v2513 = vld [vmem:[%s2512] sm:$0xf]
    %v2514 = vld [vmem:[%s2512 + $0x4] sm:$0xf]
    %v2515 = vld [vmem:[%s2512 + $0x8] sm:$0xf]
    %v2516 = vld [vmem:[%s2512 + $0xc] sm:$0xf]
    %v2517 = vlaneseq
    %v2518 = vshrl.u32 %v2517, 7
    %v2519 = vsub.s32 2, %v2518
    %v2520 = vrot.slane %v1428, %v2519
    %v2525 = vunpack.c.l.b16 %v2513
    %v2526 = vunpack.c.l.b16 %v2514
    %v2527 = vunpack.c.l.b16 %v2515
    %v2528 = vunpack.c.l.b16 %v2516
    %v2529 = vpack.c.b16 %v2526, %v2525
    %v2530 = vpack.c.b16 %v2528, %v2527
    %v2534 = vsel %vm79, %v2511, 0
    %2536 = vmatprep.subr.bf16.mxu0 0
    %2537 = vmatpush1.bf16.msra.mxu0 %v2529
    %2538 = vmatprep.subr.bf16.mxu0 0
    %2539 = vmatpush1.bf16.msra.mxu0 %v2530
    %2540 = vmatprep.subr.bf16.mxu0 0
    %2541 = vmatpush1.bf16.msra.mxu0 0
    %2542 = vmatprep.subr.bf16.mxu0 0
    %2543 = vmatpush1.bf16.msra.mxu0 0
    %2544 = vmatprep.subr.bf16.mxu0 0
    %2545 = vmatpush1.bf16.msra.mxu0 0
    %2546 = vmatprep.subr.bf16.mxu0 0
    %2547 = vmatpush1.bf16.msra.mxu0 0
    %2548 = vmatprep.subr.bf16.mxu0 0
    %2549 = vmatpush1.bf16.msra.mxu0 0
    %2550 = vmatprep.subr.bf16.mxu0 0
    %2551 = vmatpush1.bf16.msra.mxu0 0
    %2552 = vmatprep.subr.bf16.mxu0 0
    %2553 = vmatpush1.bf16.msra.mxu0 0
    %2554 = vmatprep.subr.bf16.mxu0 0
    %2555 = vmatpush1.bf16.msra.mxu0 0
    %2556 = vmatprep.subr.bf16.mxu0 0
    %2557 = vmatpush1.bf16.msra.mxu0 0
    %2558 = vmatprep.subr.bf16.mxu0 0
    %2559 = vmatpush1.bf16.msra.mxu0 0
    %2560 = vmatprep.subr.bf16.mxu0 0
    %2561 = vmatpush1.bf16.msra.mxu0 0
    %2562 = vmatprep.subr.bf16.mxu0 0
    %2563 = vmatpush1.bf16.msra.mxu0 0
    %2564 = vmatprep.subr.bf16.mxu0 0
    %2565 = vmatpush1.bf16.msra.mxu0 0
    %2566 = vmatprep.subr.bf16.mxu0 0
    %2567 = vmatpush1.bf16.msra.mxu0 0
    %2568 = vmatprep.mubr.bf16.mxu0 0
    %2569 = vmatmul.mubr.bf16.gmra.mrb[0].mxu0 %v2534
    %v2570 = vpop.f32.mrb[0].mxu0
    %v2571 = vadd.f32 %v2520, %v2570
    %v2572 = vpop.f32.mrb[0].mxu0
    %v2573 = vpop.f32.mrb[0].mxu0
    %v2574 = vadd.f32 %v2520, %v2573
    %v2575 = vpop.f32.mrb[0].mxu0
    %2576 = vdwg.mxu0
    %v2577 = vmul.f32 %v2571, 0.5
    %v2578 = vmul.f32 %v2574, 0.5
    %v2579 = vmul.f32 %v2571, 0.044715
    %v2580 = vmul.f32 %v2574, 0.044715
    %v2581 = vmul.f32 %v2579, %v2571
    %v2582 = vmul.f32 %v2580, %v2574
    %v2583 = vmul.f32 %v2581, %v2571
    %v2584 = vmul.f32 %v2582, %v2574
    %v2585 = vadd.f32 %v2571, %v2583
    %v2586 = vadd.f32 %v2574, %v2584
    %v2587 = vmul.f32 %v2585, 0.7978846
    %v2588 = vmul.f32 %v2586, 0.7978846
    %v2589 = vtanh.pop %v2587
    %v2590 = vtanh.pop %v2588
    %v2591 = vadd.f32 %v2589, 1.0
    %v2592 = vadd.f32 %v2590, 1.0
    %v2593 = vmul.f32 %v2577, %v2591
    %v2594 = vmul.f32 %v2578, %v2592
    %v2595 = vpack.c.bf16 %v2594, %v2593
    %s2596 = scalar_lea.vmem %s7, 32
    %v2597 = vld [vmem:[%s2596] sm:$0xf]
    %v2598 = vld [vmem:[%s2596 + $0x4] sm:$0xf]
    %v2599 = vld [vmem:[%s2596 + $0x8] sm:$0xf]
    %v2600 = vld [vmem:[%s2596 + $0xc] sm:$0xf]
    %v2601 = vld [vmem:[%s2596 + $0x10] sm:$0xf]
    %v2602 = vld [vmem:[%s2596 + $0x14] sm:$0xf]
    %v2603 = vld [vmem:[%s2596 + $0x18] sm:$0xf]
    %v2604 = vld [vmem:[%s2596 + $0x1c] sm:$0xf]
    %v2605 = vlaneseq
    %v2606 = vshrl.u32 %v2605, 7
    %v2607 = vsub.s32 3, %v2606
    %v2608 = vrot.slane %v1428, %v2607
    %v2617 = vunpack.c.l.b16 %v2597
    %v2618 = vunpack.c.l.b16 %v2598
    %v2619 = vunpack.c.l.b16 %v2599
    %v2620 = vunpack.c.l.b16 %v2600
    %v2621 = vunpack.c.l.b16 %v2601
    %v2622 = vunpack.c.l.b16 %v2602
    %v2623 = vunpack.c.l.b16 %v2603
    %v2624 = vunpack.c.l.b16 %v2604
    %v2625 = vpack.c.b16 %v2618, %v2617
    %v2626 = vpack.c.b16 %v2620, %v2619
    %v2627 = vpack.c.b16 %v2622, %v2621
    %v2628 = vpack.c.b16 %v2624, %v2623
    %v2634 = vsel %vm1342, %v2595, 0
    %2636 = vmatprep.subr.bf16.mxu0 0
    %2637 = vmatpush1.bf16.msra.mxu0 %v2625
    %2638 = vmatprep.subr.bf16.mxu0 0
    %2639 = vmatpush1.bf16.msra.mxu0 %v2626
    %2640 = vmatprep.subr.bf16.mxu0 0
    %2641 = vmatpush1.bf16.msra.mxu0 %v2627
    %2642 = vmatprep.subr.bf16.mxu0 0
    %2643 = vmatpush1.bf16.msra.mxu0 %v2628
    %2644 = vmatprep.subr.bf16.mxu0 0
    %2645 = vmatpush1.bf16.msra.mxu0 0
    %2646 = vmatprep.subr.bf16.mxu0 0
    %2647 = vmatpush1.bf16.msra.mxu0 0
    %2648 = vmatprep.subr.bf16.mxu0 0
    %2649 = vmatpush1.bf16.msra.mxu0 0
    %2650 = vmatprep.subr.bf16.mxu0 0
    %2651 = vmatpush1.bf16.msra.mxu0 0
    %2652 = vmatprep.subr.bf16.mxu0 0
    %2653 = vmatpush1.bf16.msra.mxu0 0
    %2654 = vmatprep.subr.bf16.mxu0 0
    %2655 = vmatpush1.bf16.msra.mxu0 0
    %2656 = vmatprep.subr.bf16.mxu0 0
    %2657 = vmatpush1.bf16.msra.mxu0 0
    %2658 = vmatprep.subr.bf16.mxu0 0
    %2659 = vmatpush1.bf16.msra.mxu0 0
    %2660 = vmatprep.subr.bf16.mxu0 0
    %2661 = vmatpush1.bf16.msra.mxu0 0
    %2662 = vmatprep.subr.bf16.mxu0 0
    %2663 = vmatpush1.bf16.msra.mxu0 0
    %2664 = vmatprep.subr.bf16.mxu0 0
    %2665 = vmatpush1.bf16.msra.mxu0 0
    %2666 = vmatprep.subr.bf16.mxu0 0
    %2667 = vmatpush1.bf16.msra.mxu0 0
    %2668 = vmatprep.mubr.bf16.mxu0 0
    %2669 = vmatmul.mubr.bf16.gmra.mrb[0].mxu0 %v2634
    %v2670 = vpop.f32.mrb[0].mxu0
    %v2671 = vadd.f32 %v2608, %v2670
    %v2672 = vpop.f32.mrb[0].mxu0
    %v2673 = vpop.f32.mrb[0].mxu0
    %v2674 = vadd.f32 %v2608, %v2673
    %v2675 = vpop.f32.mrb[0].mxu0
    %2676 = vdwg.mxu0
    %v2677 = vadd.f32 %v2509, %v2671
    %v2678 = vadd.f32 %v2510, %v2674
    %v2679 = vsel %vm79, %v2677, 0.0
    %2680 = vadd.xlane.f32.xlu0 %v2679
    %v2681 = vpop.xlane.xlu0 %2680
    %v2682 = vsel %vm79, %v2678, 0.0
    %2683 = vadd.xlane.f32.xlu0 %v2682
    %v2684 = vpop.xlane.xlu0 %2683
    %v2685 = vmul.f32 %v2681, %v86
    %v2686 = vmul.f32 %v2684, %v86
    %v2687 = vsub.f32 %v2677, %v2685
    %v2688 = vsub.f32 %v2678, %v2686
    %v2689 = vmul.f32 %v2687, %v2687
    %v2690 = vmul.f32 %v2688, %v2688
    %v2691 = vsel %vm79, %v2689, 0.0
    %2692 = vadd.xlane.f32.xlu0 %v2691
    %v2693 = vpop.xlane.xlu0 %2692
    %v2694 = vsel %vm79, %v2690, 0.0
    %2695 = vadd.xlane.f32.xlu0 %v2694
    %v2696 = vpop.xlane.xlu0 %2695
    %v2697 = vmul.f32 %v2693, %v86
    %v2698 = vmul.f32 %v2696, %v86
    %v2699 = vadd.f32 %v2697, 1e-12
    %v2700 = vadd.f32 %v2698, 1e-12
    %v2701 = vrsqrt.pop %v2699
    %v2702 = vrsqrt.pop %v2700
    %v2703 = vmul.f32 %v2687, %v2701
    %v2704 = vmul.f32 %v2688, %v2702
    %v2705 = vlaneseq
    %v2706 = vshrl.u32 %v2705, 7
    %v2707 = vsub.s32 6, %v2706
    %v2708 = vrot.slane %v1428, %v2707
    %v2709 = vmul.f32 %v2703, %v2708
    %v2710 = vmul.f32 %v2704, %v2708
    %v2711 = vlaneseq
    %v2712 = vshrl.u32 %v2711, 7
    %v2713 = vsub.s32 7, %v2712
    %v2714 = vrot.slane %v1428, %v2713
    %v2715 = vadd.f32 %v2709, %v2714
    %v2716 = vadd.f32 %v2710, %v2714
    %v2719 = vrot.slane %v2716, 7
    %vm2720 = vcmask 1041409
    %v2721 = vsel %vm2720, %v2719, %v2715
    %vm2723 = vcmask 1041408
    %v2724 = vsel %vm2723, %v2721, 0.0
    %v2725 = vpack.c.bf16 %v2724, %v2724
    %v2726 = vld [vmem:[%s8] sm:$0xf]
    %v2727 = vld [vmem:[%s8 + $0x4] sm:$0xf]
    %v2728 = vld [vmem:[%s8 + $0x8] sm:$0xf]
    %v2729 = vld [vmem:[%s8 + $0xc] sm:$0xf]
    %v2730 = vlaneseq
    %v2731 = vshrl.u32 %v2730, 7
    %v2732 = vsub.s32 2, %v2731
    %v2733 = vrot.slane %v76, %v2732
    %v2738 = vunpack.c.l.b16 %v2726
    %v2739 = vunpack.c.l.b16 %v2727
    %v2740 = vunpack.c.l.b16 %v2728
    %v2741 = vunpack.c.l.b16 %v2729
    %v2742 = vpack.c.b16 %v2739, %v2738
    %v2743 = vpack.c.b16 %v2741, %v2740
    %v2747 = vsel %vm79, %v2725, 0
    %2749 = vmatprep.subr.bf16.mxu0 0
    %2750 = vmatpush1.bf16.msra.mxu0 %v2742
    %2751 = vmatprep.subr.bf16.mxu0 0
    %2752 = vmatpush1.bf16.msra.mxu0 %v2743
    %2753 = vmatprep.subr.bf16.mxu0 0
    %2754 = vmatpush1.bf16.msra.mxu0 0
    %2755 = vmatprep.subr.bf16.mxu0 0
    %2756 = vmatpush1.bf16.msra.mxu0 0
    %2757 = vmatprep.subr.bf16.mxu0 0
    %2758 = vmatpush1.bf16.msra.mxu0 0
    %2759 = vmatprep.subr.bf16.mxu0 0
    %2760 = vmatpush1.bf16.msra.mxu0 0
    %2761 = vmatprep.subr.bf16.mxu0 0
    %2762 = vmatpush1.bf16.msra.mxu0 0
    %2763 = vmatprep.subr.bf16.mxu0 0
    %2764 = vmatpush1.bf16.msra.mxu0 0
    %2765 = vmatprep.subr.bf16.mxu0 0
    %2766 = vmatpush1.bf16.msra.mxu0 0
    %2767 = vmatprep.subr.bf16.mxu0 0
    %2768 = vmatpush1.bf16.msra.mxu0 0
    %2769 = vmatprep.subr.bf16.mxu0 0
    %2770 = vmatpush1.bf16.msra.mxu0 0
    %2771 = vmatprep.subr.bf16.mxu0 0
    %2772 = vmatpush1.bf16.msra.mxu0 0
    %2773 = vmatprep.subr.bf16.mxu0 0
    %2774 = vmatpush1.bf16.msra.mxu0 0
    %2775 = vmatprep.subr.bf16.mxu0 0
    %2776 = vmatpush1.bf16.msra.mxu0 0
    %2777 = vmatprep.subr.bf16.mxu0 0
    %2778 = vmatpush1.bf16.msra.mxu0 0
    %2779 = vmatprep.subr.bf16.mxu0 0
    %2780 = vmatpush1.bf16.msra.mxu0 0
    %2781 = vmatprep.mubr.bf16.mxu0 0
    %2782 = vmatmul.mubr.bf16.gmra.mrb[0].mxu0 %v2747
    %v2783 = vpop.f32.mrb[0].mxu0
    %v2784 = vadd.f32 %v2733, %v2783
    %v2785 = vpop.f32.mrb[0].mxu0
    %v2786 = vpop.f32.mrb[0].mxu0
    %v2787 = vpop.f32.mrb[0].mxu0
    %2788 = vdwg.mxu0
    %v2789 = vtanh.pop %v2784
    %v2790 = vpack.c.bf16 %v2789, %v2789
    %v2791 = vld [vmem:[%s9] sm:$0xf]
    %v2792 = vld [vmem:[%s9 + $0x4] sm:$0xf]
    %v2793 = vld [vmem:[%s9 + $0x8] sm:$0xf]
    %v2794 = vld [vmem:[%s9 + $0xc] sm:$0xf]
    %v2795 = vlaneseq
    %v2796 = vshrl.u32 %v2795, 7
    %v2797 = vsub.s32 3, %v2796
    %v2798 = vrot.slane %v76, %v2797
    %v2803 = vunpack.c.l.b16 %v2791
    %v2804 = vunpack.c.l.b16 %v2792
    %v2805 = vunpack.c.l.b16 %v2793
    %v2806 = vunpack.c.l.b16 %v2794
    %v2807 = vpack.c.b16 %v2804, %v2803
    %v2808 = vpack.c.b16 %v2806, %v2805
    %v2812 = vsel %vm79, %v2790, 0
    %2814 = vmatprep.subr.bf16.mxu0 0
    %2815 = vmatpush1.bf16.msra.mxu0 %v2807
    %2816 = vmatprep.subr.bf16.mxu0 0
    %2817 = vmatpush1.bf16.msra.mxu0 %v2808
    %2818 = vmatprep.subr.bf16.mxu0 0
    %2819 = vmatpush1.bf16.msra.mxu0 0
    %2820 = vmatprep.subr.bf16.mxu0 0
    %2821 = vmatpush1.bf16.msra.mxu0 0
    %2822 = vmatprep.subr.bf16.mxu0 0
    %2823 = vmatpush1.bf16.msra.mxu0 0
    %2824 = vmatprep.subr.bf16.mxu0 0
    %2825 = vmatpush1.bf16.msra.mxu0 0
    %2826 = vmatprep.subr.bf16.mxu0 0
    %2827 = vmatpush1.bf16.msra.mxu0 0
    %2828 = vmatprep.subr.bf16.mxu0 0
    %2829 = vmatpush1.bf16.msra.mxu0 0
    %2830 = vmatprep.subr.bf16.mxu0 0
    %2831 = vmatpush1.bf16.msra.mxu0 0
    %2832 = vmatprep.subr.bf16.mxu0 0
    %2833 = vmatpush1.bf16.msra.mxu0 0
    %2834 = vmatprep.subr.bf16.mxu0 0
    %2835 = vmatpush1.bf16.msra.mxu0 0
    %2836 = vmatprep.subr.bf16.mxu0 0
    %2837 = vmatpush1.bf16.msra.mxu0 0
    %2838 = vmatprep.subr.bf16.mxu0 0
    %2839 = vmatpush1.bf16.msra.mxu0 0
    %2840 = vmatprep.subr.bf16.mxu0 0
    %2841 = vmatpush1.bf16.msra.mxu0 0
    %2842 = vmatprep.subr.bf16.mxu0 0
    %2843 = vmatpush1.bf16.msra.mxu0 0
    %2844 = vmatprep.subr.bf16.mxu0 0
    %2845 = vmatpush1.bf16.msra.mxu0 0
    %2846 = vmatprep.mubr.bf16.mxu0 0
    %2847 = vmatmul.mubr.bf16.gmra.mrb[0].mxu0 %v2812
    %v2848 = vpop.f32.mrb[0].mxu0
    %v2849 = vadd.f32 %v2798, %v2848
    %v2850 = vpop.f32.mrb[0].mxu0
    %v2851 = vpop.f32.mrb[0].mxu0
    %v2852 = vpop.f32.mrb[0].mxu0
    %2853 = vdwg.mxu0
    %2854 = vst [vmem:[#allocation8] sm:$0xff] %v2849
    // Predicated region
    $region54: #{tpu_custom_call.1} parent=1 // pred_check
      _
    $region55: #{tpu_custom_call.1} parent=1 // pred_check_branch
      %2856 = sbr.rel (0) target = $region57
    $region56: #{tpu_custom_call.1} parent=1 // pred_region
      %s2858 = ssub.s32 128, 128
      %2859 = vsyncadd [#allocation4], %s2858
      %s2861 = sshll.u32 [#allocation8], 4
      %s2862 = int_to_ptr.vmem [resolvable:$true] %s2861
      %2864 = dma.vmem_to_hbm [thread:$0]  %s2862, 128, %s10, [#allocation4]
    $region57: #{tpu_custom_call.1} parent=1 // pred_fallthru
      _
    // Predicated region
    $region58: #{tpu_custom_call.1} parent=1 // pred_check
      _
    $region59: #{tpu_custom_call.1} parent=1 // pred_check_branch
      %2866 = sbr.rel (0) target = $region61
    $region60: #{tpu_custom_call.1} parent=1 // pred_region
      %2867 = dma.done [#allocation4], 128
    $region61: #{tpu_custom_call.1} parent=1 // pred_fallthru
      _
    %2868 = vsyncpa [#allocation3], 1
    %2869 = vsyncpa [#allocation6], 1
    %2870 = vsyncpa [#allocation4], 1

</llo_original>
